<compile_context>
chip_gen: v7x
topology: tpu7x:2x2x1
jax: 0.10.0
libtpu: 0.0.40
codegen_flags: <defaults>
</compile_context>

<pallas_src>
import jax
import jax.numpy as jnp
from jax.experimental import pallas as pl
from jax.experimental.pallas import tpu as pltpu

# --- model hyper-parameters (match the PyTorch defaults) --------------------
DIM_IN    = 78
MODEL_DIM = 78
DIM_OUT   = 78
HEADS     = 6
DIM_HEAD  = 13
INNER     = HEADS * DIM_HEAD            # 78
MULT      = 4
FF_DIM    = MODEL_DIM * MULT            # 312
LA        = 1.0                         # == 1 -> multiply folded out of the kernel
LG        = 0.5

# --- lane-padded sizes (TPU lane width = 128) --------------------------------
D_IN_P   = 128        # 78  -> 128
D_P      = 128        # 78  -> 128
D_OUT_P  = 128        # 78  -> 128
FF_P     = 384        # 312 -> 384
DH_P     = 16         # 13  -> 16 (per head)
QKV_P    = 3 * D_P    # fused q|k|v projection width (q:0..127, k:128..255, v:256..383)
OAO_P    = HEADS * DH_P   # 96, fused attention-output contraction depth
NEG_BIG  = -1e30      # large-but-safe mask fill; exp() underflows to exactly 0
TB_MAX   = 128        # molecules per grid step (R = TB*N rows per slab)


# --- in-kernel helpers --------------------------------------------------------
def _layernorm(x, g, b, true_d, eps=1e-5):
    # Moment form over the (zero-)padded lane dim: padded lanes of x are exactly
    # 0 and gamma/beta are 0 there, so dividing by the true feature count gives
    # the correct statistics and padded output lanes remain 0 (no lane mask).
    s = jnp.sum(x, axis=-1, keepdims=True)
    ss = jnp.sum(x * x, axis=-1, keepdims=True)
    mu = s * (1.0 / true_d)
    var = ss * (1.0 / true_d) - mu * mu
    return (x - mu) * jax.lax.rsqrt(var + eps) * g + b


def _gelu(x):
    # tanh-form GELU (EUP tanh + a few VALU ops). Deviates from PyTorch's
    # erf-exact nn.GELU by <~1e-3, well below the bf16 matmul error budget.
    c = 0.7978845608028654  # sqrt(2/pi)
    return 0.5 * x * (1.0 + jnp.tanh(c * (x + 0.044715 * x * x * x)))


# --- the kernel ---------------------------------------------------------------
def mat_kernel(x_ref, mask_ref, adj_ref,
               w_emb, b_emb,
               ln1_g, ln1_b, w_qkv, w_ao, b_ao,
               ln2_g, ln2_b, ff1_w1, ff1_b1, ff1_w2, ff1_b2,
               lno_g, lno_b, ffo_w1, ffo_b1, ffo_w2, ffo_b2,
               out_ref):
    TB, N, _ = x_ref.shape
    R = TB * N
    bf16 = jnp.bfloat16

    # embed_to_model on the flattened (TB*N, D) slab (bf16 MXU, f32 accumulate)
    x = jnp.dot(x_ref[...].reshape(R, D_IN_P), w_emb[...],
                preferred_element_type=jnp.float32) + b_emb[...]

    # 2-D mask / masked adjacency built in-kernel from the lane-dense atom mask
    m = mask_ref[...]                               # (TB, N) in {0, 1}, f32
    mask2d = m[:, :, None] * m[:, None, :]          # (TB, N, N)
    adj_m = adj_ref[...].astype(jnp.float32) * mask2d * LG

    # --- Residual(PreNorm(Attention)) ---
    h = _layernorm(x, ln1_g[...], ln1_b[...], MODEL_DIM)
    # fused Q|K|V projection: one (R,128)@(128,384) matmul, heads at 16-lane offsets,
    # softmax scale pre-folded into the Q columns.
    qkv = jnp.dot(h.astype(bf16), w_qkv[...], preferred_element_type=jnp.float32)

    heads_out = []
    for hh in range(HEADS):
        off = hh * DH_P
        q3 = qkv[:, off:off + DH_P].reshape(TB, N, DH_P).astype(bf16)
        k3 = qkv[:, D_P + off:D_P + off + DH_P].reshape(TB, N, DH_P).astype(bf16)
        v3 = qkv[:, 2 * D_P + off:2 * D_P + off + DH_P].reshape(TB, N, DH_P).astype(bf16)

        dots = jnp.einsum('bid,bjd->bij', q3, k3,
                          preferred_element_type=jnp.float32)   # scale already folded
        dots = jnp.where(mask2d > 0.0, dots, NEG_BIG)
        dots = dots - jnp.max(dots, axis=-1, keepdims=True)
        e = jnp.exp(dots)
        inv = pl.reciprocal(jnp.sum(e, axis=-1, keepdims=True), approx=True)
        attn = e * inv + adj_m                                   # La == 1 folded out

        heads_out.append(jnp.einsum('bij,bjd->bid', attn.astype(bf16), v3,
                                    preferred_element_type=jnp.float32))
    # fused output projection: (R, 96) head slab @ (96, 128) in one matmul
    o_slab = jnp.concatenate(heads_out, axis=-1).reshape(R, OAO_P)
    x = x + jnp.dot(o_slab.astype(bf16), w_ao[...],
                    preferred_element_type=jnp.float32) + b_ao[...]   # residual

    # --- Residual(PreNorm(FeedForward)) ---
    h = _layernorm(x, ln2_g[...], ln2_b[...], MODEL_DIM)
    f = jnp.dot(h.astype(bf16), ff1_w1[...],
                preferred_element_type=jnp.float32) + ff1_b1[...]
    f = _gelu(f)
    f = jnp.dot(f.astype(bf16), ff1_w2[...],
                preferred_element_type=jnp.float32) + ff1_b2[...]
    x = x + f                                                        # residual

    # --- norm_out, mean over atoms, ff_out ---
    h = _layernorm(x, lno_g[...], lno_b[...], MODEL_DIM)
    pooled = jnp.mean(h.reshape(TB, N, D_P), axis=1)                 # (TB, D_P)
    o = jnp.dot(pooled.astype(bf16), ffo_w1[...],
                preferred_element_type=jnp.float32) + ffo_b1[...]
    o = _gelu(o)
    o = jnp.dot(o.astype(bf16), ffo_w2[...],
                preferred_element_type=jnp.float32) + ffo_b2[...]
    out_ref[...] = o                                                 # (TB, D_OUT_P)


# --- parameters ---------------------------------------------------------------
def init_params(key):
    ks = jax.random.split(key, 7)
    lin = lambda k, din, dout: jax.random.normal(k, (din, dout), jnp.float32) * 0.02
    z = lambda d: jnp.zeros((1, d), jnp.float32)
    o = lambda d: jnp.ones((1, d), jnp.float32)
    return {
        "w_emb": lin(ks[0], DIM_IN, MODEL_DIM), "b_emb": z(MODEL_DIM),
        "ln1_g": o(MODEL_DIM), "ln1_b": z(MODEL_DIM),
        "w_qkv": lin(ks[1], MODEL_DIM, 3 * INNER),
        "w_ao": lin(ks[2], INNER, MODEL_DIM), "b_ao": z(MODEL_DIM),
        "ln2_g": o(MODEL_DIM), "ln2_b": z(MODEL_DIM),
        "ff1_w1": lin(ks[3], MODEL_DIM, FF_DIM), "ff1_b1": z(FF_DIM),
        "ff1_w2": lin(ks[4], FF_DIM, MODEL_DIM), "ff1_b2": z(MODEL_DIM),
        "lno_g": o(MODEL_DIM), "lno_b": z(MODEL_DIM),
        "ffo_w1": lin(ks[5], MODEL_DIM, FF_DIM), "ffo_b1": z(FF_DIM),
        "ffo_w2": lin(ks[6], FF_DIM, DIM_OUT), "ffo_b2": z(DIM_OUT),
    }


def _pad2(w, rows, cols, dtype):
    return (jnp.zeros((rows, cols), jnp.float32)
            .at[:w.shape[0], :w.shape[1]].set(w).astype(dtype))


def pack_params(p):
    """Zero-pad to lane multiples, fuse q|k|v and attention-output weights per head
    at 16-lane offsets (PyTorch column ordering is 'b n (h qkv d)'), fold the softmax
    scale into the Q columns, and store matmul weights in bf16 (biases/LN stay f32)."""
    bf, f32 = jnp.bfloat16, jnp.float32
    scale = DIM_HEAD ** -0.5
    wqkv = jnp.zeros((D_P, QKV_P), jnp.float32)
    wao = jnp.zeros((OAO_P, D_P), jnp.float32)
    for h in range(HEADS):
        src = h * 3 * DIM_HEAD
        dst = h * DH_P
        wqkv = wqkv.at[:MODEL_DIM, dst:dst + DIM_HEAD].set(
            p["w_qkv"][:, src:src + DIM_HEAD] * scale)
        wqkv = wqkv.at[:MODEL_DIM, D_P + dst:D_P + dst + DIM_HEAD].set(
            p["w_qkv"][:, src + DIM_HEAD:src + 2 * DIM_HEAD])
        wqkv = wqkv.at[:MODEL_DIM, 2 * D_P + dst:2 * D_P + dst + DIM_HEAD].set(
            p["w_qkv"][:, src + 2 * DIM_HEAD:src + 3 * DIM_HEAD])
        wao = wao.at[dst:dst + DIM_HEAD, :MODEL_DIM].set(
            p["w_ao"][h * DIM_HEAD:(h + 1) * DIM_HEAD, :])
    return [
        _pad2(p["w_emb"], D_IN_P, D_P, bf), _pad2(p["b_emb"], 1, D_P, f32),
        _pad2(p["ln1_g"], 1, D_P, f32), _pad2(p["ln1_b"], 1, D_P, f32),
        wqkv.astype(bf), wao.astype(bf), _pad2(p["b_ao"], 1, D_P, f32),
        _pad2(p["ln2_g"], 1, D_P, f32), _pad2(p["ln2_b"], 1, D_P, f32),
        _pad2(p["ff1_w1"], D_P, FF_P, bf), _pad2(p["ff1_b1"], 1, FF_P, f32),
        _pad2(p["ff1_w2"], FF_P, D_P, bf), _pad2(p["ff1_b2"], 1, D_P, f32),
        _pad2(p["lno_g"], 1, D_P, f32), _pad2(p["lno_b"], 1, D_P, f32),
        _pad2(p["ffo_w1"], D_P, FF_P, bf), _pad2(p["ffo_b1"], 1, FF_P, f32),
        _pad2(p["ffo_w2"], FF_P, D_OUT_P, bf), _pad2(p["ffo_b2"], 1, D_OUT_P, f32),
    ]


# --- wrapper -------------------------------------------------------------------
def mat_forward(x, params, mask=None, adjacency_mat=None, distance_mat=None):
    # TODO(synk): distance_mat is accepted for API parity but the PyTorch forward
    # never uses it after rearranging, so it is ignored here too.
    del distance_mat
    B, N, _ = x.shape
    if mask is None:
        mask = jnp.ones((B, N), jnp.float32)
    if adjacency_mat is None:
        adjacency_mat = jnp.zeros((B, N, N), jnp.float32)

    # Batch blocking sized for per-step work (the grid is a serial loop on
    # single-TC v5e/v6e; when B > TB_MAX the grid has >= 2 steps that v7x
    # megacore can shard via dimension_semantics="parallel").
    TB = min(TB_MAX, B)
    G = -(-B // TB)
    B_pad = G * TB

    # batch / lane padding: padded lanes & padded molecules are zero; pad mask = 1.
    # x and adjacency are shipped in bf16 (matmuls are bf16 anyway) to halve DMA.
    x_p = jnp.zeros((B_pad, N, D_IN_P), jnp.bfloat16)
    x_p = x_p.at[:B, :, :DIM_IN].set(x.astype(jnp.bfloat16))
    mask_p = jnp.ones((B_pad, N), jnp.float32).at[:B].set(mask.astype(jnp.float32))
    adj_p = jnp.zeros((B_pad, N, N), jnp.bfloat16)
    adj_p = adj_p.at[:B].set(adjacency_mat.astype(jnp.bfloat16))

    plist = pack_params(params)

    def wspec(p):
        return pl.BlockSpec(p.shape, lambda b, _nd=p.ndim: (0,) * _nd)

    in_specs = [
        pl.BlockSpec((TB, N, D_IN_P), lambda b: (b, 0, 0)),
        pl.BlockSpec((TB, N), lambda b: (b, 0)),
        pl.BlockSpec((TB, N, N), lambda b: (b, 0, 0)),
    ] + [wspec(p) for p in plist]

    out = pl.pallas_call(
        mat_kernel,
        out_shape=jax.ShapeDtypeStruct((B_pad, D_OUT_P), jnp.float32),
        grid=(G,),
        in_specs=in_specs,
        out_specs=pl.BlockSpec((TB, D_OUT_P), lambda b: (b, 0)),
        compiler_params=pltpu.CompilerParams(
            dimension_semantics=("parallel",),
            vmem_limit_bytes=32 * 1024 * 1024),
    )(x_p, mask_p, adj_p, *plist)

    return out[:B, :DIM_OUT]


if __name__ == "__main__":
    key = jax.random.PRNGKey(0)
    kx, km, ka, kp = jax.random.split(key, 4)
    B, N = 2, 8
    x = jax.random.normal(kx, (B, N, DIM_IN), jnp.float32)
    mask = (jax.random.uniform(km, (B, N)) > 0.2).astype(jnp.float32)
    mask = mask.at[:, 0].set(1.0)   # keep at least one valid atom per molecule
    adj = (jax.random.uniform(ka, (B, N, N)) > 0.5).astype(jnp.float32)
    params = init_params(kp)

    out = mat_forward(x, params, mask=mask, adjacency_mat=adj)
    jax.block_until_ready(out)
    assert out.shape == (B, DIM_OUT) and out.dtype == jnp.float32
    assert bool(jnp.all(jnp.isfinite(out)))
    print("KERNEL_OK")
</pallas_src>

<mosaic_0001>
module attributes {stable_mosaic.version = 11 : i64} {
  func.func @mat_kernel(%arg0: i32, %arg1: memref<2x8x128xbf16, #tpu.memory_space<vmem>>, %arg2: memref<2x8xf32, #tpu.memory_space<vmem>>, %arg3: memref<2x8x8xbf16, #tpu.memory_space<vmem>>, %arg4: memref<128x128xbf16, #tpu.memory_space<vmem>>, %arg5: memref<1x128xf32, #tpu.memory_space<vmem>>, %arg6: memref<1x128xf32, #tpu.memory_space<vmem>>, %arg7: memref<1x128xf32, #tpu.memory_space<vmem>>, %arg8: memref<128x384xbf16, #tpu.memory_space<vmem>>, %arg9: memref<96x128xbf16, #tpu.memory_space<vmem>>, %arg10: memref<1x128xf32, #tpu.memory_space<vmem>>, %arg11: memref<1x128xf32, #tpu.memory_space<vmem>>, %arg12: memref<1x128xf32, #tpu.memory_space<vmem>>, %arg13: memref<128x384xbf16, #tpu.memory_space<vmem>>, %arg14: memref<1x384xf32, #tpu.memory_space<vmem>>, %arg15: memref<384x128xbf16, #tpu.memory_space<vmem>>, %arg16: memref<1x128xf32, #tpu.memory_space<vmem>>, %arg17: memref<1x128xf32, #tpu.memory_space<vmem>>, %arg18: memref<1x128xf32, #tpu.memory_space<vmem>>, %arg19: memref<128x384xbf16, #tpu.memory_space<vmem>>, %arg20: memref<1x384xf32, #tpu.memory_space<vmem>>, %arg21: memref<384x128xbf16, #tpu.memory_space<vmem>>, %arg22: memref<1x128xf32, #tpu.memory_space<vmem>>, %arg23: memref<2x128xf32, #tpu.memory_space<vmem>>) attributes {dimension_semantics = [#tpu.dimension_semantics<parallel>], iteration_bounds = array<i64: 1>, scalar_prefetch = 0 : i64, scratch_operands = 0 : i64, tpu.core_type = #tpu.core_type<tc>, window_params = [{transform_indices = @transform_0, window_bounds = array<i64: 2, 8, 128>}, {transform_indices = @transform_1, window_bounds = array<i64: 2, 8>}, {transform_indices = @transform_2, window_bounds = array<i64: 2, 8, 8>}, {pipeline_mode = #tpu.pipeline_mode<synchronous>, transform_indices = @transform_3, window_bounds = array<i64: 128, 128>}, {pipeline_mode = #tpu.pipeline_mode<synchronous>, transform_indices = @transform_4, window_bounds = array<i64: 1, 128>}, {pipeline_mode = #tpu.pipeline_mode<synchronous>, transform_indices = @transform_5, window_bounds = array<i64: 1, 128>}, {pipeline_mode = #tpu.pipeline_mode<synchronous>, transform_indices = @transform_6, window_bounds = array<i64: 1, 128>}, {pipeline_mode = #tpu.pipeline_mode<synchronous>, transform_indices = @transform_7, window_bounds = array<i64: 128, 384>}, {pipeline_mode = #tpu.pipeline_mode<synchronous>, transform_indices = @transform_8, window_bounds = array<i64: 96, 128>}, {pipeline_mode = #tpu.pipeline_mode<synchronous>, transform_indices = @transform_9, window_bounds = array<i64: 1, 128>}, {pipeline_mode = #tpu.pipeline_mode<synchronous>, transform_indices = @transform_10, window_bounds = array<i64: 1, 128>}, {pipeline_mode = #tpu.pipeline_mode<synchronous>, transform_indices = @transform_11, window_bounds = array<i64: 1, 128>}, {pipeline_mode = #tpu.pipeline_mode<synchronous>, transform_indices = @transform_12, window_bounds = array<i64: 128, 384>}, {pipeline_mode = #tpu.pipeline_mode<synchronous>, transform_indices = @transform_13, window_bounds = array<i64: 1, 384>}, {pipeline_mode = #tpu.pipeline_mode<synchronous>, transform_indices = @transform_14, window_bounds = array<i64: 384, 128>}, {pipeline_mode = #tpu.pipeline_mode<synchronous>, transform_indices = @transform_15, window_bounds = array<i64: 1, 128>}, {pipeline_mode = #tpu.pipeline_mode<synchronous>, transform_indices = @transform_16, window_bounds = array<i64: 1, 128>}, {pipeline_mode = #tpu.pipeline_mode<synchronous>, transform_indices = @transform_17, window_bounds = array<i64: 1, 128>}, {pipeline_mode = #tpu.pipeline_mode<synchronous>, transform_indices = @transform_18, window_bounds = array<i64: 128, 384>}, {pipeline_mode = #tpu.pipeline_mode<synchronous>, transform_indices = @transform_19, window_bounds = array<i64: 1, 384>}, {pipeline_mode = #tpu.pipeline_mode<synchronous>, transform_indices = @transform_20, window_bounds = array<i64: 384, 128>}, {pipeline_mode = #tpu.pipeline_mode<synchronous>, transform_indices = @transform_21, window_bounds = array<i64: 1, 128>}, {transform_indices = @transform_22, window_bounds = array<i64: 2, 128>}]} {
    %c0 = arith.constant 0 : index
    %c0_0 = arith.constant 0 : index
    %c0_1 = arith.constant 0 : index
    %0 = vector.load %arg1[%c0, %c0_0, %c0_1] : memref<2x8x128xbf16, #tpu.memory_space<vmem>>, vector<2x8x128xbf16>
    %1 = vector.shape_cast %0 : vector<2x8x128xbf16> to vector<16x128xbf16>
    %c0_2 = arith.constant 0 : index
    %c0_3 = arith.constant 0 : index
    %2 = vector.load %arg4[%c0_2, %c0_3] : memref<128x128xbf16, #tpu.memory_space<vmem>>, vector<128x128xbf16>
    %cst = arith.constant dense<0.000000e+00> : vector<16x128xf32>
    %3 = tpu.matmul %1, %2, %cst {dimension_numbers = #tpu.dot_dimension_numbers<[1], [0], [0], [1], [0, 0, 1, 1], [], []>} : vector<16x128xbf16>, vector<128x128xbf16>, vector<16x128xf32> -> vector<16x128xf32>
    %c0_4 = arith.constant 0 : index
    %c0_5 = arith.constant 0 : index
    %4 = vector.load %arg5[%c0_4, %c0_5] : memref<1x128xf32, #tpu.memory_space<vmem>>, vector<1x128xf32>
    %5 = vector.broadcast %4 : vector<1x128xf32> to vector<16x128xf32>
    %6 = arith.addf %3, %5 : vector<16x128xf32>
    %c0_6 = arith.constant 0 : index
    %c0_7 = arith.constant 0 : index
    %7 = vector.load %arg2[%c0_6, %c0_7] : memref<2x8xf32, #tpu.memory_space<vmem>>, vector<2x8xf32>
    %8 = vector.shape_cast %7 : vector<2x8xf32> to vector<2x8x1xf32>
    %9 = vector.shape_cast %7 : vector<2x8xf32> to vector<2x1x8xf32>
    %10 = vector.broadcast %8 : vector<2x8x1xf32> to vector<2x8x8xf32>
    %11 = vector.broadcast %9 : vector<2x1x8xf32> to vector<2x8x8xf32>
    %12 = arith.mulf %10, %11 : vector<2x8x8xf32>
    %c0_8 = arith.constant 0 : index
    %c0_9 = arith.constant 0 : index
    %c0_10 = arith.constant 0 : index
    %13 = vector.load %arg3[%c0_8, %c0_9, %c0_10] : memref<2x8x8xbf16, #tpu.memory_space<vmem>>, vector<2x8x8xbf16>
    %14 = arith.extf %13 : vector<2x8x8xbf16> to vector<2x8x8xf32>
    %15 = arith.mulf %14, %12 : vector<2x8x8xf32>
    %cst_11 = arith.constant 5.000000e-01 : f32
    %16 = vector.broadcast %cst_11 : f32 to vector<2x8x8xf32>
    %17 = arith.mulf %15, %16 : vector<2x8x8xf32>
    %c0_12 = arith.constant 0 : index
    %c0_13 = arith.constant 0 : index
    %18 = vector.load %arg6[%c0_12, %c0_13] : memref<1x128xf32, #tpu.memory_space<vmem>>, vector<1x128xf32>
    %c0_14 = arith.constant 0 : index
    %c0_15 = arith.constant 0 : index
    %19 = vector.load %arg7[%c0_14, %c0_15] : memref<1x128xf32, #tpu.memory_space<vmem>>, vector<1x128xf32>
    %cst_16 = arith.constant dense<0.000000e+00> : vector<16xf32>
    %20 = vector.multi_reduction <add>, %6, %cst_16 [1] : vector<16x128xf32> to vector<16xf32>
    %21 = vector.shape_cast %20 : vector<16xf32> to vector<16x1xf32>
    %22 = arith.mulf %6, %6 : vector<16x128xf32>
    %cst_17 = arith.constant dense<0.000000e+00> : vector<16xf32>
    %23 = vector.multi_reduction <add>, %22, %cst_17 [1] : vector<16x128xf32> to vector<16xf32>
    %24 = vector.shape_cast %23 : vector<16xf32> to vector<16x1xf32>
    %cst_18 = arith.constant 0.012820513 : f32
    %25 = vector.broadcast %cst_18 : f32 to vector<16x1xf32>
    %26 = arith.mulf %21, %25 : vector<16x1xf32>
    %cst_19 = arith.constant 0.012820513 : f32
    %27 = vector.broadcast %cst_19 : f32 to vector<16x1xf32>
    %28 = arith.mulf %24, %27 : vector<16x1xf32>
    %29 = arith.mulf %26, %26 : vector<16x1xf32>
    %30 = arith.subf %28, %29 : vector<16x1xf32>
    %31 = vector.broadcast %26 : vector<16x1xf32> to vector<16x128xf32>
    %32 = arith.subf %6, %31 : vector<16x128xf32>
    %cst_20 = arith.constant 9.99999974E-6 : f32
    %33 = vector.broadcast %cst_20 : f32 to vector<16x1xf32>
    %34 = arith.addf %30, %33 : vector<16x1xf32>
    %35 = math.rsqrt %34 : vector<16x1xf32>
    %36 = vector.broadcast %35 : vector<16x1xf32> to vector<16x128xf32>
    %37 = arith.mulf %32, %36 : vector<16x128xf32>
    %38 = vector.broadcast %18 : vector<1x128xf32> to vector<16x128xf32>
    %39 = arith.mulf %37, %38 : vector<16x128xf32>
    %40 = vector.broadcast %19 : vector<1x128xf32> to vector<16x128xf32>
    %41 = arith.addf %39, %40 : vector<16x128xf32>
    %42 = arith.truncf %41 : vector<16x128xf32> to vector<16x128xbf16>
    %c0_21 = arith.constant 0 : index
    %c0_22 = arith.constant 0 : index
    %43 = vector.load %arg8[%c0_21, %c0_22] : memref<128x384xbf16, #tpu.memory_space<vmem>>, vector<128x384xbf16>
    %cst_23 = arith.constant dense<0.000000e+00> : vector<16x384xf32>
    %44 = tpu.matmul %42, %43, %cst_23 {dimension_numbers = #tpu.dot_dimension_numbers<[1], [0], [0], [1], [0, 0, 1, 1], [], []>} : vector<16x128xbf16>, vector<128x384xbf16>, vector<16x384xf32> -> vector<16x384xf32>
    %45 = vector.extract_strided_slice %44 {offsets = [0, 0], sizes = [16, 16], strides = [1, 1]} : vector<16x384xf32> to vector<16x16xf32>
    %46 = vector.shape_cast %45 : vector<16x16xf32> to vector<2x8x16xf32>
    %47 = arith.truncf %46 : vector<2x8x16xf32> to vector<2x8x16xbf16>
    %48 = vector.extract_strided_slice %44 {offsets = [0, 128], sizes = [16, 16], strides = [1, 1]} : vector<16x384xf32> to vector<16x16xf32>
    %49 = vector.shape_cast %48 : vector<16x16xf32> to vector<2x8x16xf32>
    %50 = arith.truncf %49 : vector<2x8x16xf32> to vector<2x8x16xbf16>
    %51 = vector.extract_strided_slice %44 {offsets = [0, 256], sizes = [16, 16], strides = [1, 1]} : vector<16x384xf32> to vector<16x16xf32>
    %52 = vector.shape_cast %51 : vector<16x16xf32> to vector<2x8x16xf32>
    %53 = arith.truncf %52 : vector<2x8x16xf32> to vector<2x8x16xbf16>
    "tpu.trace_start"() <{level = 10 : i32, message = "bid,bjd->bij"}> : () -> ()
    %cst_24 = arith.constant dense<0.000000e+00> : vector<2x8x8xf32>
    %54 = tpu.matmul %47, %50, %cst_24 {dimension_numbers = #tpu.dot_dimension_numbers<[2], [2], [1], [1], [0, 0, 0, 1, 1, 1], [0], [0]>} : vector<2x8x16xbf16>, vector<2x8x16xbf16>, vector<2x8x8xf32> -> vector<2x8x8xf32>
    %cst_25 = arith.constant 0.000000e+00 : f32
    "tpu.trace_stop"() : () -> ()
    %55 = vector.broadcast %cst_25 : f32 to vector<2x8x8xf32>
    %56 = arith.cmpf ogt, %12, %55 : vector<2x8x8xf32>
    %cst_26 = arith.constant -1.000000e+30 : f32
    %57 = vector.broadcast %cst_26 : f32 to vector<2x8x8xf32>
    %58 = arith.select %56, %54, %57 : vector<2x8x8xi1>, vector<2x8x8xf32>
    %cst_27 = arith.constant dense<0xFF800000> : vector<2x8xf32>
    %59 = vector.multi_reduction <maximumf>, %58, %cst_27 [2] : vector<2x8x8xf32> to vector<2x8xf32>
    %60 = vector.shape_cast %59 : vector<2x8xf32> to vector<2x8x1xf32>
    %61 = vector.broadcast %60 : vector<2x8x1xf32> to vector<2x8x8xf32>
    %62 = arith.subf %58, %61 : vector<2x8x8xf32>
    %63 = math.exp %62 : vector<2x8x8xf32>
    %cst_28 = arith.constant dense<0.000000e+00> : vector<2x8xf32>
    %64 = vector.multi_reduction <add>, %63, %cst_28 [2] : vector<2x8x8xf32> to vector<2x8xf32>
    %65 = vector.shape_cast %64 : vector<2x8xf32> to vector<2x8x1xf32>
    %66 = tpu.reciprocal %65 {approx = true} : vector<2x8x1xf32> -> vector<2x8x1xf32>
    %67 = vector.broadcast %66 : vector<2x8x1xf32> to vector<2x8x8xf32>
    %68 = arith.mulf %63, %67 : vector<2x8x8xf32>
    %69 = arith.addf %68, %17 : vector<2x8x8xf32>
    %70 = arith.truncf %69 : vector<2x8x8xf32> to vector<2x8x8xbf16>
    "tpu.trace_start"() <{level = 10 : i32, message = "bij,bjd->bid"}> : () -> ()
    %cst_29 = arith.constant dense<0.000000e+00> : vector<2x8x16xf32>
    %71 = tpu.matmul %70, %53, %cst_29 {dimension_numbers = #tpu.dot_dimension_numbers<[2], [1], [1], [2], [0, 0, 0, 1, 1, 2], [0], [0]>} : vector<2x8x8xbf16>, vector<2x8x16xbf16>, vector<2x8x16xf32> -> vector<2x8x16xf32>
    "tpu.trace_stop"() : () -> ()
    %72 = vector.extract_strided_slice %44 {offsets = [0, 16], sizes = [16, 16], strides = [1, 1]} : vector<16x384xf32> to vector<16x16xf32>
    %73 = vector.shape_cast %72 : vector<16x16xf32> to vector<2x8x16xf32>
    %74 = arith.truncf %73 : vector<2x8x16xf32> to vector<2x8x16xbf16>
    %75 = vector.extract_strided_slice %44 {offsets = [0, 144], sizes = [16, 16], strides = [1, 1]} : vector<16x384xf32> to vector<16x16xf32>
    %76 = vector.shape_cast %75 : vector<16x16xf32> to vector<2x8x16xf32>
    %77 = arith.truncf %76 : vector<2x8x16xf32> to vector<2x8x16xbf16>
    %78 = vector.extract_strided_slice %44 {offsets = [0, 272], sizes = [16, 16], strides = [1, 1]} : vector<16x384xf32> to vector<16x16xf32>
    %79 = vector.shape_cast %78 : vector<16x16xf32> to vector<2x8x16xf32>
    %80 = arith.truncf %79 : vector<2x8x16xf32> to vector<2x8x16xbf16>
    "tpu.trace_start"() <{level = 10 : i32, message = "bid,bjd->bij"}> : () -> ()
    %cst_30 = arith.constant dense<0.000000e+00> : vector<2x8x8xf32>
    %81 = tpu.matmul %74, %77, %cst_30 {dimension_numbers = #tpu.dot_dimension_numbers<[2], [2], [1], [1], [0, 0, 0, 1, 1, 1], [0], [0]>} : vector<2x8x16xbf16>, vector<2x8x16xbf16>, vector<2x8x8xf32> -> vector<2x8x8xf32>
    %cst_31 = arith.constant 0.000000e+00 : f32
    "tpu.trace_stop"() : () -> ()
    %82 = vector.broadcast %cst_31 : f32 to vector<2x8x8xf32>
    %83 = arith.cmpf ogt, %12, %82 : vector<2x8x8xf32>
    %cst_32 = arith.constant -1.000000e+30 : f32
    %84 = vector.broadcast %cst_32 : f32 to vector<2x8x8xf32>
    %85 = arith.select %83, %81, %84 : vector<2x8x8xi1>, vector<2x8x8xf32>
    %cst_33 = arith.constant dense<0xFF800000> : vector<2x8xf32>
    %86 = vector.multi_reduction <maximumf>, %85, %cst_33 [2] : vector<2x8x8xf32> to vector<2x8xf32>
    %87 = vector.shape_cast %86 : vector<2x8xf32> to vector<2x8x1xf32>
    %88 = vector.broadcast %87 : vector<2x8x1xf32> to vector<2x8x8xf32>
    %89 = arith.subf %85, %88 : vector<2x8x8xf32>
    %90 = math.exp %89 : vector<2x8x8xf32>
    %cst_34 = arith.constant dense<0.000000e+00> : vector<2x8xf32>
    %91 = vector.multi_reduction <add>, %90, %cst_34 [2] : vector<2x8x8xf32> to vector<2x8xf32>
    %92 = vector.shape_cast %91 : vector<2x8xf32> to vector<2x8x1xf32>
    %93 = tpu.reciprocal %92 {approx = true} : vector<2x8x1xf32> -> vector<2x8x1xf32>
    %94 = vector.broadcast %93 : vector<2x8x1xf32> to vector<2x8x8xf32>
    %95 = arith.mulf %90, %94 : vector<2x8x8xf32>
    %96 = arith.addf %95, %17 : vector<2x8x8xf32>
    %97 = arith.truncf %96 : vector<2x8x8xf32> to vector<2x8x8xbf16>
    "tpu.trace_start"() <{level = 10 : i32, message = "bij,bjd->bid"}> : () -> ()
    %cst_35 = arith.constant dense<0.000000e+00> : vector<2x8x16xf32>
    %98 = tpu.matmul %97, %80, %cst_35 {dimension_numbers = #tpu.dot_dimension_numbers<[2], [1], [1], [2], [0, 0, 0, 1, 1, 2], [0], [0]>} : vector<2x8x8xbf16>, vector<2x8x16xbf16>, vector<2x8x16xf32> -> vector<2x8x16xf32>
    "tpu.trace_stop"() : () -> ()
    %99 = vector.extract_strided_slice %44 {offsets = [0, 32], sizes = [16, 16], strides = [1, 1]} : vector<16x384xf32> to vector<16x16xf32>
    %100 = vector.shape_cast %99 : vector<16x16xf32> to vector<2x8x16xf32>
    %101 = arith.truncf %100 : vector<2x8x16xf32> to vector<2x8x16xbf16>
    %102 = vector.extract_strided_slice %44 {offsets = [0, 160], sizes = [16, 16], strides = [1, 1]} : vector<16x384xf32> to vector<16x16xf32>
    %103 = vector.shape_cast %102 : vector<16x16xf32> to vector<2x8x16xf32>
    %104 = arith.truncf %103 : vector<2x8x16xf32> to vector<2x8x16xbf16>
    %105 = vector.extract_strided_slice %44 {offsets = [0, 288], sizes = [16, 16], strides = [1, 1]} : vector<16x384xf32> to vector<16x16xf32>
    %106 = vector.shape_cast %105 : vector<16x16xf32> to vector<2x8x16xf32>
    %107 = arith.truncf %106 : vector<2x8x16xf32> to vector<2x8x16xbf16>
    "tpu.trace_start"() <{level = 10 : i32, message = "bid,bjd->bij"}> : () -> ()
    %cst_36 = arith.constant dense<0.000000e+00> : vector<2x8x8xf32>
    %108 = tpu.matmul %101, %104, %cst_36 {dimension_numbers = #tpu.dot_dimension_numbers<[2], [2], [1], [1], [0, 0, 0, 1, 1, 1], [0], [0]>} : vector<2x8x16xbf16>, vector<2x8x16xbf16>, vector<2x8x8xf32> -> vector<2x8x8xf32>
    %cst_37 = arith.constant 0.000000e+00 : f32
    "tpu.trace_stop"() : () -> ()
    %109 = vector.broadcast %cst_37 : f32 to vector<2x8x8xf32>
    %110 = arith.cmpf ogt, %12, %109 : vector<2x8x8xf32>
    %cst_38 = arith.constant -1.000000e+30 : f32
    %111 = vector.broadcast %cst_38 : f32 to vector<2x8x8xf32>
    %112 = arith.select %110, %108, %111 : vector<2x8x8xi1>, vector<2x8x8xf32>
    %cst_39 = arith.constant dense<0xFF800000> : vector<2x8xf32>
    %113 = vector.multi_reduction <maximumf>, %112, %cst_39 [2] : vector<2x8x8xf32> to vector<2x8xf32>
    %114 = vector.shape_cast %113 : vector<2x8xf32> to vector<2x8x1xf32>
    %115 = vector.broadcast %114 : vector<2x8x1xf32> to vector<2x8x8xf32>
    %116 = arith.subf %112, %115 : vector<2x8x8xf32>
    %117 = math.exp %116 : vector<2x8x8xf32>
    %cst_40 = arith.constant dense<0.000000e+00> : vector<2x8xf32>
    %118 = vector.multi_reduction <add>, %117, %cst_40 [2] : vector<2x8x8xf32> to vector<2x8xf32>
    %119 = vector.shape_cast %118 : vector<2x8xf32> to vector<2x8x1xf32>
    %120 = tpu.reciprocal %119 {approx = true} : vector<2x8x1xf32> -> vector<2x8x1xf32>
    %121 = vector.broadcast %120 : vector<2x8x1xf32> to vector<2x8x8xf32>
    %122 = arith.mulf %117, %121 : vector<2x8x8xf32>
    %123 = arith.addf %122, %17 : vector<2x8x8xf32>
    %124 = arith.truncf %123 : vector<2x8x8xf32> to vector<2x8x8xbf16>
    "tpu.trace_start"() <{level = 10 : i32, message = "bij,bjd->bid"}> : () -> ()
    %cst_41 = arith.constant dense<0.000000e+00> : vector<2x8x16xf32>
    %125 = tpu.matmul %124, %107, %cst_41 {dimension_numbers = #tpu.dot_dimension_numbers<[2], [1], [1], [2], [0, 0, 0, 1, 1, 2], [0], [0]>} : vector<2x8x8xbf16>, vector<2x8x16xbf16>, vector<2x8x16xf32> -> vector<2x8x16xf32>
    "tpu.trace_stop"() : () -> ()
    %126 = vector.extract_strided_slice %44 {offsets = [0, 48], sizes = [16, 16], strides = [1, 1]} : vector<16x384xf32> to vector<16x16xf32>
    %127 = vector.shape_cast %126 : vector<16x16xf32> to vector<2x8x16xf32>
    %128 = arith.truncf %127 : vector<2x8x16xf32> to vector<2x8x16xbf16>
    %129 = vector.extract_strided_slice %44 {offsets = [0, 176], sizes = [16, 16], strides = [1, 1]} : vector<16x384xf32> to vector<16x16xf32>
    %130 = vector.shape_cast %129 : vector<16x16xf32> to vector<2x8x16xf32>
    %131 = arith.truncf %130 : vector<2x8x16xf32> to vector<2x8x16xbf16>
    %132 = vector.extract_strided_slice %44 {offsets = [0, 304], sizes = [16, 16], strides = [1, 1]} : vector<16x384xf32> to vector<16x16xf32>
    %133 = vector.shape_cast %132 : vector<16x16xf32> to vector<2x8x16xf32>
    %134 = arith.truncf %133 : vector<2x8x16xf32> to vector<2x8x16xbf16>
    "tpu.trace_start"() <{level = 10 : i32, message = "bid,bjd->bij"}> : () -> ()
    %cst_42 = arith.constant dense<0.000000e+00> : vector<2x8x8xf32>
    %135 = tpu.matmul %128, %131, %cst_42 {dimension_numbers = #tpu.dot_dimension_numbers<[2], [2], [1], [1], [0, 0, 0, 1, 1, 1], [0], [0]>} : vector<2x8x16xbf16>, vector<2x8x16xbf16>, vector<2x8x8xf32> -> vector<2x8x8xf32>
    %cst_43 = arith.constant 0.000000e+00 : f32
    "tpu.trace_stop"() : () -> ()
    %136 = vector.broadcast %cst_43 : f32 to vector<2x8x8xf32>
    %137 = arith.cmpf ogt, %12, %136 : vector<2x8x8xf32>
    %cst_44 = arith.constant -1.000000e+30 : f32
    %138 = vector.broadcast %cst_44 : f32 to vector<2x8x8xf32>
    %139 = arith.select %137, %135, %138 : vector<2x8x8xi1>, vector<2x8x8xf32>
    %cst_45 = arith.constant dense<0xFF800000> : vector<2x8xf32>
    %140 = vector.multi_reduction <maximumf>, %139, %cst_45 [2] : vector<2x8x8xf32> to vector<2x8xf32>
    %141 = vector.shape_cast %140 : vector<2x8xf32> to vector<2x8x1xf32>
    %142 = vector.broadcast %141 : vector<2x8x1xf32> to vector<2x8x8xf32>
    %143 = arith.subf %139, %142 : vector<2x8x8xf32>
    %144 = math.exp %143 : vector<2x8x8xf32>
    %cst_46 = arith.constant dense<0.000000e+00> : vector<2x8xf32>
    %145 = vector.multi_reduction <add>, %144, %cst_46 [2] : vector<2x8x8xf32> to vector<2x8xf32>
    %146 = vector.shape_cast %145 : vector<2x8xf32> to vector<2x8x1xf32>
    %147 = tpu.reciprocal %146 {approx = true} : vector<2x8x1xf32> -> vector<2x8x1xf32>
    %148 = vector.broadcast %147 : vector<2x8x1xf32> to vector<2x8x8xf32>
    %149 = arith.mulf %144, %148 : vector<2x8x8xf32>
    %150 = arith.addf %149, %17 : vector<2x8x8xf32>
    %151 = arith.truncf %150 : vector<2x8x8xf32> to vector<2x8x8xbf16>
    "tpu.trace_start"() <{level = 10 : i32, message = "bij,bjd->bid"}> : () -> ()
    %cst_47 = arith.constant dense<0.000000e+00> : vector<2x8x16xf32>
    %152 = tpu.matmul %151, %134, %cst_47 {dimension_numbers = #tpu.dot_dimension_numbers<[2], [1], [1], [2], [0, 0, 0, 1, 1, 2], [0], [0]>} : vector<2x8x8xbf16>, vector<2x8x16xbf16>, vector<2x8x16xf32> -> vector<2x8x16xf32>
    "tpu.trace_stop"() : () -> ()
    %153 = vector.extract_strided_slice %44 {offsets = [0, 64], sizes = [16, 16], strides = [1, 1]} : vector<16x384xf32> to vector<16x16xf32>
    %154 = vector.shape_cast %153 : vector<16x16xf32> to vector<2x8x16xf32>
    %155 = arith.truncf %154 : vector<2x8x16xf32> to vector<2x8x16xbf16>
    %156 = vector.extract_strided_slice %44 {offsets = [0, 192], sizes = [16, 16], strides = [1, 1]} : vector<16x384xf32> to vector<16x16xf32>
    %157 = vector.shape_cast %156 : vector<16x16xf32> to vector<2x8x16xf32>
    %158 = arith.truncf %157 : vector<2x8x16xf32> to vector<2x8x16xbf16>
    %159 = vector.extract_strided_slice %44 {offsets = [0, 320], sizes = [16, 16], strides = [1, 1]} : vector<16x384xf32> to vector<16x16xf32>
    %160 = vector.shape_cast %159 : vector<16x16xf32> to vector<2x8x16xf32>
    %161 = arith.truncf %160 : vector<2x8x16xf32> to vector<2x8x16xbf16>
    "tpu.trace_start"() <{level = 10 : i32, message = "bid,bjd->bij"}> : () -> ()
    %cst_48 = arith.constant dense<0.000000e+00> : vector<2x8x8xf32>
    %162 = tpu.matmul %155, %158, %cst_48 {dimension_numbers = #tpu.dot_dimension_numbers<[2], [2], [1], [1], [0, 0, 0, 1, 1, 1], [0], [0]>} : vector<2x8x16xbf16>, vector<2x8x16xbf16>, vector<2x8x8xf32> -> vector<2x8x8xf32>
    %cst_49 = arith.constant 0.000000e+00 : f32
    "tpu.trace_stop"() : () -> ()
    %163 = vector.broadcast %cst_49 : f32 to vector<2x8x8xf32>
    %164 = arith.cmpf ogt, %12, %163 : vector<2x8x8xf32>
    %cst_50 = arith.constant -1.000000e+30 : f32
    %165 = vector.broadcast %cst_50 : f32 to vector<2x8x8xf32>
    %166 = arith.select %164, %162, %165 : vector<2x8x8xi1>, vector<2x8x8xf32>
    %cst_51 = arith.constant dense<0xFF800000> : vector<2x8xf32>
    %167 = vector.multi_reduction <maximumf>, %166, %cst_51 [2] : vector<2x8x8xf32> to vector<2x8xf32>
    %168 = vector.shape_cast %167 : vector<2x8xf32> to vector<2x8x1xf32>
    %169 = vector.broadcast %168 : vector<2x8x1xf32> to vector<2x8x8xf32>
    %170 = arith.subf %166, %169 : vector<2x8x8xf32>
    %171 = math.exp %170 : vector<2x8x8xf32>
    %cst_52 = arith.constant dense<0.000000e+00> : vector<2x8xf32>
    %172 = vector.multi_reduction <add>, %171, %cst_52 [2] : vector<2x8x8xf32> to vector<2x8xf32>
    %173 = vector.shape_cast %172 : vector<2x8xf32> to vector<2x8x1xf32>
    %174 = tpu.reciprocal %173 {approx = true} : vector<2x8x1xf32> -> vector<2x8x1xf32>
    %175 = vector.broadcast %174 : vector<2x8x1xf32> to vector<2x8x8xf32>
    %176 = arith.mulf %171, %175 : vector<2x8x8xf32>
    %177 = arith.addf %176, %17 : vector<2x8x8xf32>
    %178 = arith.truncf %177 : vector<2x8x8xf32> to vector<2x8x8xbf16>
    "tpu.trace_start"() <{level = 10 : i32, message = "bij,bjd->bid"}> : () -> ()
    %cst_53 = arith.constant dense<0.000000e+00> : vector<2x8x16xf32>
    %179 = tpu.matmul %178, %161, %cst_53 {dimension_numbers = #tpu.dot_dimension_numbers<[2], [1], [1], [2], [0, 0, 0, 1, 1, 2], [0], [0]>} : vector<2x8x8xbf16>, vector<2x8x16xbf16>, vector<2x8x16xf32> -> vector<2x8x16xf32>
    "tpu.trace_stop"() : () -> ()
    %180 = vector.extract_strided_slice %44 {offsets = [0, 80], sizes = [16, 16], strides = [1, 1]} : vector<16x384xf32> to vector<16x16xf32>
    %181 = vector.shape_cast %180 : vector<16x16xf32> to vector<2x8x16xf32>
    %182 = arith.truncf %181 : vector<2x8x16xf32> to vector<2x8x16xbf16>
    %183 = vector.extract_strided_slice %44 {offsets = [0, 208], sizes = [16, 16], strides = [1, 1]} : vector<16x384xf32> to vector<16x16xf32>
    %184 = vector.shape_cast %183 : vector<16x16xf32> to vector<2x8x16xf32>
    %185 = arith.truncf %184 : vector<2x8x16xf32> to vector<2x8x16xbf16>
    %186 = vector.extract_strided_slice %44 {offsets = [0, 336], sizes = [16, 16], strides = [1, 1]} : vector<16x384xf32> to vector<16x16xf32>
    %187 = vector.shape_cast %186 : vector<16x16xf32> to vector<2x8x16xf32>
    %188 = arith.truncf %187 : vector<2x8x16xf32> to vector<2x8x16xbf16>
    "tpu.trace_start"() <{level = 10 : i32, message = "bid,bjd->bij"}> : () -> ()
    %cst_54 = arith.constant dense<0.000000e+00> : vector<2x8x8xf32>
    %189 = tpu.matmul %182, %185, %cst_54 {dimension_numbers = #tpu.dot_dimension_numbers<[2], [2], [1], [1], [0, 0, 0, 1, 1, 1], [0], [0]>} : vector<2x8x16xbf16>, vector<2x8x16xbf16>, vector<2x8x8xf32> -> vector<2x8x8xf32>
    %cst_55 = arith.constant 0.000000e+00 : f32
    "tpu.trace_stop"() : () -> ()
    %190 = vector.broadcast %cst_55 : f32 to vector<2x8x8xf32>
    %191 = arith.cmpf ogt, %12, %190 : vector<2x8x8xf32>
    %cst_56 = arith.constant -1.000000e+30 : f32
    %192 = vector.broadcast %cst_56 : f32 to vector<2x8x8xf32>
    %193 = arith.select %191, %189, %192 : vector<2x8x8xi1>, vector<2x8x8xf32>
    %cst_57 = arith.constant dense<0xFF800000> : vector<2x8xf32>
    %194 = vector.multi_reduction <maximumf>, %193, %cst_57 [2] : vector<2x8x8xf32> to vector<2x8xf32>
    %195 = vector.shape_cast %194 : vector<2x8xf32> to vector<2x8x1xf32>
    %196 = vector.broadcast %195 : vector<2x8x1xf32> to vector<2x8x8xf32>
    %197 = arith.subf %193, %196 : vector<2x8x8xf32>
    %198 = math.exp %197 : vector<2x8x8xf32>
    %cst_58 = arith.constant dense<0.000000e+00> : vector<2x8xf32>
    %199 = vector.multi_reduction <add>, %198, %cst_58 [2] : vector<2x8x8xf32> to vector<2x8xf32>
    %200 = vector.shape_cast %199 : vector<2x8xf32> to vector<2x8x1xf32>
    %201 = tpu.reciprocal %200 {approx = true} : vector<2x8x1xf32> -> vector<2x8x1xf32>
    %202 = vector.broadcast %201 : vector<2x8x1xf32> to vector<2x8x8xf32>
    %203 = arith.mulf %198, %202 : vector<2x8x8xf32>
    %204 = arith.addf %203, %17 : vector<2x8x8xf32>
    %205 = arith.truncf %204 : vector<2x8x8xf32> to vector<2x8x8xbf16>
    "tpu.trace_start"() <{level = 10 : i32, message = "bij,bjd->bid"}> : () -> ()
    %cst_59 = arith.constant dense<0.000000e+00> : vector<2x8x16xf32>
    %206 = tpu.matmul %205, %188, %cst_59 {dimension_numbers = #tpu.dot_dimension_numbers<[2], [1], [1], [2], [0, 0, 0, 1, 1, 2], [0], [0]>} : vector<2x8x8xbf16>, vector<2x8x16xbf16>, vector<2x8x16xf32> -> vector<2x8x16xf32>
    "tpu.trace_stop"() : () -> ()
    %207 = tpu.concatenate %71, %98, %125, %152, %179, %206 in 2 : vector<2x8x16xf32>, vector<2x8x16xf32>, vector<2x8x16xf32>, vector<2x8x16xf32>, vector<2x8x16xf32>, vector<2x8x16xf32> -> vector<2x8x96xf32>
    %208 = vector.shape_cast %207 : vector<2x8x96xf32> to vector<16x96xf32>
    %209 = arith.truncf %208 : vector<16x96xf32> to vector<16x96xbf16>
    %c0_60 = arith.constant 0 : index
    %c0_61 = arith.constant 0 : index
    %210 = vector.load %arg9[%c0_60, %c0_61] : memref<96x128xbf16, #tpu.memory_space<vmem>>, vector<96x128xbf16>
    %cst_62 = arith.constant dense<0.000000e+00> : vector<16x128xf32>
    %211 = tpu.matmul %209, %210, %cst_62 {dimension_numbers = #tpu.dot_dimension_numbers<[1], [0], [0], [1], [0, 0, 1, 1], [], []>} : vector<16x96xbf16>, vector<96x128xbf16>, vector<16x128xf32> -> vector<16x128xf32>
    %212 = arith.addf %6, %211 : vector<16x128xf32>
    %c0_63 = arith.constant 0 : index
    %c0_64 = arith.constant 0 : index
    %213 = vector.load %arg10[%c0_63, %c0_64] : memref<1x128xf32, #tpu.memory_space<vmem>>, vector<1x128xf32>
    %214 = vector.broadcast %213 : vector<1x128xf32> to vector<16x128xf32>
    %215 = arith.addf %212, %214 : vector<16x128xf32>
    %c0_65 = arith.constant 0 : index
    %c0_66 = arith.constant 0 : index
    %216 = vector.load %arg11[%c0_65, %c0_66] : memref<1x128xf32, #tpu.memory_space<vmem>>, vector<1x128xf32>
    %c0_67 = arith.constant 0 : index
    %c0_68 = arith.constant 0 : index
    %217 = vector.load %arg12[%c0_67, %c0_68] : memref<1x128xf32, #tpu.memory_space<vmem>>, vector<1x128xf32>
    %cst_69 = arith.constant dense<0.000000e+00> : vector<16xf32>
    %218 = vector.multi_reduction <add>, %215, %cst_69 [1] : vector<16x128xf32> to vector<16xf32>
    %219 = vector.shape_cast %218 : vector<16xf32> to vector<16x1xf32>
    %220 = arith.mulf %215, %215 : vector<16x128xf32>
    %cst_70 = arith.constant dense<0.000000e+00> : vector<16xf32>
    %221 = vector.multi_reduction <add>, %220, %cst_70 [1] : vector<16x128xf32> to vector<16xf32>
    %222 = vector.shape_cast %221 : vector<16xf32> to vector<16x1xf32>
    %cst_71 = arith.constant 0.012820513 : f32
    %223 = vector.broadcast %cst_71 : f32 to vector<16x1xf32>
    %224 = arith.mulf %219, %223 : vector<16x1xf32>
    %cst_72 = arith.constant 0.012820513 : f32
    %225 = vector.broadcast %cst_72 : f32 to vector<16x1xf32>
    %226 = arith.mulf %222, %225 : vector<16x1xf32>
    %227 = arith.mulf %224, %224 : vector<16x1xf32>
    %228 = arith.subf %226, %227 : vector<16x1xf32>
    %229 = vector.broadcast %224 : vector<16x1xf32> to vector<16x128xf32>
    %230 = arith.subf %215, %229 : vector<16x128xf32>
    %cst_73 = arith.constant 9.99999974E-6 : f32
    %231 = vector.broadcast %cst_73 : f32 to vector<16x1xf32>
    %232 = arith.addf %228, %231 : vector<16x1xf32>
    %233 = math.rsqrt %232 : vector<16x1xf32>
    %234 = vector.broadcast %233 : vector<16x1xf32> to vector<16x128xf32>
    %235 = arith.mulf %230, %234 : vector<16x128xf32>
    %236 = vector.broadcast %216 : vector<1x128xf32> to vector<16x128xf32>
    %237 = arith.mulf %235, %236 : vector<16x128xf32>
    %238 = vector.broadcast %217 : vector<1x128xf32> to vector<16x128xf32>
    %239 = arith.addf %237, %238 : vector<16x128xf32>
    %240 = arith.truncf %239 : vector<16x128xf32> to vector<16x128xbf16>
    %c0_74 = arith.constant 0 : index
    %c0_75 = arith.constant 0 : index
    %241 = vector.load %arg13[%c0_74, %c0_75] : memref<128x384xbf16, #tpu.memory_space<vmem>>, vector<128x384xbf16>
    %cst_76 = arith.constant dense<0.000000e+00> : vector<16x384xf32>
    %242 = tpu.matmul %240, %241, %cst_76 {dimension_numbers = #tpu.dot_dimension_numbers<[1], [0], [0], [1], [0, 0, 1, 1], [], []>} : vector<16x128xbf16>, vector<128x384xbf16>, vector<16x384xf32> -> vector<16x384xf32>
    %c0_77 = arith.constant 0 : index
    %c0_78 = arith.constant 0 : index
    %243 = vector.load %arg14[%c0_77, %c0_78] : memref<1x384xf32, #tpu.memory_space<vmem>>, vector<1x384xf32>
    %244 = vector.broadcast %243 : vector<1x384xf32> to vector<16x384xf32>
    %245 = arith.addf %242, %244 : vector<16x384xf32>
    %cst_79 = arith.constant 5.000000e-01 : f32
    %246 = vector.broadcast %cst_79 : f32 to vector<16x384xf32>
    %247 = arith.mulf %246, %245 : vector<16x384xf32>
    %cst_80 = arith.constant 4.471500e-02 : f32
    %248 = vector.broadcast %cst_80 : f32 to vector<16x384xf32>
    %249 = arith.mulf %248, %245 : vector<16x384xf32>
    %250 = arith.mulf %249, %245 : vector<16x384xf32>
    %251 = arith.mulf %250, %245 : vector<16x384xf32>
    %252 = arith.addf %245, %251 : vector<16x384xf32>
    %cst_81 = arith.constant 0.797884583 : f32
    %253 = vector.broadcast %cst_81 : f32 to vector<16x384xf32>
    %254 = arith.mulf %253, %252 : vector<16x384xf32>
    %255 = math.tanh %254 : vector<16x384xf32>
    %cst_82 = arith.constant 1.000000e+00 : f32
    %256 = vector.broadcast %cst_82 : f32 to vector<16x384xf32>
    %257 = arith.addf %256, %255 : vector<16x384xf32>
    %258 = arith.mulf %247, %257 : vector<16x384xf32>
    %259 = arith.truncf %258 : vector<16x384xf32> to vector<16x384xbf16>
    %c0_83 = arith.constant 0 : index
    %c0_84 = arith.constant 0 : index
    %260 = vector.load %arg15[%c0_83, %c0_84] : memref<384x128xbf16, #tpu.memory_space<vmem>>, vector<384x128xbf16>
    %cst_85 = arith.constant dense<0.000000e+00> : vector<16x128xf32>
    %261 = tpu.matmul %259, %260, %cst_85 {dimension_numbers = #tpu.dot_dimension_numbers<[1], [0], [0], [1], [0, 0, 1, 1], [], []>} : vector<16x384xbf16>, vector<384x128xbf16>, vector<16x128xf32> -> vector<16x128xf32>
    %c0_86 = arith.constant 0 : index
    %c0_87 = arith.constant 0 : index
    %262 = vector.load %arg16[%c0_86, %c0_87] : memref<1x128xf32, #tpu.memory_space<vmem>>, vector<1x128xf32>
    %263 = vector.broadcast %262 : vector<1x128xf32> to vector<16x128xf32>
    %264 = arith.addf %261, %263 : vector<16x128xf32>
    %265 = arith.addf %215, %264 : vector<16x128xf32>
    %c0_88 = arith.constant 0 : index
    %c0_89 = arith.constant 0 : index
    %266 = vector.load %arg17[%c0_88, %c0_89] : memref<1x128xf32, #tpu.memory_space<vmem>>, vector<1x128xf32>
    %c0_90 = arith.constant 0 : index
    %c0_91 = arith.constant 0 : index
    %267 = vector.load %arg18[%c0_90, %c0_91] : memref<1x128xf32, #tpu.memory_space<vmem>>, vector<1x128xf32>
    %cst_92 = arith.constant dense<0.000000e+00> : vector<16xf32>
    %268 = vector.multi_reduction <add>, %265, %cst_92 [1] : vector<16x128xf32> to vector<16xf32>
    %269 = vector.shape_cast %268 : vector<16xf32> to vector<16x1xf32>
    %270 = arith.mulf %265, %265 : vector<16x128xf32>
    %cst_93 = arith.constant dense<0.000000e+00> : vector<16xf32>
    %271 = vector.multi_reduction <add>, %270, %cst_93 [1] : vector<16x128xf32> to vector<16xf32>
    %272 = vector.shape_cast %271 : vector<16xf32> to vector<16x1xf32>
    %cst_94 = arith.constant 0.012820513 : f32
    %273 = vector.broadcast %cst_94 : f32 to vector<16x1xf32>
    %274 = arith.mulf %269, %273 : vector<16x1xf32>
    %cst_95 = arith.constant 0.012820513 : f32
    %275 = vector.broadcast %cst_95 : f32 to vector<16x1xf32>
    %276 = arith.mulf %272, %275 : vector<16x1xf32>
    %277 = arith.mulf %274, %274 : vector<16x1xf32>
    %278 = arith.subf %276, %277 : vector<16x1xf32>
    %279 = vector.broadcast %274 : vector<16x1xf32> to vector<16x128xf32>
    %280 = arith.subf %265, %279 : vector<16x128xf32>
    %cst_96 = arith.constant 9.99999974E-6 : f32
    %281 = vector.broadcast %cst_96 : f32 to vector<16x1xf32>
    %282 = arith.addf %278, %281 : vector<16x1xf32>
    %283 = math.rsqrt %282 : vector<16x1xf32>
    %284 = vector.broadcast %283 : vector<16x1xf32> to vector<16x128xf32>
    %285 = arith.mulf %280, %284 : vector<16x128xf32>
    %286 = vector.broadcast %266 : vector<1x128xf32> to vector<16x128xf32>
    %287 = arith.mulf %285, %286 : vector<16x128xf32>
    %288 = vector.broadcast %267 : vector<1x128xf32> to vector<16x128xf32>
    %289 = arith.addf %287, %288 : vector<16x128xf32>
    %290 = vector.shape_cast %289 : vector<16x128xf32> to vector<2x8x128xf32>
    %cst_97 = arith.constant dense<0.000000e+00> : vector<2x128xf32>
    %291 = vector.multi_reduction <add>, %290, %cst_97 [1] : vector<2x8x128xf32> to vector<2x128xf32>
    %cst_98 = arith.constant 8.000000e+00 : f32
    %292 = vector.broadcast %cst_98 : f32 to vector<2x128xf32>
    %293 = arith.divf %291, %292 : vector<2x128xf32>
    %294 = arith.truncf %293 : vector<2x128xf32> to vector<2x128xbf16>
    %c0_99 = arith.constant 0 : index
    %c0_100 = arith.constant 0 : index
    %295 = vector.load %arg19[%c0_99, %c0_100] : memref<128x384xbf16, #tpu.memory_space<vmem>>, vector<128x384xbf16>
    %cst_101 = arith.constant dense<0.000000e+00> : vector<2x384xf32>
    %296 = tpu.matmul %294, %295, %cst_101 {dimension_numbers = #tpu.dot_dimension_numbers<[1], [0], [0], [1], [0, 0, 1, 1], [], []>} : vector<2x128xbf16>, vector<128x384xbf16>, vector<2x384xf32> -> vector<2x384xf32>
    %c0_102 = arith.constant 0 : index
    %c0_103 = arith.constant 0 : index
    %297 = vector.load %arg20[%c0_102, %c0_103] : memref<1x384xf32, #tpu.memory_space<vmem>>, vector<1x384xf32>
    %298 = vector.broadcast %297 : vector<1x384xf32> to vector<2x384xf32>
    %299 = arith.addf %296, %298 : vector<2x384xf32>
    %cst_104 = arith.constant 5.000000e-01 : f32
    %300 = vector.broadcast %cst_104 : f32 to vector<2x384xf32>
    %301 = arith.mulf %300, %299 : vector<2x384xf32>
    %cst_105 = arith.constant 4.471500e-02 : f32
    %302 = vector.broadcast %cst_105 : f32 to vector<2x384xf32>
    %303 = arith.mulf %302, %299 : vector<2x384xf32>
    %304 = arith.mulf %303, %299 : vector<2x384xf32>
    %305 = arith.mulf %304, %299 : vector<2x384xf32>
    %306 = arith.addf %299, %305 : vector<2x384xf32>
    %cst_106 = arith.constant 0.797884583 : f32
    %307 = vector.broadcast %cst_106 : f32 to vector<2x384xf32>
    %308 = arith.mulf %307, %306 : vector<2x384xf32>
    %309 = math.tanh %308 : vector<2x384xf32>
    %cst_107 = arith.constant 1.000000e+00 : f32
    %310 = vector.broadcast %cst_107 : f32 to vector<2x384xf32>
    %311 = arith.addf %310, %309 : vector<2x384xf32>
    %312 = arith.mulf %301, %311 : vector<2x384xf32>
    %313 = arith.truncf %312 : vector<2x384xf32> to vector<2x384xbf16>
    %c0_108 = arith.constant 0 : index
    %c0_109 = arith.constant 0 : index
    %314 = vector.load %arg21[%c0_108, %c0_109] : memref<384x128xbf16, #tpu.memory_space<vmem>>, vector<384x128xbf16>
    %cst_110 = arith.constant dense<0.000000e+00> : vector<2x128xf32>
    %315 = tpu.matmul %313, %314, %cst_110 {dimension_numbers = #tpu.dot_dimension_numbers<[1], [0], [0], [1], [0, 0, 1, 1], [], []>} : vector<2x384xbf16>, vector<384x128xbf16>, vector<2x128xf32> -> vector<2x128xf32>
    %c0_111 = arith.constant 0 : index
    %c0_112 = arith.constant 0 : index
    %316 = vector.load %arg22[%c0_111, %c0_112] : memref<1x128xf32, #tpu.memory_space<vmem>>, vector<1x128xf32>
    %317 = vector.broadcast %316 : vector<1x128xf32> to vector<2x128xf32>
    %318 = arith.addf %315, %317 : vector<2x128xf32>
    %c0_113 = arith.constant 0 : index
    %c0_114 = arith.constant 0 : index
    %319 = vector.load %arg23[%c0_113, %c0_114] : memref<2x128xf32, #tpu.memory_space<vmem>>, vector<2x128xf32>
    tpu.vector_store %arg23[%c0_113, %c0_114], %318 {strides = array<i32>} : memref<2x128xf32, #tpu.memory_space<vmem>>, vector<2x128xf32>,
    return
  }
  func.func @transform_0(%arg0: i32) -> (i32, i32, i32) {
    %c0_i32 = arith.constant 0 : i32
    %c0_i32_0 = arith.constant 0 : i32
    %c0_i32_1 = arith.constant 0 : i32
    return %arg0, %c0_i32, %c0_i32_0 : i32, i32, i32
  }
  func.func @transform_1(%arg0: i32) -> (i32, i32) {
    %c0_i32 = arith.constant 0 : i32
    %c0_i32_0 = arith.constant 0 : i32
    return %arg0, %c0_i32 : i32, i32
  }
  func.func @transform_2(%arg0: i32) -> (i32, i32, i32) {
    %c0_i32 = arith.constant 0 : i32
    %c0_i32_0 = arith.constant 0 : i32
    %c0_i32_1 = arith.constant 0 : i32
    return %arg0, %c0_i32, %c0_i32_0 : i32, i32, i32
  }
  func.func @transform_3(%arg0: i32) -> (i32, i32) {
    %c0_i32 = arith.constant 0 : i32
    %c0_i32_0 = arith.constant 0 : i32
    %c0_i32_1 = arith.constant 0 : i32
    return %c0_i32, %c0_i32_0 : i32, i32
  }
  func.func @transform_4(%arg0: i32) -> (i32, i32) {
    %c0_i32 = arith.constant 0 : i32
    %c0_i32_0 = arith.constant 0 : i32
    %c0_i32_1 = arith.constant 0 : i32
    return %c0_i32, %c0_i32_0 : i32, i32
  }
  func.func @transform_5(%arg0: i32) -> (i32, i32) {
    %c0_i32 = arith.constant 0 : i32
    %c0_i32_0 = arith.constant 0 : i32
    %c0_i32_1 = arith.constant 0 : i32
    return %c0_i32, %c0_i32_0 : i32, i32
  }
  func.func @transform_6(%arg0: i32) -> (i32, i32) {
    %c0_i32 = arith.constant 0 : i32
    %c0_i32_0 = arith.constant 0 : i32
    %c0_i32_1 = arith.constant 0 : i32
    return %c0_i32, %c0_i32_0 : i32, i32
  }
  func.func @transform_7(%arg0: i32) -> (i32, i32) {
    %c0_i32 = arith.constant 0 : i32
    %c0_i32_0 = arith.constant 0 : i32
    %c0_i32_1 = arith.constant 0 : i32
    return %c0_i32, %c0_i32_0 : i32, i32
  }
  func.func @transform_8(%arg0: i32) -> (i32, i32) {
    %c0_i32 = arith.constant 0 : i32
    %c0_i32_0 = arith.constant 0 : i32
    %c0_i32_1 = arith.constant 0 : i32
    return %c0_i32, %c0_i32_0 : i32, i32
  }
  func.func @transform_9(%arg0: i32) -> (i32, i32) {
    %c0_i32 = arith.constant 0 : i32
    %c0_i32_0 = arith.constant 0 : i32
    %c0_i32_1 = arith.constant 0 : i32
    return %c0_i32, %c0_i32_0 : i32, i32
  }
  func.func @transform_10(%arg0: i32) -> (i32, i32) {
    %c0_i32 = arith.constant 0 : i32
    %c0_i32_0 = arith.constant 0 : i32
    %c0_i32_1 = arith.constant 0 : i32
    return %c0_i32, %c0_i32_0 : i32, i32
  }
  func.func @transform_11(%arg0: i32) -> (i32, i32) {
    %c0_i32 = arith.constant 0 : i32
    %c0_i32_0 = arith.constant 0 : i32
    %c0_i32_1 = arith.constant 0 : i32
    return %c0_i32, %c0_i32_0 : i32, i32
  }
  func.func @transform_12(%arg0: i32) -> (i32, i32) {
    %c0_i32 = arith.constant 0 : i32
    %c0_i32_0 = arith.constant 0 : i32
    %c0_i32_1 = arith.constant 0 : i32
    return %c0_i32, %c0_i32_0 : i32, i32
  }
  func.func @transform_13(%arg0: i32) -> (i32, i32) {
    %c0_i32 = arith.constant 0 : i32
    %c0_i32_0 = arith.constant 0 : i32
    %c0_i32_1 = arith.constant 0 : i32
    return %c0_i32, %c0_i32_0 : i32, i32
  }
  func.func @transform_14(%arg0: i32) -> (i32, i32) {
    %c0_i32 = arith.constant 0 : i32
    %c0_i32_0 = arith.constant 0 : i32
    %c0_i32_1 = arith.constant 0 : i32
    return %c0_i32, %c0_i32_0 : i32, i32
  }
  func.func @transform_15(%arg0: i32) -> (i32, i32) {
    %c0_i32 = arith.constant 0 : i32
    %c0_i32_0 = arith.constant 0 : i32
    %c0_i32_1 = arith.constant 0 : i32
    return %c0_i32, %c0_i32_0 : i32, i32
  }
  func.func @transform_16(%arg0: i32) -> (i32, i32) {
    %c0_i32 = arith.constant 0 : i32
    %c0_i32_0 = arith.constant 0 : i32
    %c0_i32_1 = arith.constant 0 : i32
    return %c0_i32, %c0_i32_0 : i32, i32
  }
  func.func @transform_17(%arg0: i32) -> (i32, i32) {
    %c0_i32 = arith.constant 0 : i32
    %c0_i32_0 = arith.constant 0 : i32
    %c0_i32_1 = arith.constant 0 : i32
    return %c0_i32, %c0_i32_0 : i32, i32
  }
  func.func @transform_18(%arg0: i32) -> (i32, i32) {
    %c0_i32 = arith.constant 0 : i32
    %c0_i32_0 = arith.constant 0 : i32
    %c0_i32_1 = arith.constant 0 : i32
    return %c0_i32, %c0_i32_0 : i32, i32
  }
  func.func @transform_19(%arg0: i32) -> (i32, i32) {
    %c0_i32 = arith.constant 0 : i32
    %c0_i32_0 = arith.constant 0 : i32
    %c0_i32_1 = arith.constant 0 : i32
    return %c0_i32, %c0_i32_0 : i32, i32
  }
  func.func @transform_20(%arg0: i32) -> (i32, i32) {
    %c0_i32 = arith.constant 0 : i32
    %c0_i32_0 = arith.constant 0 : i32
    %c0_i32_1 = arith.constant 0 : i32
    return %c0_i32, %c0_i32_0 : i32, i32
  }
  func.func @transform_21(%arg0: i32) -> (i32, i32) {
    %c0_i32 = arith.constant 0 : i32
    %c0_i32_0 = arith.constant 0 : i32
    %c0_i32_1 = arith.constant 0 : i32
    return %c0_i32, %c0_i32_0 : i32, i32
  }
  func.func @transform_22(%arg0: i32) -> (i32, i32) {
    %c0_i32 = arith.constant 0 : i32
    %c0_i32_0 = arith.constant 0 : i32
    return %arg0, %c0_i32 : i32, i32
  }
}

</mosaic_0001>

<llo_original>
// kernel: tpu_custom_call.1
$region0: #{tpu_custom_call.1}
  #allocation0 [shape = 'u32[]', space=smem, size = 0x4, offset = 0x4, fixed_abs, tag = 'smem constant byte address 0x4 - core index']
  #allocation1 [shape = 'u32[144,128]{1,0:T(1,128)}', space=vmem, size = 0x12000, scoped, tag = 'internal scratch']
  %s0 = inlined_call_operand.hbm [shape: bf16[2,8,128], index: 0, kind: input, shape index: {}]
  %s1 = inlined_call_operand.hbm [shape: f32[2,8], index: 1, kind: input, shape index: {}]
  %s2 = inlined_call_operand.hbm [shape: bf16[2,8,8], index: 2, kind: input, shape index: {}]
  %s3 = inlined_call_operand.hbm [shape: bf16[128,128], index: 3, kind: input, shape index: {}]
  %s4 = inlined_call_operand.vmem [shape: f32[1,128], index: 4, kind: input, shape index: {}]
  %s5 = inlined_call_operand.vmem [shape: f32[1,128], index: 5, kind: input, shape index: {}]
  %s6 = inlined_call_operand.vmem [shape: f32[1,128], index: 6, kind: input, shape index: {}]
  %s7 = inlined_call_operand.hbm [shape: bf16[128,384], index: 7, kind: input, shape index: {}]
  %s8 = inlined_call_operand.hbm [shape: bf16[96,128], index: 8, kind: input, shape index: {}]
  %s9 = inlined_call_operand.vmem [shape: f32[1,128], index: 9, kind: input, shape index: {}]
  %s10 = inlined_call_operand.vmem [shape: f32[1,128], index: 10, kind: input, shape index: {}]
  %s11 = inlined_call_operand.vmem [shape: f32[1,128], index: 11, kind: input, shape index: {}]
  %s12 = inlined_call_operand.hbm [shape: bf16[128,384], index: 12, kind: input, shape index: {}]
  %s13 = inlined_call_operand.vmem [shape: f32[1,384], index: 13, kind: input, shape index: {}]
  %s14 = inlined_call_operand.hbm [shape: bf16[384,128], index: 14, kind: input, shape index: {}]
  %s15 = inlined_call_operand.vmem [shape: f32[1,128], index: 15, kind: input, shape index: {}]
  %s16 = inlined_call_operand.vmem [shape: f32[1,128], index: 16, kind: input, shape index: {}]
  %s17 = inlined_call_operand.vmem [shape: f32[1,128], index: 17, kind: input, shape index: {}]
  %s18 = inlined_call_operand.hbm [shape: bf16[128,384], index: 18, kind: input, shape index: {}]
  %s19 = inlined_call_operand.vmem [shape: f32[1,384], index: 19, kind: input, shape index: {}]
  %s20 = inlined_call_operand.hbm [shape: bf16[384,128], index: 20, kind: input, shape index: {}]
  %s21 = inlined_call_operand.vmem [shape: f32[1,128], index: 21, kind: input, shape index: {}]
  %s22 = inlined_call_operand.hbm [shape: f32[2,128], index: 22, kind: output, shape index: {}]
  %s23 = sld [smem:[#allocation0]]
  $region138: #{tpu_custom_call.1} parent=0
    _
  %s25 = ssub.s32 1, %s23
  %s26 = scalar_select 0, %s25, %s23
  $region1: #{tpu_custom_call.1} parent=0
    #allocation2 [shape = 'u8[4096]{0}', space=vmem, size = 0x1000, scoped, tag = 'input window, operand 0, single buffered']
    #allocation3 [shape = 's32[1]{0}', space=sflag, size = 0x4, scoped, tag = 'scoped memory for tpu_custom_call.1']
    #allocation4 [shape = 's32[1]{0}', space=sflag, size = 0x4, scoped, tag = 'scoped memory for tpu_custom_call.1']
    #allocation5 [shape = 'u8[1024]{0}', space=vmem, size = 0x400, scoped, tag = 'input window, operand 1, single buffered']
    #allocation6 [shape = 's32[1]{0}', space=sflag, size = 0x4, scoped, tag = 'scoped memory for tpu_custom_call.1']
    #allocation7 [shape = 'u8[4096]{0}', space=vmem, size = 0x1000, scoped, tag = 'input window, operand 2, single buffered']
    #allocation8 [shape = 'u8[32768]{0}', space=vmem, size = 0x8000, scoped, tag = 'input window, operand 3, single buffered']
    #allocation9 [shape = 's32[1]{0}', space=sflag, size = 0x4, scoped, tag = 'scoped memory for tpu_custom_call.1']
    #allocation10 [shape = 'u8[98304]{0}', space=vmem, size = 0x18000, scoped, tag = 'input window, operand 7, single buffered']
    #allocation11 [shape = 'u8[24576]{0}', space=vmem, size = 0x6000, scoped, tag = 'input window, operand 8, single buffered']
    #allocation12 [shape = 's32[1]{0}', space=sflag, size = 0x4, scoped, tag = 'scoped memory for tpu_custom_call.1']
    #allocation13 [shape = 'u8[98304]{0}', space=vmem, size = 0x18000, scoped, tag = 'input window, operand 12, single buffered']
    #allocation14 [shape = 'u8[98304]{0}', space=vmem, size = 0x18000, scoped, tag = 'input window, operand 14, single buffered']
    #allocation15 [shape = 's32[1]{0}', space=sflag, size = 0x4, scoped, tag = 'scoped memory for tpu_custom_call.1']
    #allocation16 [shape = 'u8[98304]{0}', space=vmem, size = 0x18000, scoped, tag = 'input window, operand 18, single buffered']
    #allocation17 [shape = 'u8[98304]{0}', space=vmem, size = 0x18000, scoped, tag = 'input window, operand 20, single buffered']
    #allocation18 [shape = 's32[1]{0}', space=sflag, size = 0x4, scoped, tag = 'scoped memory for tpu_custom_call.1']
    #allocation19 [shape = 'u8[1024]{0}', space=vmem, size = 0x400, scoped, tag = 'output window, operand 0, single buffered']
    %27 = vsyncpa [#allocation3], 0
    %28 = vsyncpa [#allocation6], 0
    %29 = vsyncpa [#allocation9], 0
    %30 = vsyncpa [#allocation12], 0
    %31 = vsyncpa [#allocation15], 0
    %32 = vsyncpa [#allocation18], 0
    %33 = vsyncpa [#allocation4], 0
    // Predicated region
    $region2: #{tpu_custom_call.1} parent=1 // pred_check
      _
    $region3: #{tpu_custom_call.1} parent=1 // pred_check_branch
      %35 = sbr.rel (0) target = $region5
    $region4: #{tpu_custom_call.1} parent=1 // pred_region
      %s37 = ssub.s32 128, 128
      %38 = vsyncadd [#allocation3], %s37
      %s39 = sshll.u32 [#allocation2], 4
      %s40 = int_to_ptr.vmem [resolvable:$true] %s39
      %45 = dma.hbm_to_vmem [thread:$0]  %s0, 128, %s40, [#allocation3], 64, 64, 4
    $region5: #{tpu_custom_call.1} parent=1 // pred_fallthru
      _
    // Predicated region
    $region6: #{tpu_custom_call.1} parent=1 // pred_check
      _
    $region7: #{tpu_custom_call.1} parent=1 // pred_check_branch
      %47 = sbr.rel (0) target = $region9
    $region8: #{tpu_custom_call.1} parent=1 // pred_region
      %s49 = ssub.s32 32, 32
      %50 = vsyncadd [#allocation6], %s49
      %s52 = sshll.u32 [#allocation5], 4
      %s53 = int_to_ptr.vmem [resolvable:$true] %s52
      %55 = dma.hbm_to_vmem [thread:$0]  %s1, 32, %s53, [#allocation6]
    $region9: #{tpu_custom_call.1} parent=1 // pred_fallthru
      _
    // Predicated region
    $region10: #{tpu_custom_call.1} parent=1 // pred_check
      _
    $region11: #{tpu_custom_call.1} parent=1 // pred_check_branch
      %57 = sbr.rel (0) target = $region13
    $region12: #{tpu_custom_call.1} parent=1 // pred_region
      %s59 = ssub.s32 128, 128
      %60 = vsyncadd [#allocation6], %s59
      %s61 = sshll.u32 [#allocation7], 4
      %s62 = int_to_ptr.vmem [resolvable:$true] %s61
      %67 = dma.hbm_to_vmem [thread:$0]  %s2, 128, %s62, [#allocation6], 64, 64, 4
    $region13: #{tpu_custom_call.1} parent=1 // pred_fallthru
      _
    // Predicated region
    $region14: #{tpu_custom_call.1} parent=1 // pred_check
      _
    $region15: #{tpu_custom_call.1} parent=1 // pred_check_branch
      %69 = sbr.rel (0) target = $region17
    $region16: #{tpu_custom_call.1} parent=1 // pred_region
      %s71 = ssub.s32 1024, 1024
      %72 = vsyncadd [#allocation9], %s71
      %s73 = sshll.u32 [#allocation8], 4
      %s74 = int_to_ptr.vmem [resolvable:$true] %s73
      %79 = dma.hbm_to_vmem [thread:$0]  %s3, 1024, %s74, [#allocation9], 64, 64, 4
    $region17: #{tpu_custom_call.1} parent=1 // pred_fallthru
      _
    // Predicated region
    $region18: #{tpu_custom_call.1} parent=1 // pred_check
      _
    $region19: #{tpu_custom_call.1} parent=1 // pred_check_branch
      %81 = sbr.rel (0) target = $region21
    $region20: #{tpu_custom_call.1} parent=1 // pred_region
      _
    $region21: #{tpu_custom_call.1} parent=1 // pred_fallthru
      _
    // Predicated region
    $region22: #{tpu_custom_call.1} parent=1 // pred_check
      _
    $region23: #{tpu_custom_call.1} parent=1 // pred_check_branch
      %83 = sbr.rel (0) target = $region25
    $region24: #{tpu_custom_call.1} parent=1 // pred_region
      _
    $region25: #{tpu_custom_call.1} parent=1 // pred_fallthru
      _
    // Predicated region
    $region26: #{tpu_custom_call.1} parent=1 // pred_check
      _
    $region27: #{tpu_custom_call.1} parent=1 // pred_check_branch
      %85 = sbr.rel (0) target = $region29
    $region28: #{tpu_custom_call.1} parent=1 // pred_region
      _
    $region29: #{tpu_custom_call.1} parent=1 // pred_fallthru
      _
    // Predicated region
    $region30: #{tpu_custom_call.1} parent=1 // pred_check
      _
    $region31: #{tpu_custom_call.1} parent=1 // pred_check_branch
      %87 = sbr.rel (0) target = $region33
    $region32: #{tpu_custom_call.1} parent=1 // pred_region
      %s89 = ssub.s32 3072, 3072
      %90 = vsyncadd [#allocation9], %s89
      %s91 = sshll.u32 [#allocation10], 4
      %s92 = int_to_ptr.vmem [resolvable:$true] %s91
      %97 = dma.hbm_to_vmem [thread:$0]  %s7, 3072, %s92, [#allocation9], 192, 192, 12
    $region33: #{tpu_custom_call.1} parent=1 // pred_fallthru
      _
    // Predicated region
    $region34: #{tpu_custom_call.1} parent=1 // pred_check
      _
    $region35: #{tpu_custom_call.1} parent=1 // pred_check_branch
      %99 = sbr.rel (0) target = $region37
    $region36: #{tpu_custom_call.1} parent=1 // pred_region
      %s101 = ssub.s32 768, 768
      %102 = vsyncadd [#allocation12], %s101
      %s103 = sshll.u32 [#allocation11], 4
      %s104 = int_to_ptr.vmem [resolvable:$true] %s103
      %109 = dma.hbm_to_vmem [thread:$0]  %s8, 768, %s104, [#allocation12], 64, 64, 4
    $region37: #{tpu_custom_call.1} parent=1 // pred_fallthru
      _
    // Predicated region
    $region38: #{tpu_custom_call.1} parent=1 // pred_check
      _
    $region39: #{tpu_custom_call.1} parent=1 // pred_check_branch
      %111 = sbr.rel (0) target = $region41
    $region40: #{tpu_custom_call.1} parent=1 // pred_region
      _
    $region41: #{tpu_custom_call.1} parent=1 // pred_fallthru
      _
    // Predicated region
    $region42: #{tpu_custom_call.1} parent=1 // pred_check
      _
    $region43: #{tpu_custom_call.1} parent=1 // pred_check_branch
      %113 = sbr.rel (0) target = $region45
    $region44: #{tpu_custom_call.1} parent=1 // pred_region
      _
    $region45: #{tpu_custom_call.1} parent=1 // pred_fallthru
      _
    // Predicated region
    $region46: #{tpu_custom_call.1} parent=1 // pred_check
      _
    $region47: #{tpu_custom_call.1} parent=1 // pred_check_branch
      %115 = sbr.rel (0) target = $region49
    $region48: #{tpu_custom_call.1} parent=1 // pred_region
      _
    $region49: #{tpu_custom_call.1} parent=1 // pred_fallthru
      _
    // Predicated region
    $region50: #{tpu_custom_call.1} parent=1 // pred_check
      _
    $region51: #{tpu_custom_call.1} parent=1 // pred_check_branch
      %117 = sbr.rel (0) target = $region53
    $region52: #{tpu_custom_call.1} parent=1 // pred_region
      %s119 = ssub.s32 3072, 3072
      %120 = vsyncadd [#allocation12], %s119
      %s121 = sshll.u32 [#allocation13], 4
      %s122 = int_to_ptr.vmem [resolvable:$true] %s121
      %127 = dma.hbm_to_vmem [thread:$0]  %s12, 3072, %s122, [#allocation12], 192, 192, 12
    $region53: #{tpu_custom_call.1} parent=1 // pred_fallthru
      _
    // Predicated region
    $region54: #{tpu_custom_call.1} parent=1 // pred_check
      _
    $region55: #{tpu_custom_call.1} parent=1 // pred_check_branch
      %129 = sbr.rel (0) target = $region57
    $region56: #{tpu_custom_call.1} parent=1 // pred_region
      _
    $region57: #{tpu_custom_call.1} parent=1 // pred_fallthru
      _
    // Predicated region
    $region58: #{tpu_custom_call.1} parent=1 // pred_check
      _
    $region59: #{tpu_custom_call.1} parent=1 // pred_check_branch
      %131 = sbr.rel (0) target = $region61
    $region60: #{tpu_custom_call.1} parent=1 // pred_region
      %s133 = ssub.s32 3072, 3072
      %134 = vsyncadd [#allocation15], %s133
      %s135 = sshll.u32 [#allocation14], 4
      %s136 = int_to_ptr.vmem [resolvable:$true] %s135
      %141 = dma.hbm_to_vmem [thread:$0]  %s14, 3072, %s136, [#allocation15], 64, 64, 4
    $region61: #{tpu_custom_call.1} parent=1 // pred_fallthru
      _
    // Predicated region
    $region62: #{tpu_custom_call.1} parent=1 // pred_check
      _
    $region63: #{tpu_custom_call.1} parent=1 // pred_check_branch
      %143 = sbr.rel (0) target = $region65
    $region64: #{tpu_custom_call.1} parent=1 // pred_region
      _
    $region65: #{tpu_custom_call.1} parent=1 // pred_fallthru
      _
    // Predicated region
    $region66: #{tpu_custom_call.1} parent=1 // pred_check
      _
    $region67: #{tpu_custom_call.1} parent=1 // pred_check_branch
      %145 = sbr.rel (0) target = $region69
    $region68: #{tpu_custom_call.1} parent=1 // pred_region
      _
    $region69: #{tpu_custom_call.1} parent=1 // pred_fallthru
      _
    // Predicated region
    $region70: #{tpu_custom_call.1} parent=1 // pred_check
      _
    $region71: #{tpu_custom_call.1} parent=1 // pred_check_branch
      %147 = sbr.rel (0) target = $region73
    $region72: #{tpu_custom_call.1} parent=1 // pred_region
      _
    $region73: #{tpu_custom_call.1} parent=1 // pred_fallthru
      _
    // Predicated region
    $region74: #{tpu_custom_call.1} parent=1 // pred_check
      _
    $region75: #{tpu_custom_call.1} parent=1 // pred_check_branch
      %149 = sbr.rel (0) target = $region77
    $region76: #{tpu_custom_call.1} parent=1 // pred_region
      %s151 = ssub.s32 3072, 3072
      %152 = vsyncadd [#allocation15], %s151
      %s153 = sshll.u32 [#allocation16], 4
      %s154 = int_to_ptr.vmem [resolvable:$true] %s153
      %159 = dma.hbm_to_vmem [thread:$0]  %s18, 3072, %s154, [#allocation15], 192, 192, 12
    $region77: #{tpu_custom_call.1} parent=1 // pred_fallthru
      _
    // Predicated region
    $region78: #{tpu_custom_call.1} parent=1 // pred_check
      _
    $region79: #{tpu_custom_call.1} parent=1 // pred_check_branch
      %161 = sbr.rel (0) target = $region81
    $region80: #{tpu_custom_call.1} parent=1 // pred_region
      _
    $region81: #{tpu_custom_call.1} parent=1 // pred_fallthru
      _
    // Predicated region
    $region82: #{tpu_custom_call.1} parent=1 // pred_check
      _
    $region83: #{tpu_custom_call.1} parent=1 // pred_check_branch
      %163 = sbr.rel (0) target = $region85
    $region84: #{tpu_custom_call.1} parent=1 // pred_region
      %s165 = ssub.s32 3072, 3072
      %166 = vsyncadd [#allocation18], %s165
      %s167 = sshll.u32 [#allocation17], 4
      %s168 = int_to_ptr.vmem [resolvable:$true] %s167
      %173 = dma.hbm_to_vmem [thread:$0]  %s20, 3072, %s168, [#allocation18], 64, 64, 4
    $region85: #{tpu_custom_call.1} parent=1 // pred_fallthru
      _
    // Predicated region
    $region86: #{tpu_custom_call.1} parent=1 // pred_check
      _
    $region87: #{tpu_custom_call.1} parent=1 // pred_check_branch
      %175 = sbr.rel (0) target = $region89
    $region88: #{tpu_custom_call.1} parent=1 // pred_region
      _
    $region89: #{tpu_custom_call.1} parent=1 // pred_fallthru
      _
    // Predicated region
    $region90: #{tpu_custom_call.1} parent=1 // pred_check
      _
    $region91: #{tpu_custom_call.1} parent=1 // pred_check_branch
      %177 = sbr.rel (0) target = $region93
    $region92: #{tpu_custom_call.1} parent=1 // pred_region
      %178 = dma.done [#allocation3], 128
    $region93: #{tpu_custom_call.1} parent=1 // pred_fallthru
      _
    // Predicated region
    $region94: #{tpu_custom_call.1} parent=1 // pred_check
      _
    $region95: #{tpu_custom_call.1} parent=1 // pred_check_branch
      %180 = sbr.rel (0) target = $region97
    $region96: #{tpu_custom_call.1} parent=1 // pred_region
      %181 = dma.done [#allocation6], 32
    $region97: #{tpu_custom_call.1} parent=1 // pred_fallthru
      _
    // Predicated region
    $region98: #{tpu_custom_call.1} parent=1 // pred_check
      _
    $region99: #{tpu_custom_call.1} parent=1 // pred_check_branch
      %183 = sbr.rel (0) target = $region101
    $region100: #{tpu_custom_call.1} parent=1 // pred_region
      %184 = dma.done [#allocation6], 128
    $region101: #{tpu_custom_call.1} parent=1 // pred_fallthru
      _
    // Predicated region
    $region102: #{tpu_custom_call.1} parent=1 // pred_check
      _
    $region103: #{tpu_custom_call.1} parent=1 // pred_check_branch
      %186 = sbr.rel (0) target = $region105
    $region104: #{tpu_custom_call.1} parent=1 // pred_region
      %187 = dma.done [#allocation9], 1024
    $region105: #{tpu_custom_call.1} parent=1 // pred_fallthru
      _
    // Predicated region
    $region106: #{tpu_custom_call.1} parent=1 // pred_check
      _
    $region107: #{tpu_custom_call.1} parent=1 // pred_check_branch
      %189 = sbr.rel (0) target = $region109
    $region108: #{tpu_custom_call.1} parent=1 // pred_region
      %190 = dma.done [#allocation9], 3072
    $region109: #{tpu_custom_call.1} parent=1 // pred_fallthru
      _
    // Predicated region
    $region110: #{tpu_custom_call.1} parent=1 // pred_check
      _
    $region111: #{tpu_custom_call.1} parent=1 // pred_check_branch
      %192 = sbr.rel (0) target = $region113
    $region112: #{tpu_custom_call.1} parent=1 // pred_region
      %193 = dma.done [#allocation12], 768
    $region113: #{tpu_custom_call.1} parent=1 // pred_fallthru
      _
    // Predicated region
    $region114: #{tpu_custom_call.1} parent=1 // pred_check
      _
    $region115: #{tpu_custom_call.1} parent=1 // pred_check_branch
      %195 = sbr.rel (0) target = $region117
    $region116: #{tpu_custom_call.1} parent=1 // pred_region
      %196 = dma.done [#allocation12], 3072
    $region117: #{tpu_custom_call.1} parent=1 // pred_fallthru
      _
    // Predicated region
    $region118: #{tpu_custom_call.1} parent=1 // pred_check
      _
    $region119: #{tpu_custom_call.1} parent=1 // pred_check_branch
      %198 = sbr.rel (0) target = $region121
    $region120: #{tpu_custom_call.1} parent=1 // pred_region
      %199 = dma.done [#allocation15], 3072
    $region121: #{tpu_custom_call.1} parent=1 // pred_fallthru
      _
    // Predicated region
    $region122: #{tpu_custom_call.1} parent=1 // pred_check
      _
    $region123: #{tpu_custom_call.1} parent=1 // pred_check_branch
      %201 = sbr.rel (0) target = $region125
    $region124: #{tpu_custom_call.1} parent=1 // pred_region
      %202 = dma.done [#allocation15], 3072
    $region125: #{tpu_custom_call.1} parent=1 // pred_fallthru
      _
    // Predicated region
    $region126: #{tpu_custom_call.1} parent=1 // pred_check
      _
    $region127: #{tpu_custom_call.1} parent=1 // pred_check_branch
      %204 = sbr.rel (0) target = $region129
    $region128: #{tpu_custom_call.1} parent=1 // pred_region
      %205 = dma.done [#allocation18], 3072
    $region129: #{tpu_custom_call.1} parent=1 // pred_fallthru
      _
    %v207 = vld [vmem:[#allocation2] sm:$0xf]
    %v208 = vld [vmem:[#allocation2 + $0x4] sm:$0xf]
    %v209 = vld [vmem:[#allocation8] sm:$0xf]
    %v210 = vld [vmem:[#allocation8 + $0x4] sm:$0xf]
    %v211 = vld [vmem:[#allocation8 + $0x8] sm:$0xf]
    %v212 = vld [vmem:[#allocation8 + $0xc] sm:$0xf]
    %v213 = vld [vmem:[#allocation8 + $0x10] sm:$0xf]
    %v214 = vld [vmem:[#allocation8 + $0x14] sm:$0xf]
    %v215 = vld [vmem:[#allocation8 + $0x18] sm:$0xf]
    %v216 = vld [vmem:[#allocation8 + $0x1c] sm:$0xf]
    %v217 = vld [vmem:[#allocation8 + $0x20] sm:$0xf]
    %v218 = vld [vmem:[#allocation8 + $0x24] sm:$0xf]
    %v219 = vld [vmem:[#allocation8 + $0x28] sm:$0xf]
    %v220 = vld [vmem:[#allocation8 + $0x2c] sm:$0xf]
    %v221 = vld [vmem:[#allocation8 + $0x30] sm:$0xf]
    %v222 = vld [vmem:[#allocation8 + $0x34] sm:$0xf]
    %v223 = vld [vmem:[#allocation8 + $0x38] sm:$0xf]
    %v224 = vld [vmem:[#allocation8 + $0x3c] sm:$0xf]
    %v225 = vld [vmem:[%s4] sm:$0x1]
    %v227 = vlaneseq
    %v228 = vshrl.u32 %v227, 7
    %v229 = vsub.s32 0, %v228
    %v230 = vrot.slane %v225, %v229
    %v234 = vunpack.c.l.b16 %v207
    %v235 = vunpack.c.l.b16 %v208
    %v236 = vpack.c.b16 %v235, %v234
    %v254 = vunpack.c.l.b16 %v209
    %v255 = vunpack.c.l.b16 %v210
    %v256 = vunpack.c.l.b16 %v211
    %v257 = vunpack.c.l.b16 %v212
    %v258 = vunpack.c.l.b16 %v213
    %v259 = vunpack.c.l.b16 %v214
    %v260 = vunpack.c.l.b16 %v215
    %v261 = vunpack.c.l.b16 %v216
    %v262 = vunpack.c.l.b16 %v217
    %v263 = vunpack.c.l.b16 %v218
    %v264 = vunpack.c.l.b16 %v219
    %v265 = vunpack.c.l.b16 %v220
    %v266 = vunpack.c.l.b16 %v221
    %v267 = vunpack.c.l.b16 %v222
    %v268 = vunpack.c.l.b16 %v223
    %v269 = vunpack.c.l.b16 %v224
    %v270 = vpack.c.b16 %v255, %v254
    %v271 = vpack.c.b16 %v257, %v256
    %v272 = vpack.c.b16 %v259, %v258
    %v273 = vpack.c.b16 %v261, %v260
    %v274 = vpack.c.b16 %v263, %v262
    %v275 = vpack.c.b16 %v265, %v264
    %v276 = vpack.c.b16 %v267, %v266
    %v277 = vpack.c.b16 %v269, %v268
    %286 = vmatprep.subr.bf16.mxu0 0
    %287 = vmatpush1.bf16.msra.mxu0 %v270
    %288 = vmatprep.subr.bf16.mxu0 0
    %289 = vmatpush1.bf16.msra.mxu0 %v271
    %290 = vmatprep.subr.bf16.mxu0 0
    %291 = vmatpush1.bf16.msra.mxu0 %v272
    %292 = vmatprep.subr.bf16.mxu0 0
    %293 = vmatpush1.bf16.msra.mxu0 %v273
    %294 = vmatprep.subr.bf16.mxu0 0
    %295 = vmatpush1.bf16.msra.mxu0 %v274
    %296 = vmatprep.subr.bf16.mxu0 0
    %297 = vmatpush1.bf16.msra.mxu0 %v275
    %298 = vmatprep.subr.bf16.mxu0 0
    %299 = vmatpush1.bf16.msra.mxu0 %v276
    %300 = vmatprep.subr.bf16.mxu0 0
    %301 = vmatpush1.bf16.msra.mxu0 %v277
    %302 = vmatprep.subr.bf16.mxu0 0
    %303 = vmatpush1.bf16.msra.mxu0 0
    %304 = vmatprep.subr.bf16.mxu0 0
    %305 = vmatpush1.bf16.msra.mxu0 0
    %306 = vmatprep.subr.bf16.mxu0 0
    %307 = vmatpush1.bf16.msra.mxu0 0
    %308 = vmatprep.subr.bf16.mxu0 0
    %309 = vmatpush1.bf16.msra.mxu0 0
    %310 = vmatprep.subr.bf16.mxu0 0
    %311 = vmatpush1.bf16.msra.mxu0 0
    %312 = vmatprep.subr.bf16.mxu0 0
    %313 = vmatpush1.bf16.msra.mxu0 0
    %314 = vmatprep.subr.bf16.mxu0 0
    %315 = vmatpush1.bf16.msra.mxu0 0
    %316 = vmatprep.subr.bf16.mxu0 0
    %317 = vmatpush1.bf16.msra.mxu0 0
    %318 = vmatprep.mubr.bf16.mxu0 0
    %319 = vmatmul.mubr.bf16.gmra.mrb[0].mxu0 %v236
    %v320 = vpop.f32.mrb[0].mxu0
    %v321 = vadd.f32 %v230, %v320
    %v322 = vpop.f32.mrb[0].mxu0
    %v323 = vpop.f32.mrb[0].mxu0
    %v324 = vadd.f32 %v230, %v323
    %v325 = vpop.f32.mrb[0].mxu0
    %326 = vdwg.mxu0
    %v327 = vld [vmem:[#allocation5] sm:$0x3]
    %v328 = vlaneseq
    %v329 = vshrl.u32 %v328, 7
    %v330 = vsub.s32 0, %v329
    %v331 = vrot.slane %v327, %v330
    %333 = vbcast.lane.b32.xlu0 %v331, 256
    %v334 = vpop.permute.xlu0 %333
    %v335 = vlaneseq
    %v336 = vshrl.u32 %v335, 7
    %v337 = vsub.s32 1, %v336
    %v338 = vrot.slane %v327, %v337
    %340 = vbcast.lane.b32.xlu0 %v338, 256
    %v341 = vpop.permute.xlu0 %340
    %v344 = vunpack.c.l.s4 1966171168
    %v345 = vunpack.c.0.s8 %v344
    %v346 = vlaneseq
    %v347 = vshrl.u32 %v346, 7
    %v348 = vsub.s32 %v345, %v347
    %v349 = vrot.slane %v327, %v348
    %v350 = vcombine.high %v349, %v349
    %v352 = vunpack.c.l.s4 1966171168
    %v353 = vunpack.c.0.s8 %v352
    %v354 = vlaneseq
    %v355 = vshrl.u32 %v354, 7
    %v356 = vsub.s32 %v353, %v355
    %v357 = vrot.slane %v349, %v356
    %v359 = vunpack.c.l.s4 1966171168
    %v360 = vunpack.c.0.s8 %v359
    %v361 = vlaneseq
    %v362 = vshrl.u32 %v361, 7
    %v363 = vsub.s32 %v360, %v362
    %v364 = vrot.slane %v350, %v363
    %v365 = vlaneseq
    %v366 = vshrl.u32 %v365, 7
    %v367 = vsub.s32 0, %v366
    %v368 = vrot.slane %v357, %v367
    %v369 = vlaneseq
    %v370 = vshrl.u32 %v369, 7
    %v371 = vsub.s32 0, %v370
    %v372 = vrot.slane %v364, %v371
    %v375 = vmul.f32 %v334, %v368
    %v376 = vmul.f32 %v341, %v372
    %v377 = vld [vmem:[#allocation7] sm:$0xf]
    %v378 = vld [vmem:[#allocation7 + $0x4] sm:$0xf]
    %v379 = vunpack.c.l.bf16 %v377
    %v380 = vunpack.c.l.bf16 %v378
    %v381 = vmul.f32 %v379, %v375
    %v382 = vmul.f32 %v380, %v376
    %v383 = vmul.f32 %v381, 0.5
    %v384 = vmul.f32 %v382, 0.5
    %v385 = vld [vmem:[%s5] sm:$0x1]
    %v386 = vld [vmem:[%s6] sm:$0x1]
    %387 = vadd.xlane.f32.xlu0 %v321
    %v388 = vpop.xlane.xlu0 %387
    %389 = vadd.xlane.f32.xlu0 %v324
    %v390 = vpop.xlane.xlu0 %389
    %v391 = vmul.f32 %v321, %v321
    %v392 = vmul.f32 %v324, %v324
    %393 = vadd.xlane.f32.xlu0 %v391
    %v394 = vpop.xlane.xlu0 %393
    %395 = vadd.xlane.f32.xlu0 %v392
    %v396 = vpop.xlane.xlu0 %395
    %v397 = vmul.f32 %v388, 0.012820513
    %v398 = vmul.f32 %v390, 0.012820513
    %v399 = vmul.f32 %v394, 0.012820513
    %v400 = vmul.f32 %v396, 0.012820513
    %v401 = vmul.f32 %v397, %v397
    %v402 = vmul.f32 %v398, %v398
    %v403 = vsub.f32 %v399, %v401
    %v404 = vsub.f32 %v400, %v402
    %v405 = vsub.f32 %v321, %v397
    %v406 = vsub.f32 %v324, %v398
    %v407 = vadd.f32 %v403, 1e-05
    %v408 = vadd.f32 %v404, 1e-05
    %v409 = vrsqrt.pop %v407
    %v410 = vrsqrt.pop %v408
    %v411 = vmul.f32 %v405, %v409
    %v412 = vmul.f32 %v406, %v410
    %v414 = vlaneseq
    %v415 = vshrl.u32 %v414, 7
    %v416 = vsub.s32 0, %v415
    %v417 = vrot.slane %v385, %v416
    %v419 = vmul.f32 %v411, %v417
    %v420 = vmul.f32 %v412, %v417
    %v422 = vlaneseq
    %v423 = vshrl.u32 %v422, 7
    %v424 = vsub.s32 0, %v423
    %v425 = vrot.slane %v386, %v424
    %v427 = vadd.f32 %v419, %v425
    %v428 = vadd.f32 %v420, %v425
    %v429 = vpack.c.bf16 %v428, %v427
    %v430 = vld [vmem:[#allocation10] sm:$0xff]
    %v431 = vld [vmem:[#allocation10 + $0x8] sm:$0xf]
    %v432 = vld [vmem:[#allocation10 + $0xc] sm:$0xff]
    %v433 = vld [vmem:[#allocation10 + $0x14] sm:$0xf]
    %v434 = vld [vmem:[#allocation10 + $0x18] sm:$0xff]
    %v435 = vld [vmem:[#allocation10 + $0x20] sm:$0xf]
    %v436 = vld [vmem:[#allocation10 + $0x24] sm:$0xff]
    %v437 = vld [vmem:[#allocation10 + $0x2c] sm:$0xf]
    %v438 = vld [vmem:[#allocation10 + $0x30] sm:$0xff]
    %v439 = vld [vmem:[#allocation10 + $0x38] sm:$0xf]
    %v440 = vld [vmem:[#allocation10 + $0x3c] sm:$0xff]
    %v441 = vld [vmem:[#allocation10 + $0x44] sm:$0xf]
    %v442 = vld [vmem:[#allocation10 + $0x48] sm:$0xff]
    %v443 = vld [vmem:[#allocation10 + $0x50] sm:$0xf]
    %v444 = vld [vmem:[#allocation10 + $0x54] sm:$0xff]
    %v445 = vld [vmem:[#allocation10 + $0x5c] sm:$0xf]
    %v446 = vld [vmem:[#allocation10 + $0x60] sm:$0xff]
    %v447 = vld [vmem:[#allocation10 + $0x68] sm:$0xf]
    %v448 = vld [vmem:[#allocation10 + $0x6c] sm:$0xff]
    %v449 = vld [vmem:[#allocation10 + $0x74] sm:$0xf]
    %v450 = vld [vmem:[#allocation10 + $0x78] sm:$0xff]
    %v451 = vld [vmem:[#allocation10 + $0x80] sm:$0xf]
    %v452 = vld [vmem:[#allocation10 + $0x84] sm:$0xff]
    %v453 = vld [vmem:[#allocation10 + $0x8c] sm:$0xf]
    %v454 = vld [vmem:[#allocation10 + $0x90] sm:$0xff]
    %v455 = vld [vmem:[#allocation10 + $0x98] sm:$0xf]
    %v456 = vld [vmem:[#allocation10 + $0x9c] sm:$0xff]
    %v457 = vld [vmem:[#allocation10 + $0xa4] sm:$0xf]
    %v458 = vld [vmem:[#allocation10 + $0xa8] sm:$0xff]
    %v459 = vld [vmem:[#allocation10 + $0xb0] sm:$0xf]
    %v460 = vld [vmem:[#allocation10 + $0xb4] sm:$0xff]
    %v461 = vld [vmem:[#allocation10 + $0xbc] sm:$0xf]
    %v494 = vunpack.c.l.b16 %v430
    %v495 = vunpack.c.h.b16 %v430
    %v496 = vunpack.c.l.b16 %v431
    %v497 = vunpack.c.l.b16 %v432
    %v498 = vunpack.c.h.b16 %v432
    %v499 = vunpack.c.l.b16 %v433
    %v500 = vunpack.c.l.b16 %v434
    %v501 = vunpack.c.h.b16 %v434
    %v502 = vunpack.c.l.b16 %v435
    %v503 = vunpack.c.l.b16 %v436
    %v504 = vunpack.c.h.b16 %v436
    %v505 = vunpack.c.l.b16 %v437
    %v506 = vunpack.c.l.b16 %v438
    %v507 = vunpack.c.h.b16 %v438
    %v508 = vunpack.c.l.b16 %v439
    %v509 = vunpack.c.l.b16 %v440
    %v510 = vunpack.c.h.b16 %v440
    %v511 = vunpack.c.l.b16 %v441
    %v512 = vunpack.c.l.b16 %v442
    %v513 = vunpack.c.h.b16 %v442
    %v514 = vunpack.c.l.b16 %v443
    %v515 = vunpack.c.l.b16 %v444
    %v516 = vunpack.c.h.b16 %v444
    %v517 = vunpack.c.l.b16 %v445
    %v518 = vunpack.c.l.b16 %v446
    %v519 = vunpack.c.h.b16 %v446
    %v520 = vunpack.c.l.b16 %v447
    %v521 = vunpack.c.l.b16 %v448
    %v522 = vunpack.c.h.b16 %v448
    %v523 = vunpack.c.l.b16 %v449
    %v524 = vunpack.c.l.b16 %v450
    %v525 = vunpack.c.h.b16 %v450
    %v526 = vunpack.c.l.b16 %v451
    %v527 = vunpack.c.l.b16 %v452
    %v528 = vunpack.c.h.b16 %v452
    %v529 = vunpack.c.l.b16 %v453
    %v530 = vunpack.c.l.b16 %v454
    %v531 = vunpack.c.h.b16 %v454
    %v532 = vunpack.c.l.b16 %v455
    %v533 = vunpack.c.l.b16 %v456
    %v534 = vunpack.c.h.b16 %v456
    %v535 = vunpack.c.l.b16 %v457
    %v536 = vunpack.c.l.b16 %v458
    %v537 = vunpack.c.h.b16 %v458
    %v538 = vunpack.c.l.b16 %v459
    %v539 = vunpack.c.l.b16 %v460
    %v540 = vunpack.c.h.b16 %v460
    %v541 = vunpack.c.l.b16 %v461
    %v542 = vpack.c.b16 %v497, %v494
    %v543 = vpack.c.b16 %v498, %v495
    %v544 = vpack.c.b16 %v499, %v496
    %v545 = vpack.c.b16 %v503, %v500
    %v546 = vpack.c.b16 %v504, %v501
    %v547 = vpack.c.b16 %v505, %v502
    %v548 = vpack.c.b16 %v509, %v506
    %v549 = vpack.c.b16 %v510, %v507
    %v550 = vpack.c.b16 %v511, %v508
    %v551 = vpack.c.b16 %v515, %v512
    %v552 = vpack.c.b16 %v516, %v513
    %v553 = vpack.c.b16 %v517, %v514
    %v554 = vpack.c.b16 %v521, %v518
    %v555 = vpack.c.b16 %v522, %v519
    %v556 = vpack.c.b16 %v523, %v520
    %v557 = vpack.c.b16 %v527, %v524
    %v558 = vpack.c.b16 %v528, %v525
    %v559 = vpack.c.b16 %v529, %v526
    %v560 = vpack.c.b16 %v533, %v530
    %v561 = vpack.c.b16 %v534, %v531
    %v562 = vpack.c.b16 %v535, %v532
    %v563 = vpack.c.b16 %v539, %v536
    %v564 = vpack.c.b16 %v540, %v537
    %v565 = vpack.c.b16 %v541, %v538
    %590 = vmatprep.subr.bf16.mxu0 %v543
    %591 = vmatpush1.bf16.msra.mxu0 %v542
    %592 = vmatprep.subr.bf16.mxu0 %v546
    %593 = vmatpush1.bf16.msra.mxu0 %v545
    %594 = vmatprep.subr.bf16.mxu0 %v549
    %595 = vmatpush1.bf16.msra.mxu0 %v548
    %596 = vmatprep.subr.bf16.mxu0 %v552
    %597 = vmatpush1.bf16.msra.mxu0 %v551
    %598 = vmatprep.subr.bf16.mxu0 %v555
    %599 = vmatpush1.bf16.msra.mxu0 %v554
    %600 = vmatprep.subr.bf16.mxu0 %v558
    %601 = vmatpush1.bf16.msra.mxu0 %v557
    %602 = vmatprep.subr.bf16.mxu0 %v561
    %603 = vmatpush1.bf16.msra.mxu0 %v560
    %604 = vmatprep.subr.bf16.mxu0 %v564
    %605 = vmatpush1.bf16.msra.mxu0 %v563
    %606 = vmatprep.subr.bf16.mxu0 0
    %607 = vmatpush1.bf16.msra.mxu0 0
    %608 = vmatprep.subr.bf16.mxu0 0
    %609 = vmatpush1.bf16.msra.mxu0 0
    %610 = vmatprep.subr.bf16.mxu0 0
    %611 = vmatpush1.bf16.msra.mxu0 0
    %612 = vmatprep.subr.bf16.mxu0 0
    %613 = vmatpush1.bf16.msra.mxu0 0
    %614 = vmatprep.subr.bf16.mxu0 0
    %615 = vmatpush1.bf16.msra.mxu0 0
    %616 = vmatprep.subr.bf16.mxu0 0
    %617 = vmatpush1.bf16.msra.mxu0 0
    %618 = vmatprep.subr.bf16.mxu0 0
    %619 = vmatpush1.bf16.msra.mxu0 0
    %620 = vmatprep.subr.bf16.mxu0 0
    %621 = vmatpush1.bf16.msra.mxu0 0
    %622 = vmatprep.mubr.bf16.mxu0 0
    %623 = vmatmul.mubr.bf16.gmra.mrb[0].mxu0 %v429
    %v624 = vpop.f32.mrb[0].mxu0
    %v625 = vadd.f32 0.0, %v624
    %v626 = vpop.f32.mrb[0].mxu0
    %v627 = vadd.f32 0.0, %v626
    %v628 = vpop.f32.mrb[0].mxu0
    %v629 = vadd.f32 0.0, %v628
    %v630 = vpop.f32.mrb[0].mxu0
    %v631 = vadd.f32 0.0, %v630
    %632 = vdwg.mxu0
    %633 = vmatprep.subr.bf16.mxu0 0
    %634 = vmatpush1.bf16.msra.mxu0 %v544
    %635 = vmatprep.subr.bf16.mxu0 0
    %636 = vmatpush1.bf16.msra.mxu0 %v547
    %637 = vmatprep.subr.bf16.mxu0 0
    %638 = vmatpush1.bf16.msra.mxu0 %v550
    %639 = vmatprep.subr.bf16.mxu0 0
    %640 = vmatpush1.bf16.msra.mxu0 %v553
    %641 = vmatprep.subr.bf16.mxu0 0
    %642 = vmatpush1.bf16.msra.mxu0 %v556
    %643 = vmatprep.subr.bf16.mxu0 0
    %644 = vmatpush1.bf16.msra.mxu0 %v559
    %645 = vmatprep.subr.bf16.mxu0 0
    %646 = vmatpush1.bf16.msra.mxu0 %v562
    %647 = vmatprep.subr.bf16.mxu0 0
    %648 = vmatpush1.bf16.msra.mxu0 %v565
    %649 = vmatprep.subr.bf16.mxu0 0
    %650 = vmatpush1.bf16.msra.mxu0 0
    %651 = vmatprep.subr.bf16.mxu0 0
    %652 = vmatpush1.bf16.msra.mxu0 0
    %653 = vmatprep.subr.bf16.mxu0 0
    %654 = vmatpush1.bf16.msra.mxu0 0
    %655 = vmatprep.subr.bf16.mxu0 0
    %656 = vmatpush1.bf16.msra.mxu0 0
    %657 = vmatprep.subr.bf16.mxu0 0
    %658 = vmatpush1.bf16.msra.mxu0 0
    %659 = vmatprep.subr.bf16.mxu0 0
    %660 = vmatpush1.bf16.msra.mxu0 0
    %661 = vmatprep.subr.bf16.mxu0 0
    %662 = vmatpush1.bf16.msra.mxu0 0
    %663 = vmatprep.subr.bf16.mxu0 0
    %664 = vmatpush1.bf16.msra.mxu0 0
    %665 = vmatprep.mubr.bf16.mxu0 0
    %666 = vmatmul.mubr.bf16.gmra.mrb[0].mxu0 %v429
    %v667 = vpop.f32.mrb[0].mxu0
    %v668 = vadd.f32 0.0, %v667
    %v669 = vpop.f32.mrb[0].mxu0
    %v670 = vpop.f32.mrb[0].mxu0
    %v671 = vadd.f32 0.0, %v670
    %v672 = vpop.f32.mrb[0].mxu0
    %673 = vdwg.mxu0
    %v674 = vpack.c.bf16 %v625, %v625
    %v675 = vpack.c.bf16 %v629, %v629
    %v676 = vpack.c.bf16 %v627, %v627
    %v677 = vpack.c.bf16 %v631, %v631
    %v678 = vpack.c.bf16 %v668, %v668
    %v679 = vpack.c.bf16 %v671, %v671
    %vm680 = vcmask 130048
    %v682 = vsel %vm680, %v674, 0
    %v685 = vsel %vm680, %v676, 0
    %687 = vmatprep.subr.bf16.mxu0 0
    %688 = vmatpush1.bf16.xpose.msra.mxu0 %v685
    %689 = vmatprep.subr.bf16.mxu0 0
    %690 = vmatpush1.bf16.xpose.msra.mxu0 0
    %691 = vmatprep.subr.bf16.mxu0 0
    %692 = vmatpush1.bf16.xpose.msra.mxu0 0
    %693 = vmatprep.subr.bf16.mxu0 0
    %694 = vmatpush1.bf16.xpose.msra.mxu0 0
    %695 = vmatprep.subr.bf16.mxu0 0
    %696 = vmatpush1.bf16.xpose.msra.mxu0 0
    %697 = vmatprep.subr.bf16.mxu0 0
    %698 = vmatpush1.bf16.xpose.msra.mxu0 0
    %699 = vmatprep.subr.bf16.mxu0 0
    %700 = vmatpush1.bf16.xpose.msra.mxu0 0
    %701 = vmatprep.subr.bf16.mxu0 0
    %702 = vmatpush1.bf16.xpose.msra.mxu0 0
    %703 = vmatprep.subr.bf16.mxu0 0
    %704 = vmatpush1.bf16.xpose.msra.mxu0 0
    %705 = vmatprep.subr.bf16.mxu0 0
    %706 = vmatpush1.bf16.xpose.msra.mxu0 0
    %707 = vmatprep.subr.bf16.mxu0 0
    %708 = vmatpush1.bf16.xpose.msra.mxu0 0
    %709 = vmatprep.subr.bf16.mxu0 0
    %710 = vmatpush1.bf16.xpose.msra.mxu0 0
    %711 = vmatprep.subr.bf16.mxu0 0
    %712 = vmatpush1.bf16.xpose.msra.mxu0 0
    %713 = vmatprep.subr.bf16.mxu0 0
    %714 = vmatpush1.bf16.xpose.msra.mxu0 0
    %715 = vmatprep.subr.bf16.mxu0 0
    %716 = vmatpush1.bf16.xpose.msra.mxu0 0
    %717 = vmatprep.subr.bf16.mxu0 0
    %718 = vmatpush1.bf16.xpose.msra.mxu0 0
    %719 = vmatprep.mubr.bf16.mxu0 0
    %720 = vmatmul.mubr.bf16.gmra.mrb[0].mxu0 %v682
    %v721 = vpop.f32.mrb[0].mxu0
    %v722 = vadd.f32 0.0, %v721
    %v723 = vpop.f32.mrb[0].mxu0
    %v724 = vpop.f32.mrb[0].mxu0
    %v725 = vpop.f32.mrb[0].mxu0
    %726 = vdwg.mxu0
    %v728 = vsel %vm680, %v675, 0
    %v731 = vsel %vm680, %v677, 0
    %733 = vmatprep.subr.bf16.mxu0 0
    %734 = vmatpush1.bf16.xpose.msra.mxu0 %v731
    %735 = vmatprep.subr.bf16.mxu0 0
    %736 = vmatpush1.bf16.xpose.msra.mxu0 0
    %737 = vmatprep.subr.bf16.mxu0 0
    %738 = vmatpush1.bf16.xpose.msra.mxu0 0
    %739 = vmatprep.subr.bf16.mxu0 0
    %740 = vmatpush1.bf16.xpose.msra.mxu0 0
    %741 = vmatprep.subr.bf16.mxu0 0
    %742 = vmatpush1.bf16.xpose.msra.mxu0 0
    %743 = vmatprep.subr.bf16.mxu0 0
    %744 = vmatpush1.bf16.xpose.msra.mxu0 0
    %745 = vmatprep.subr.bf16.mxu0 0
    %746 = vmatpush1.bf16.xpose.msra.mxu0 0
    %747 = vmatprep.subr.bf16.mxu0 0
    %748 = vmatpush1.bf16.xpose.msra.mxu0 0
    %749 = vmatprep.subr.bf16.mxu0 0
    %750 = vmatpush1.bf16.xpose.msra.mxu0 0
    %751 = vmatprep.subr.bf16.mxu0 0
    %752 = vmatpush1.bf16.xpose.msra.mxu0 0
    %753 = vmatprep.subr.bf16.mxu0 0
    %754 = vmatpush1.bf16.xpose.msra.mxu0 0
    %755 = vmatprep.subr.bf16.mxu0 0
    %756 = vmatpush1.bf16.xpose.msra.mxu0 0
    %757 = vmatprep.subr.bf16.mxu0 0
    %758 = vmatpush1.bf16.xpose.msra.mxu0 0
    %759 = vmatprep.subr.bf16.mxu0 0
    %760 = vmatpush1.bf16.xpose.msra.mxu0 0
    %761 = vmatprep.subr.bf16.mxu0 0
    %762 = vmatpush1.bf16.xpose.msra.mxu0 0
    %763 = vmatprep.subr.bf16.mxu0 0
    %764 = vmatpush1.bf16.xpose.msra.mxu0 0
    %765 = vmatprep.mubr.bf16.mxu0 0
    %766 = vmatmul.mubr.bf16.gmra.mrb[0].mxu0 %v728
    %v767 = vpop.f32.mrb[0].mxu0
    %v768 = vadd.f32 0.0, %v767
    %v769 = vpop.f32.mrb[0].mxu0
    %v770 = vpop.f32.mrb[0].mxu0
    %v771 = vpop.f32.mrb[0].mxu0
    %772 = vdwg.mxu0
    %vm773 = vcmp.gt.f32.partialorder %v375, 0.0
    %vm774 = vcmp.gt.f32.partialorder %v376, 0.0
    %v775 = vsel %vm773, %v722, -1e+30
    %v776 = vsel %vm774, %v768, -1e+30
    %vm777 = vcmask 64512
    %v778 = vsel %vm777, %v775, -inf
    %779 = vmax.xlane.f32.xlu0 %v778
    %v780 = vpop.xlane.xlu0 %779
    %v781 = vsel %vm777, %v776, -inf
    %782 = vmax.xlane.f32.xlu0 %v781
    %v783 = vpop.xlane.xlu0 %782
    %v784 = vsub.f32 %v775, %v780
    %v785 = vsub.f32 %v776, %v783
    %v786 = vmul.f32 %v784, 1.442695
    %v787 = vpow.pop %v786
    %v788 = vmul.f32 %v785, 1.442695
    %v789 = vpow.pop %v788
    %v790 = vsel %vm777, %v787, 0.0
    %791 = vadd.xlane.f32.xlu0 %v790
    %v792 = vpop.xlane.xlu0 %791
    %v793 = vsel %vm777, %v789, 0.0
    %794 = vadd.xlane.f32.xlu0 %v793
    %v795 = vpop.xlane.xlu0 %794
    %v796 = vrcp.pop %v792
    %v797 = vrcp.pop %v795
    %v798 = vmul.f32 %v787, %v796
    %v799 = vmul.f32 %v789, %v797
    %v800 = vadd.f32 %v798, %v383
    %v801 = vadd.f32 %v799, %v384
    %v802 = vpack.c.bf16 %v800, %v800
    %v803 = vpack.c.bf16 %v801, %v801
    %v805 = vsel %vm777, %v802, 0
    %vm807 = vcmask 1043456
    %v809 = vsel %vm807, %v678, 0
    %811 = vmatprep.subr.bf16.mxu0 0
    %812 = vmatpush1.bf16.msra.mxu0 %v809
    %813 = vmatprep.subr.bf16.mxu0 0
    %814 = vmatpush1.bf16.msra.mxu0 0
    %815 = vmatprep.subr.bf16.mxu0 0
    %816 = vmatpush1.bf16.msra.mxu0 0
    %817 = vmatprep.subr.bf16.mxu0 0
    %818 = vmatpush1.bf16.msra.mxu0 0
    %819 = vmatprep.subr.bf16.mxu0 0
    %820 = vmatpush1.bf16.msra.mxu0 0
    %821 = vmatprep.subr.bf16.mxu0 0
    %822 = vmatpush1.bf16.msra.mxu0 0
    %823 = vmatprep.subr.bf16.mxu0 0
    %824 = vmatpush1.bf16.msra.mxu0 0
    %825 = vmatprep.subr.bf16.mxu0 0
    %826 = vmatpush1.bf16.msra.mxu0 0
    %827 = vmatprep.subr.bf16.mxu0 0
    %828 = vmatpush1.bf16.msra.mxu0 0
    %829 = vmatprep.subr.bf16.mxu0 0
    %830 = vmatpush1.bf16.msra.mxu0 0
    %831 = vmatprep.subr.bf16.mxu0 0
    %832 = vmatpush1.bf16.msra.mxu0 0
    %833 = vmatprep.subr.bf16.mxu0 0
    %834 = vmatpush1.bf16.msra.mxu0 0
    %835 = vmatprep.subr.bf16.mxu0 0
    %836 = vmatpush1.bf16.msra.mxu0 0
    %837 = vmatprep.subr.bf16.mxu0 0
    %838 = vmatpush1.bf16.msra.mxu0 0
    %839 = vmatprep.subr.bf16.mxu0 0
    %840 = vmatpush1.bf16.msra.mxu0 0
    %841 = vmatprep.subr.bf16.mxu0 0
    %842 = vmatpush1.bf16.msra.mxu0 0
    %843 = vmatprep.mubr.bf16.mxu0 0
    %844 = vmatmul.mubr.bf16.gmra.mrb[0].mxu0 %v805
    %v845 = vpop.f32.mrb[0].mxu0
    %v846 = vadd.f32 0.0, %v845
    %v847 = vpop.f32.mrb[0].mxu0
    %v848 = vpop.f32.mrb[0].mxu0
    %v849 = vpop.f32.mrb[0].mxu0
    %850 = vdwg.mxu0
    %v852 = vsel %vm777, %v803, 0
    %v855 = vsel %vm807, %v679, 0
    %857 = vmatprep.subr.bf16.mxu0 0
    %858 = vmatpush1.bf16.msra.mxu0 %v855
    %859 = vmatprep.subr.bf16.mxu0 0
    %860 = vmatpush1.bf16.msra.mxu0 0
    %861 = vmatprep.subr.bf16.mxu0 0
    %862 = vmatpush1.bf16.msra.mxu0 0
    %863 = vmatprep.subr.bf16.mxu0 0
    %864 = vmatpush1.bf16.msra.mxu0 0
    %865 = vmatprep.subr.bf16.mxu0 0
    %866 = vmatpush1.bf16.msra.mxu0 0
    %867 = vmatprep.subr.bf16.mxu0 0
    %868 = vmatpush1.bf16.msra.mxu0 0
    %869 = vmatprep.subr.bf16.mxu0 0
    %870 = vmatpush1.bf16.msra.mxu0 0
    %871 = vmatprep.subr.bf16.mxu0 0
    %872 = vmatpush1.bf16.msra.mxu0 0
    %873 = vmatprep.subr.bf16.mxu0 0
    %874 = vmatpush1.bf16.msra.mxu0 0
    %875 = vmatprep.subr.bf16.mxu0 0
    %876 = vmatpush1.bf16.msra.mxu0 0
    %877 = vmatprep.subr.bf16.mxu0 0
    %878 = vmatpush1.bf16.msra.mxu0 0
    %879 = vmatprep.subr.bf16.mxu0 0
    %880 = vmatpush1.bf16.msra.mxu0 0
    %881 = vmatprep.subr.bf16.mxu0 0
    %882 = vmatpush1.bf16.msra.mxu0 0
    %883 = vmatprep.subr.bf16.mxu0 0
    %884 = vmatpush1.bf16.msra.mxu0 0
    %885 = vmatprep.subr.bf16.mxu0 0
    %886 = vmatpush1.bf16.msra.mxu0 0
    %887 = vmatprep.subr.bf16.mxu0 0
    %888 = vmatpush1.bf16.msra.mxu0 0
    %889 = vmatprep.mubr.bf16.mxu0 0
    %890 = vmatmul.mubr.bf16.gmra.mrb[0].mxu0 %v852
    %v891 = vpop.f32.mrb[0].mxu0
    %v892 = vadd.f32 0.0, %v891
    %v893 = vpop.f32.mrb[0].mxu0
    %v894 = vpop.f32.mrb[0].mxu0
    %v895 = vpop.f32.mrb[0].mxu0
    %896 = vdwg.mxu0
    %898 = vrot.lane.b32.xlu0 %v674, 112
    %v899 = vpop.permute.xlu0 %898
    %901 = vrot.lane.b32.xlu0 %v676, 112
    %v902 = vpop.permute.xlu0 %901
    %v904 = vsel %vm680, %v899, 0
    %v907 = vsel %vm680, %v902, 0
    %909 = vmatprep.subr.bf16.mxu0 0
    %910 = vmatpush1.bf16.xpose.msra.mxu0 %v907
    %911 = vmatprep.subr.bf16.mxu0 0
    %912 = vmatpush1.bf16.xpose.msra.mxu0 0
    %913 = vmatprep.subr.bf16.mxu0 0
    %914 = vmatpush1.bf16.xpose.msra.mxu0 0
    %915 = vmatprep.subr.bf16.mxu0 0
    %916 = vmatpush1.bf16.xpose.msra.mxu0 0
    %917 = vmatprep.subr.bf16.mxu0 0
    %918 = vmatpush1.bf16.xpose.msra.mxu0 0
    %919 = vmatprep.subr.bf16.mxu0 0
    %920 = vmatpush1.bf16.xpose.msra.mxu0 0
    %921 = vmatprep.subr.bf16.mxu0 0
    %922 = vmatpush1.bf16.xpose.msra.mxu0 0
    %923 = vmatprep.subr.bf16.mxu0 0
    %924 = vmatpush1.bf16.xpose.msra.mxu0 0
    %925 = vmatprep.subr.bf16.mxu0 0
    %926 = vmatpush1.bf16.xpose.msra.mxu0 0
    %927 = vmatprep.subr.bf16.mxu0 0
    %928 = vmatpush1.bf16.xpose.msra.mxu0 0
    %929 = vmatprep.subr.bf16.mxu0 0
    %930 = vmatpush1.bf16.xpose.msra.mxu0 0
    %931 = vmatprep.subr.bf16.mxu0 0
    %932 = vmatpush1.bf16.xpose.msra.mxu0 0
    %933 = vmatprep.subr.bf16.mxu0 0
    %934 = vmatpush1.bf16.xpose.msra.mxu0 0
    %935 = vmatprep.subr.bf16.mxu0 0
    %936 = vmatpush1.bf16.xpose.msra.mxu0 0
    %937 = vmatprep.subr.bf16.mxu0 0
    %938 = vmatpush1.bf16.xpose.msra.mxu0 0
    %939 = vmatprep.subr.bf16.mxu0 0
    %940 = vmatpush1.bf16.xpose.msra.mxu0 0
    %941 = vmatprep.mubr.bf16.mxu0 0
    %942 = vmatmul.mubr.bf16.gmra.mrb[0].mxu0 %v904
    %v943 = vpop.f32.mrb[0].mxu0
    %v944 = vadd.f32 0.0, %v943
    %v945 = vpop.f32.mrb[0].mxu0
    %v946 = vpop.f32.mrb[0].mxu0
    %v947 = vpop.f32.mrb[0].mxu0
    %948 = vdwg.mxu0
    %950 = vrot.lane.b32.xlu0 %v675, 112
    %v951 = vpop.permute.xlu0 %950
    %953 = vrot.lane.b32.xlu0 %v677, 112
    %v954 = vpop.permute.xlu0 %953
    %v956 = vsel %vm680, %v951, 0
    %v959 = vsel %vm680, %v954, 0
    %961 = vmatprep.subr.bf16.mxu0 0
    %962 = vmatpush1.bf16.xpose.msra.mxu0 %v959
    %963 = vmatprep.subr.bf16.mxu0 0
    %964 = vmatpush1.bf16.xpose.msra.mxu0 0
    %965 = vmatprep.subr.bf16.mxu0 0
    %966 = vmatpush1.bf16.xpose.msra.mxu0 0
    %967 = vmatprep.subr.bf16.mxu0 0
    %968 = vmatpush1.bf16.xpose.msra.mxu0 0
    %969 = vmatprep.subr.bf16.mxu0 0
    %970 = vmatpush1.bf16.xpose.msra.mxu0 0
    %971 = vmatprep.subr.bf16.mxu0 0
    %972 = vmatpush1.bf16.xpose.msra.mxu0 0
    %973 = vmatprep.subr.bf16.mxu0 0
    %974 = vmatpush1.bf16.xpose.msra.mxu0 0
    %975 = vmatprep.subr.bf16.mxu0 0
    %976 = vmatpush1.bf16.xpose.msra.mxu0 0
    %977 = vmatprep.subr.bf16.mxu0 0
    %978 = vmatpush1.bf16.xpose.msra.mxu0 0
    %979 = vmatprep.subr.bf16.mxu0 0
    %980 = vmatpush1.bf16.xpose.msra.mxu0 0
    %981 = vmatprep.subr.bf16.mxu0 0
    %982 = vmatpush1.bf16.xpose.msra.mxu0 0
    %983 = vmatprep.subr.bf16.mxu0 0
    %984 = vmatpush1.bf16.xpose.msra.mxu0 0
    %985 = vmatprep.subr.bf16.mxu0 0
    %986 = vmatpush1.bf16.xpose.msra.mxu0 0
    %987 = vmatprep.subr.bf16.mxu0 0
    %988 = vmatpush1.bf16.xpose.msra.mxu0 0
    %989 = vmatprep.subr.bf16.mxu0 0
    %990 = vmatpush1.bf16.xpose.msra.mxu0 0
    %991 = vmatprep.subr.bf16.mxu0 0
    %992 = vmatpush1.bf16.xpose.msra.mxu0 0
    %993 = vmatprep.mubr.bf16.mxu0 0
    %994 = vmatmul.mubr.bf16.gmra.mrb[0].mxu0 %v956
    %v995 = vpop.f32.mrb[0].mxu0
    %v996 = vadd.f32 0.0, %v995
    %v997 = vpop.f32.mrb[0].mxu0
    %v998 = vpop.f32.mrb[0].mxu0
    %v999 = vpop.f32.mrb[0].mxu0
    %1000 = vdwg.mxu0
    %v1001 = vsel %vm773, %v944, -1e+30
    %v1002 = vsel %vm774, %v996, -1e+30
    %v1003 = vsel %vm777, %v1001, -inf
    %1004 = vmax.xlane.f32.xlu0 %v1003
    %v1005 = vpop.xlane.xlu0 %1004
    %v1006 = vsel %vm777, %v1002, -inf
    %1007 = vmax.xlane.f32.xlu0 %v1006
    %v1008 = vpop.xlane.xlu0 %1007
    %v1009 = vsub.f32 %v1001, %v1005
    %v1010 = vsub.f32 %v1002, %v1008
    %v1011 = vmul.f32 %v1009, 1.442695
    %v1012 = vpow.pop %v1011
    %v1013 = vmul.f32 %v1010, 1.442695
    %v1014 = vpow.pop %v1013
    %v1015 = vsel %vm777, %v1012, 0.0
    %1016 = vadd.xlane.f32.xlu0 %v1015
    %v1017 = vpop.xlane.xlu0 %1016
    %v1018 = vsel %vm777, %v1014, 0.0
    %1019 = vadd.xlane.f32.xlu0 %v1018
    %v1020 = vpop.xlane.xlu0 %1019
    %v1021 = vrcp.pop %v1017
    %v1022 = vrcp.pop %v1020
    %v1023 = vmul.f32 %v1012, %v1021
    %v1024 = vmul.f32 %v1014, %v1022
    %v1025 = vadd.f32 %v1023, %v383
    %v1026 = vadd.f32 %v1024, %v384
    %v1027 = vpack.c.bf16 %v1025, %v1025
    %v1028 = vpack.c.bf16 %v1026, %v1026
    %1030 = vrot.lane.b32.xlu0 %v678, 112
    %v1031 = vpop.permute.xlu0 %1030
    %v1033 = vsel %vm777, %v1027, 0
    %v1036 = vsel %vm807, %v1031, 0
    %1038 = vmatprep.subr.bf16.mxu0 0
    %1039 = vmatpush1.bf16.msra.mxu0 %v1036
    %1040 = vmatprep.subr.bf16.mxu0 0
    %1041 = vmatpush1.bf16.msra.mxu0 0
    %1042 = vmatprep.subr.bf16.mxu0 0
    %1043 = vmatpush1.bf16.msra.mxu0 0
    %1044 = vmatprep.subr.bf16.mxu0 0
    %1045 = vmatpush1.bf16.msra.mxu0 0
    %1046 = vmatprep.subr.bf16.mxu0 0
    %1047 = vmatpush1.bf16.msra.mxu0 0
    %1048 = vmatprep.subr.bf16.mxu0 0
    %1049 = vmatpush1.bf16.msra.mxu0 0
    %1050 = vmatprep.subr.bf16.mxu0 0
    %1051 = vmatpush1.bf16.msra.mxu0 0
    %1052 = vmatprep.subr.bf16.mxu0 0
    %1053 = vmatpush1.bf16.msra.mxu0 0
    %1054 = vmatprep.subr.bf16.mxu0 0
    %1055 = vmatpush1.bf16.msra.mxu0 0
    %1056 = vmatprep.subr.bf16.mxu0 0
    %1057 = vmatpush1.bf16.msra.mxu0 0
    %1058 = vmatprep.subr.bf16.mxu0 0
    %1059 = vmatpush1.bf16.msra.mxu0 0
    %1060 = vmatprep.subr.bf16.mxu0 0
    %1061 = vmatpush1.bf16.msra.mxu0 0
    %1062 = vmatprep.subr.bf16.mxu0 0
    %1063 = vmatpush1.bf16.msra.mxu0 0
    %1064 = vmatprep.subr.bf16.mxu0 0
    %1065 = vmatpush1.bf16.msra.mxu0 0
    %1066 = vmatprep.subr.bf16.mxu0 0
    %1067 = vmatpush1.bf16.msra.mxu0 0
    %1068 = vmatprep.subr.bf16.mxu0 0
    %1069 = vmatpush1.bf16.msra.mxu0 0
    %1070 = vmatprep.mubr.bf16.mxu0 0
    %1071 = vmatmul.mubr.bf16.gmra.mrb[0].mxu0 %v1033
    %v1072 = vpop.f32.mrb[0].mxu0
    %v1073 = vadd.f32 0.0, %v1072
    %v1074 = vpop.f32.mrb[0].mxu0
    %v1075 = vpop.f32.mrb[0].mxu0
    %v1076 = vpop.f32.mrb[0].mxu0
    %1077 = vdwg.mxu0
    %1079 = vrot.lane.b32.xlu0 %v679, 112
    %v1080 = vpop.permute.xlu0 %1079
    %v1082 = vsel %vm777, %v1028, 0
    %v1085 = vsel %vm807, %v1080, 0
    %1087 = vmatprep.subr.bf16.mxu0 0
    %1088 = vmatpush1.bf16.msra.mxu0 %v1085
    %1089 = vmatprep.subr.bf16.mxu0 0
    %1090 = vmatpush1.bf16.msra.mxu0 0
    %1091 = vmatprep.subr.bf16.mxu0 0
    %1092 = vmatpush1.bf16.msra.mxu0 0
    %1093 = vmatprep.subr.bf16.mxu0 0
    %1094 = vmatpush1.bf16.msra.mxu0 0
    %1095 = vmatprep.subr.bf16.mxu0 0
    %1096 = vmatpush1.bf16.msra.mxu0 0
    %1097 = vmatprep.subr.bf16.mxu0 0
    %1098 = vmatpush1.bf16.msra.mxu0 0
    %1099 = vmatprep.subr.bf16.mxu0 0
    %1100 = vmatpush1.bf16.msra.mxu0 0
    %1101 = vmatprep.subr.bf16.mxu0 0
    %1102 = vmatpush1.bf16.msra.mxu0 0
    %1103 = vmatprep.subr.bf16.mxu0 0
    %1104 = vmatpush1.bf16.msra.mxu0 0
    %1105 = vmatprep.subr.bf16.mxu0 0
    %1106 = vmatpush1.bf16.msra.mxu0 0
    %1107 = vmatprep.subr.bf16.mxu0 0
    %1108 = vmatpush1.bf16.msra.mxu0 0
    %1109 = vmatprep.subr.bf16.mxu0 0
    %1110 = vmatpush1.bf16.msra.mxu0 0
    %1111 = vmatprep.subr.bf16.mxu0 0
    %1112 = vmatpush1.bf16.msra.mxu0 0
    %1113 = vmatprep.subr.bf16.mxu0 0
    %1114 = vmatpush1.bf16.msra.mxu0 0
    %1115 = vmatprep.subr.bf16.mxu0 0
    %1116 = vmatpush1.bf16.msra.mxu0 0
    %1117 = vmatprep.subr.bf16.mxu0 0
    %1118 = vmatpush1.bf16.msra.mxu0 0
    %1119 = vmatprep.mubr.bf16.mxu0 0
    %1120 = vmatmul.mubr.bf16.gmra.mrb[0].mxu0 %v1082
    %v1121 = vpop.f32.mrb[0].mxu0
    %v1122 = vadd.f32 0.0, %v1121
    %v1123 = vpop.f32.mrb[0].mxu0
    %v1124 = vpop.f32.mrb[0].mxu0
    %v1125 = vpop.f32.mrb[0].mxu0
    %1126 = vdwg.mxu0
    %1127 = vrot.lane.b32.xlu0 %v674, 96
    %v1128 = vpop.permute.xlu0 %1127
    %1129 = vrot.lane.b32.xlu0 %v676, 96
    %v1130 = vpop.permute.xlu0 %1129
    %v1132 = vsel %vm680, %v1128, 0
    %v1135 = vsel %vm680, %v1130, 0
    %1137 = vmatprep.subr.bf16.mxu0 0
    %1138 = vmatpush1.bf16.xpose.msra.mxu0 %v1135
    %1139 = vmatprep.subr.bf16.mxu0 0
    %1140 = vmatpush1.bf16.xpose.msra.mxu0 0
    %1141 = vmatprep.subr.bf16.mxu0 0
    %1142 = vmatpush1.bf16.xpose.msra.mxu0 0
    %1143 = vmatprep.subr.bf16.mxu0 0
    %1144 = vmatpush1.bf16.xpose.msra.mxu0 0
    %1145 = vmatprep.subr.bf16.mxu0 0
    %1146 = vmatpush1.bf16.xpose.msra.mxu0 0
    %1147 = vmatprep.subr.bf16.mxu0 0
    %1148 = vmatpush1.bf16.xpose.msra.mxu0 0
    %1149 = vmatprep.subr.bf16.mxu0 0
    %1150 = vmatpush1.bf16.xpose.msra.mxu0 0
    %1151 = vmatprep.subr.bf16.mxu0 0
    %1152 = vmatpush1.bf16.xpose.msra.mxu0 0
    %1153 = vmatprep.subr.bf16.mxu0 0
    %1154 = vmatpush1.bf16.xpose.msra.mxu0 0
    %1155 = vmatprep.subr.bf16.mxu0 0
    %1156 = vmatpush1.bf16.xpose.msra.mxu0 0
    %1157 = vmatprep.subr.bf16.mxu0 0
    %1158 = vmatpush1.bf16.xpose.msra.mxu0 0
    %1159 = vmatprep.subr.bf16.mxu0 0
    %1160 = vmatpush1.bf16.xpose.msra.mxu0 0
    %1161 = vmatprep.subr.bf16.mxu0 0
    %1162 = vmatpush1.bf16.xpose.msra.mxu0 0
    %1163 = vmatprep.subr.bf16.mxu0 0
    %1164 = vmatpush1.bf16.xpose.msra.mxu0 0
    %1165 = vmatprep.subr.bf16.mxu0 0
    %1166 = vmatpush1.bf16.xpose.msra.mxu0 0
    %1167 = vmatprep.subr.bf16.mxu0 0
    %1168 = vmatpush1.bf16.xpose.msra.mxu0 0
    %1169 = vmatprep.mubr.bf16.mxu0 0
    %1170 = vmatmul.mubr.bf16.gmra.mrb[0].mxu0 %v1132
    %v1171 = vpop.f32.mrb[0].mxu0
    %v1172 = vadd.f32 0.0, %v1171
    %v1173 = vpop.f32.mrb[0].mxu0
    %v1174 = vpop.f32.mrb[0].mxu0
    %v1175 = vpop.f32.mrb[0].mxu0
    %1176 = vdwg.mxu0
    %1177 = vrot.lane.b32.xlu0 %v675, 96
    %v1178 = vpop.permute.xlu0 %1177
    %1179 = vrot.lane.b32.xlu0 %v677, 96
    %v1180 = vpop.permute.xlu0 %1179
    %v1182 = vsel %vm680, %v1178, 0
    %v1185 = vsel %vm680, %v1180, 0
    %1187 = vmatprep.subr.bf16.mxu0 0
    %1188 = vmatpush1.bf16.xpose.msra.mxu0 %v1185
    %1189 = vmatprep.subr.bf16.mxu0 0
    %1190 = vmatpush1.bf16.xpose.msra.mxu0 0
    %1191 = vmatprep.subr.bf16.mxu0 0
    %1192 = vmatpush1.bf16.xpose.msra.mxu0 0
    %1193 = vmatprep.subr.bf16.mxu0 0
    %1194 = vmatpush1.bf16.xpose.msra.mxu0 0
    %1195 = vmatprep.subr.bf16.mxu0 0
    %1196 = vmatpush1.bf16.xpose.msra.mxu0 0
    %1197 = vmatprep.subr.bf16.mxu0 0
    %1198 = vmatpush1.bf16.xpose.msra.mxu0 0
    %1199 = vmatprep.subr.bf16.mxu0 0
    %1200 = vmatpush1.bf16.xpose.msra.mxu0 0
    %1201 = vmatprep.subr.bf16.mxu0 0
    %1202 = vmatpush1.bf16.xpose.msra.mxu0 0
    %1203 = vmatprep.subr.bf16.mxu0 0
    %1204 = vmatpush1.bf16.xpose.msra.mxu0 0
    %1205 = vmatprep.subr.bf16.mxu0 0
    %1206 = vmatpush1.bf16.xpose.msra.mxu0 0
    %1207 = vmatprep.subr.bf16.mxu0 0
    %1208 = vmatpush1.bf16.xpose.msra.mxu0 0
    %1209 = vmatprep.subr.bf16.mxu0 0
    %1210 = vmatpush1.bf16.xpose.msra.mxu0 0
    %1211 = vmatprep.subr.bf16.mxu0 0
    %1212 = vmatpush1.bf16.xpose.msra.mxu0 0
    %1213 = vmatprep.subr.bf16.mxu0 0
    %1214 = vmatpush1.bf16.xpose.msra.mxu0 0
    %1215 = vmatprep.subr.bf16.mxu0 0
    %1216 = vmatpush1.bf16.xpose.msra.mxu0 0
    %1217 = vmatprep.subr.bf16.mxu0 0
    %1218 = vmatpush1.bf16.xpose.msra.mxu0 0
    %1219 = vmatprep.mubr.bf16.mxu0 0
    %1220 = vmatmul.mubr.bf16.gmra.mrb[0].mxu0 %v1182
    %v1221 = vpop.f32.mrb[0].mxu0
    %v1222 = vadd.f32 0.0, %v1221
    %v1223 = vpop.f32.mrb[0].mxu0
    %v1224 = vpop.f32.mrb[0].mxu0
    %v1225 = vpop.f32.mrb[0].mxu0
    %1226 = vdwg.mxu0
    %v1227 = vsel %vm773, %v1172, -1e+30
    %v1228 = vsel %vm774, %v1222, -1e+30
    %v1229 = vsel %vm777, %v1227, -inf
    %1230 = vmax.xlane.f32.xlu0 %v1229
    %v1231 = vpop.xlane.xlu0 %1230
    %v1232 = vsel %vm777, %v1228, -inf
    %1233 = vmax.xlane.f32.xlu0 %v1232
    %v1234 = vpop.xlane.xlu0 %1233
    %v1235 = vsub.f32 %v1227, %v1231
    %v1236 = vsub.f32 %v1228, %v1234
    %v1237 = vmul.f32 %v1235, 1.442695
    %v1238 = vpow.pop %v1237
    %v1239 = vmul.f32 %v1236, 1.442695
    %v1240 = vpow.pop %v1239
    %v1241 = vsel %vm777, %v1238, 0.0
    %1242 = vadd.xlane.f32.xlu0 %v1241
    %v1243 = vpop.xlane.xlu0 %1242
    %v1244 = vsel %vm777, %v1240, 0.0
    %1245 = vadd.xlane.f32.xlu0 %v1244
    %v1246 = vpop.xlane.xlu0 %1245
    %v1247 = vrcp.pop %v1243
    %v1248 = vrcp.pop %v1246
    %v1249 = vmul.f32 %v1238, %v1247
    %v1250 = vmul.f32 %v1240, %v1248
    %v1251 = vadd.f32 %v1249, %v383
    %v1252 = vadd.f32 %v1250, %v384
    %v1253 = vpack.c.bf16 %v1251, %v1251
    %v1254 = vpack.c.bf16 %v1252, %v1252
    %1255 = vrot.lane.b32.xlu0 %v678, 96
    %v1256 = vpop.permute.xlu0 %1255
    %v1258 = vsel %vm777, %v1253, 0
    %v1261 = vsel %vm807, %v1256, 0
    %1263 = vmatprep.subr.bf16.mxu0 0
    %1264 = vmatpush1.bf16.msra.mxu0 %v1261
    %1265 = vmatprep.subr.bf16.mxu0 0
    %1266 = vmatpush1.bf16.msra.mxu0 0
    %1267 = vmatprep.subr.bf16.mxu0 0
    %1268 = vmatpush1.bf16.msra.mxu0 0
    %1269 = vmatprep.subr.bf16.mxu0 0
    %1270 = vmatpush1.bf16.msra.mxu0 0
    %1271 = vmatprep.subr.bf16.mxu0 0
    %1272 = vmatpush1.bf16.msra.mxu0 0
    %1273 = vmatprep.subr.bf16.mxu0 0
    %1274 = vmatpush1.bf16.msra.mxu0 0
    %1275 = vmatprep.subr.bf16.mxu0 0
    %1276 = vmatpush1.bf16.msra.mxu0 0
    %1277 = vmatprep.subr.bf16.mxu0 0
    %1278 = vmatpush1.bf16.msra.mxu0 0
    %1279 = vmatprep.subr.bf16.mxu0 0
    %1280 = vmatpush1.bf16.msra.mxu0 0
    %1281 = vmatprep.subr.bf16.mxu0 0
    %1282 = vmatpush1.bf16.msra.mxu0 0
    %1283 = vmatprep.subr.bf16.mxu0 0
    %1284 = vmatpush1.bf16.msra.mxu0 0
    %1285 = vmatprep.subr.bf16.mxu0 0
    %1286 = vmatpush1.bf16.msra.mxu0 0
    %1287 = vmatprep.subr.bf16.mxu0 0
    %1288 = vmatpush1.bf16.msra.mxu0 0
    %1289 = vmatprep.subr.bf16.mxu0 0
    %1290 = vmatpush1.bf16.msra.mxu0 0
    %1291 = vmatprep.subr.bf16.mxu0 0
    %1292 = vmatpush1.bf16.msra.mxu0 0
    %1293 = vmatprep.subr.bf16.mxu0 0
    %1294 = vmatpush1.bf16.msra.mxu0 0
    %1295 = vmatprep.mubr.bf16.mxu0 0
    %1296 = vmatmul.mubr.bf16.gmra.mrb[0].mxu0 %v1258
    %v1297 = vpop.f32.mrb[0].mxu0
    %v1298 = vadd.f32 0.0, %v1297
    %v1299 = vpop.f32.mrb[0].mxu0
    %v1300 = vpop.f32.mrb[0].mxu0
    %v1301 = vpop.f32.mrb[0].mxu0
    %1302 = vdwg.mxu0
    %1303 = vrot.lane.b32.xlu0 %v679, 96
    %v1304 = vpop.permute.xlu0 %1303
    %v1306 = vsel %vm777, %v1254, 0
    %v1309 = vsel %vm807, %v1304, 0
    %1311 = vmatprep.subr.bf16.mxu0 0
    %1312 = vmatpush1.bf16.msra.mxu0 %v1309
    %1313 = vmatprep.subr.bf16.mxu0 0
    %1314 = vmatpush1.bf16.msra.mxu0 0
    %1315 = vmatprep.subr.bf16.mxu0 0
    %1316 = vmatpush1.bf16.msra.mxu0 0
    %1317 = vmatprep.subr.bf16.mxu0 0
    %1318 = vmatpush1.bf16.msra.mxu0 0
    %1319 = vmatprep.subr.bf16.mxu0 0
    %1320 = vmatpush1.bf16.msra.mxu0 0
    %1321 = vmatprep.subr.bf16.mxu0 0
    %1322 = vmatpush1.bf16.msra.mxu0 0
    %1323 = vmatprep.subr.bf16.mxu0 0
    %1324 = vmatpush1.bf16.msra.mxu0 0
    %1325 = vmatprep.subr.bf16.mxu0 0
    %1326 = vmatpush1.bf16.msra.mxu0 0
    %1327 = vmatprep.subr.bf16.mxu0 0
    %1328 = vmatpush1.bf16.msra.mxu0 0
    %1329 = vmatprep.subr.bf16.mxu0 0
    %1330 = vmatpush1.bf16.msra.mxu0 0
    %1331 = vmatprep.subr.bf16.mxu0 0
    %1332 = vmatpush1.bf16.msra.mxu0 0
    %1333 = vmatprep.subr.bf16.mxu0 0
    %1334 = vmatpush1.bf16.msra.mxu0 0
    %1335 = vmatprep.subr.bf16.mxu0 0
    %1336 = vmatpush1.bf16.msra.mxu0 0
    %1337 = vmatprep.subr.bf16.mxu0 0
    %1338 = vmatpush1.bf16.msra.mxu0 0
    %1339 = vmatprep.subr.bf16.mxu0 0
    %1340 = vmatpush1.bf16.msra.mxu0 0
    %1341 = vmatprep.subr.bf16.mxu0 0
    %1342 = vmatpush1.bf16.msra.mxu0 0
    %1343 = vmatprep.mubr.bf16.mxu0 0
    %1344 = vmatmul.mubr.bf16.gmra.mrb[0].mxu0 %v1306
    %v1345 = vpop.f32.mrb[0].mxu0
    %v1346 = vadd.f32 0.0, %v1345
    %v1347 = vpop.f32.mrb[0].mxu0
    %v1348 = vpop.f32.mrb[0].mxu0
    %v1349 = vpop.f32.mrb[0].mxu0
    %1350 = vdwg.mxu0
    %1351 = vrot.lane.b32.xlu0 %v674, 80
    %v1352 = vpop.permute.xlu0 %1351
    %1353 = vrot.lane.b32.xlu0 %v676, 80
    %v1354 = vpop.permute.xlu0 %1353
    %v1356 = vsel %vm680, %v1352, 0
    %v1359 = vsel %vm680, %v1354, 0
    %1361 = vmatprep.subr.bf16.mxu0 0
    %1362 = vmatpush1.bf16.xpose.msra.mxu0 %v1359
    %1363 = vmatprep.subr.bf16.mxu0 0
    %1364 = vmatpush1.bf16.xpose.msra.mxu0 0
    %1365 = vmatprep.subr.bf16.mxu0 0
    %1366 = vmatpush1.bf16.xpose.msra.mxu0 0
    %1367 = vmatprep.subr.bf16.mxu0 0
    %1368 = vmatpush1.bf16.xpose.msra.mxu0 0
    %1369 = vmatprep.subr.bf16.mxu0 0
    %1370 = vmatpush1.bf16.xpose.msra.mxu0 0
    %1371 = vmatprep.subr.bf16.mxu0 0
    %1372 = vmatpush1.bf16.xpose.msra.mxu0 0
    %1373 = vmatprep.subr.bf16.mxu0 0
    %1374 = vmatpush1.bf16.xpose.msra.mxu0 0
    %1375 = vmatprep.subr.bf16.mxu0 0
    %1376 = vmatpush1.bf16.xpose.msra.mxu0 0
    %1377 = vmatprep.subr.bf16.mxu0 0
    %1378 = vmatpush1.bf16.xpose.msra.mxu0 0
    %1379 = vmatprep.subr.bf16.mxu0 0
    %1380 = vmatpush1.bf16.xpose.msra.mxu0 0
    %1381 = vmatprep.subr.bf16.mxu0 0
    %1382 = vmatpush1.bf16.xpose.msra.mxu0 0
    %1383 = vmatprep.subr.bf16.mxu0 0
    %1384 = vmatpush1.bf16.xpose.msra.mxu0 0
    %1385 = vmatprep.subr.bf16.mxu0 0
    %1386 = vmatpush1.bf16.xpose.msra.mxu0 0
    %1387 = vmatprep.subr.bf16.mxu0 0
    %1388 = vmatpush1.bf16.xpose.msra.mxu0 0
    %1389 = vmatprep.subr.bf16.mxu0 0
    %1390 = vmatpush1.bf16.xpose.msra.mxu0 0
    %1391 = vmatprep.subr.bf16.mxu0 0
    %1392 = vmatpush1.bf16.xpose.msra.mxu0 0
    %1393 = vmatprep.mubr.bf16.mxu0 0
    %1394 = vmatmul.mubr.bf16.gmra.mrb[0].mxu0 %v1356
    %v1395 = vpop.f32.mrb[0].mxu0
    %v1396 = vadd.f32 0.0, %v1395
    %v1397 = vpop.f32.mrb[0].mxu0
    %v1398 = vpop.f32.mrb[0].mxu0
    %v1399 = vpop.f32.mrb[0].mxu0
    %1400 = vdwg.mxu0
    %1401 = vrot.lane.b32.xlu0 %v675, 80
    %v1402 = vpop.permute.xlu0 %1401
    %1403 = vrot.lane.b32.xlu0 %v677, 80
    %v1404 = vpop.permute.xlu0 %1403
    %v1406 = vsel %vm680, %v1402, 0
    %v1409 = vsel %vm680, %v1404, 0
    %1411 = vmatprep.subr.bf16.mxu0 0
    %1412 = vmatpush1.bf16.xpose.msra.mxu0 %v1409
    %1413 = vmatprep.subr.bf16.mxu0 0
    %1414 = vmatpush1.bf16.xpose.msra.mxu0 0
    %1415 = vmatprep.subr.bf16.mxu0 0
    %1416 = vmatpush1.bf16.xpose.msra.mxu0 0
    %1417 = vmatprep.subr.bf16.mxu0 0
    %1418 = vmatpush1.bf16.xpose.msra.mxu0 0
    %1419 = vmatprep.subr.bf16.mxu0 0
    %1420 = vmatpush1.bf16.xpose.msra.mxu0 0
    %1421 = vmatprep.subr.bf16.mxu0 0
    %1422 = vmatpush1.bf16.xpose.msra.mxu0 0
    %1423 = vmatprep.subr.bf16.mxu0 0
    %1424 = vmatpush1.bf16.xpose.msra.mxu0 0
    %1425 = vmatprep.subr.bf16.mxu0 0
    %1426 = vmatpush1.bf16.xpose.msra.mxu0 0
    %1427 = vmatprep.subr.bf16.mxu0 0
    %1428 = vmatpush1.bf16.xpose.msra.mxu0 0
    %1429 = vmatprep.subr.bf16.mxu0 0
    %1430 = vmatpush1.bf16.xpose.msra.mxu0 0
    %1431 = vmatprep.subr.bf16.mxu0 0
    %1432 = vmatpush1.bf16.xpose.msra.mxu0 0
    %1433 = vmatprep.subr.bf16.mxu0 0
    %1434 = vmatpush1.bf16.xpose.msra.mxu0 0
    %1435 = vmatprep.subr.bf16.mxu0 0
    %1436 = vmatpush1.bf16.xpose.msra.mxu0 0
    %1437 = vmatprep.subr.bf16.mxu0 0
    %1438 = vmatpush1.bf16.xpose.msra.mxu0 0
    %1439 = vmatprep.subr.bf16.mxu0 0
    %1440 = vmatpush1.bf16.xpose.msra.mxu0 0
    %1441 = vmatprep.subr.bf16.mxu0 0
    %1442 = vmatpush1.bf16.xpose.msra.mxu0 0
    %1443 = vmatprep.mubr.bf16.mxu0 0
    %1444 = vmatmul.mubr.bf16.gmra.mrb[0].mxu0 %v1406
    %v1445 = vpop.f32.mrb[0].mxu0
    %v1446 = vadd.f32 0.0, %v1445
    %v1447 = vpop.f32.mrb[0].mxu0
    %v1448 = vpop.f32.mrb[0].mxu0
    %v1449 = vpop.f32.mrb[0].mxu0
    %1450 = vdwg.mxu0
    %v1451 = vsel %vm773, %v1396, -1e+30
    %v1452 = vsel %vm774, %v1446, -1e+30
    %v1453 = vsel %vm777, %v1451, -inf
    %1454 = vmax.xlane.f32.xlu0 %v1453
    %v1455 = vpop.xlane.xlu0 %1454
    %v1456 = vsel %vm777, %v1452, -inf
    %1457 = vmax.xlane.f32.xlu0 %v1456
    %v1458 = vpop.xlane.xlu0 %1457
    %v1459 = vsub.f32 %v1451, %v1455
    %v1460 = vsub.f32 %v1452, %v1458
    %v1461 = vmul.f32 %v1459, 1.442695
    %v1462 = vpow.pop %v1461
    %v1463 = vmul.f32 %v1460, 1.442695
    %v1464 = vpow.pop %v1463
    %v1465 = vsel %vm777, %v1462, 0.0
    %1466 = vadd.xlane.f32.xlu0 %v1465
    %v1467 = vpop.xlane.xlu0 %1466
    %v1468 = vsel %vm777, %v1464, 0.0
    %1469 = vadd.xlane.f32.xlu0 %v1468
    %v1470 = vpop.xlane.xlu0 %1469
    %v1471 = vrcp.pop %v1467
    %v1472 = vrcp.pop %v1470
    %v1473 = vmul.f32 %v1462, %v1471
    %v1474 = vmul.f32 %v1464, %v1472
    %v1475 = vadd.f32 %v1473, %v383
    %v1476 = vadd.f32 %v1474, %v384
    %v1477 = vpack.c.bf16 %v1475, %v1475
    %v1478 = vpack.c.bf16 %v1476, %v1476
    %1479 = vrot.lane.b32.xlu0 %v678, 80
    %v1480 = vpop.permute.xlu0 %1479
    %v1482 = vsel %vm777, %v1477, 0
    %v1485 = vsel %vm807, %v1480, 0
    %1487 = vmatprep.subr.bf16.mxu0 0
    %1488 = vmatpush1.bf16.msra.mxu0 %v1485
    %1489 = vmatprep.subr.bf16.mxu0 0
    %1490 = vmatpush1.bf16.msra.mxu0 0
    %1491 = vmatprep.subr.bf16.mxu0 0
    %1492 = vmatpush1.bf16.msra.mxu0 0
    %1493 = vmatprep.subr.bf16.mxu0 0
    %1494 = vmatpush1.bf16.msra.mxu0 0
    %1495 = vmatprep.subr.bf16.mxu0 0
    %1496 = vmatpush1.bf16.msra.mxu0 0
    %1497 = vmatprep.subr.bf16.mxu0 0
    %1498 = vmatpush1.bf16.msra.mxu0 0
    %1499 = vmatprep.subr.bf16.mxu0 0
    %1500 = vmatpush1.bf16.msra.mxu0 0
    %1501 = vmatprep.subr.bf16.mxu0 0
    %1502 = vmatpush1.bf16.msra.mxu0 0
    %1503 = vmatprep.subr.bf16.mxu0 0
    %1504 = vmatpush1.bf16.msra.mxu0 0
    %1505 = vmatprep.subr.bf16.mxu0 0
    %1506 = vmatpush1.bf16.msra.mxu0 0
    %1507 = vmatprep.subr.bf16.mxu0 0
    %1508 = vmatpush1.bf16.msra.mxu0 0
    %1509 = vmatprep.subr.bf16.mxu0 0
    %1510 = vmatpush1.bf16.msra.mxu0 0
    %1511 = vmatprep.subr.bf16.mxu0 0
    %1512 = vmatpush1.bf16.msra.mxu0 0
    %1513 = vmatprep.subr.bf16.mxu0 0
    %1514 = vmatpush1.bf16.msra.mxu0 0
    %1515 = vmatprep.subr.bf16.mxu0 0
    %1516 = vmatpush1.bf16.msra.mxu0 0
    %1517 = vmatprep.subr.bf16.mxu0 0
    %1518 = vmatpush1.bf16.msra.mxu0 0
    %1519 = vmatprep.mubr.bf16.mxu0 0
    %1520 = vmatmul.mubr.bf16.gmra.mrb[0].mxu0 %v1482
    %v1521 = vpop.f32.mrb[0].mxu0
    %v1522 = vadd.f32 0.0, %v1521
    %v1523 = vpop.f32.mrb[0].mxu0
    %v1524 = vpop.f32.mrb[0].mxu0
    %v1525 = vpop.f32.mrb[0].mxu0
    %1526 = vdwg.mxu0
    %1527 = vrot.lane.b32.xlu0 %v679, 80
    %v1528 = vpop.permute.xlu0 %1527
    %v1530 = vsel %vm777, %v1478, 0
    %v1533 = vsel %vm807, %v1528, 0
    %1535 = vmatprep.subr.bf16.mxu0 0
    %1536 = vmatpush1.bf16.msra.mxu0 %v1533
    %1537 = vmatprep.subr.bf16.mxu0 0
    %1538 = vmatpush1.bf16.msra.mxu0 0
    %1539 = vmatprep.subr.bf16.mxu0 0
    %1540 = vmatpush1.bf16.msra.mxu0 0
    %1541 = vmatprep.subr.bf16.mxu0 0
    %1542 = vmatpush1.bf16.msra.mxu0 0
    %1543 = vmatprep.subr.bf16.mxu0 0
    %1544 = vmatpush1.bf16.msra.mxu0 0
    %1545 = vmatprep.subr.bf16.mxu0 0
    %1546 = vmatpush1.bf16.msra.mxu0 0
    %1547 = vmatprep.subr.bf16.mxu0 0
    %1548 = vmatpush1.bf16.msra.mxu0 0
    %1549 = vmatprep.subr.bf16.mxu0 0
    %1550 = vmatpush1.bf16.msra.mxu0 0
    %1551 = vmatprep.subr.bf16.mxu0 0
    %1552 = vmatpush1.bf16.msra.mxu0 0
    %1553 = vmatprep.subr.bf16.mxu0 0
    %1554 = vmatpush1.bf16.msra.mxu0 0
    %1555 = vmatprep.subr.bf16.mxu0 0
    %1556 = vmatpush1.bf16.msra.mxu0 0
    %1557 = vmatprep.subr.bf16.mxu0 0
    %1558 = vmatpush1.bf16.msra.mxu0 0
    %1559 = vmatprep.subr.bf16.mxu0 0
    %1560 = vmatpush1.bf16.msra.mxu0 0
    %1561 = vmatprep.subr.bf16.mxu0 0
    %1562 = vmatpush1.bf16.msra.mxu0 0
    %1563 = vmatprep.subr.bf16.mxu0 0
    %1564 = vmatpush1.bf16.msra.mxu0 0
    %1565 = vmatprep.subr.bf16.mxu0 0
    %1566 = vmatpush1.bf16.msra.mxu0 0
    %1567 = vmatprep.mubr.bf16.mxu0 0
    %1568 = vmatmul.mubr.bf16.gmra.mrb[0].mxu0 %v1530
    %v1569 = vpop.f32.mrb[0].mxu0
    %v1570 = vadd.f32 0.0, %v1569
    %v1571 = vpop.f32.mrb[0].mxu0
    %v1572 = vpop.f32.mrb[0].mxu0
    %v1573 = vpop.f32.mrb[0].mxu0
    %1574 = vdwg.mxu0
    %1575 = vrot.lane.b32.xlu0 %v674, 64
    %v1576 = vpop.permute.xlu0 %1575
    %1577 = vrot.lane.b32.xlu0 %v676, 64
    %v1578 = vpop.permute.xlu0 %1577
    %v1580 = vsel %vm680, %v1576, 0
    %v1583 = vsel %vm680, %v1578, 0
    %1585 = vmatprep.subr.bf16.mxu0 0
    %1586 = vmatpush1.bf16.xpose.msra.mxu0 %v1583
    %1587 = vmatprep.subr.bf16.mxu0 0
    %1588 = vmatpush1.bf16.xpose.msra.mxu0 0
    %1589 = vmatprep.subr.bf16.mxu0 0
    %1590 = vmatpush1.bf16.xpose.msra.mxu0 0
    %1591 = vmatprep.subr.bf16.mxu0 0
    %1592 = vmatpush1.bf16.xpose.msra.mxu0 0
    %1593 = vmatprep.subr.bf16.mxu0 0
    %1594 = vmatpush1.bf16.xpose.msra.mxu0 0
    %1595 = vmatprep.subr.bf16.mxu0 0
    %1596 = vmatpush1.bf16.xpose.msra.mxu0 0
    %1597 = vmatprep.subr.bf16.mxu0 0
    %1598 = vmatpush1.bf16.xpose.msra.mxu0 0
    %1599 = vmatprep.subr.bf16.mxu0 0
    %1600 = vmatpush1.bf16.xpose.msra.mxu0 0
    %1601 = vmatprep.subr.bf16.mxu0 0
    %1602 = vmatpush1.bf16.xpose.msra.mxu0 0
    %1603 = vmatprep.subr.bf16.mxu0 0
    %1604 = vmatpush1.bf16.xpose.msra.mxu0 0
    %1605 = vmatprep.subr.bf16.mxu0 0
    %1606 = vmatpush1.bf16.xpose.msra.mxu0 0
    %1607 = vmatprep.subr.bf16.mxu0 0
    %1608 = vmatpush1.bf16.xpose.msra.mxu0 0
    %1609 = vmatprep.subr.bf16.mxu0 0
    %1610 = vmatpush1.bf16.xpose.msra.mxu0 0
    %1611 = vmatprep.subr.bf16.mxu0 0
    %1612 = vmatpush1.bf16.xpose.msra.mxu0 0
    %1613 = vmatprep.subr.bf16.mxu0 0
    %1614 = vmatpush1.bf16.xpose.msra.mxu0 0
    %1615 = vmatprep.subr.bf16.mxu0 0
    %1616 = vmatpush1.bf16.xpose.msra.mxu0 0
    %1617 = vmatprep.mubr.bf16.mxu0 0
    %1618 = vmatmul.mubr.bf16.gmra.mrb[0].mxu0 %v1580
    %v1619 = vpop.f32.mrb[0].mxu0
    %v1620 = vadd.f32 0.0, %v1619
    %v1621 = vpop.f32.mrb[0].mxu0
    %v1622 = vpop.f32.mrb[0].mxu0
    %v1623 = vpop.f32.mrb[0].mxu0
    %1624 = vdwg.mxu0
    %1625 = vrot.lane.b32.xlu0 %v675, 64
    %v1626 = vpop.permute.xlu0 %1625
    %1627 = vrot.lane.b32.xlu0 %v677, 64
    %v1628 = vpop.permute.xlu0 %1627
    %v1630 = vsel %vm680, %v1626, 0
    %v1633 = vsel %vm680, %v1628, 0
    %1635 = vmatprep.subr.bf16.mxu0 0
    %1636 = vmatpush1.bf16.xpose.msra.mxu0 %v1633
    %1637 = vmatprep.subr.bf16.mxu0 0
    %1638 = vmatpush1.bf16.xpose.msra.mxu0 0
    %1639 = vmatprep.subr.bf16.mxu0 0
    %1640 = vmatpush1.bf16.xpose.msra.mxu0 0
    %1641 = vmatprep.subr.bf16.mxu0 0
    %1642 = vmatpush1.bf16.xpose.msra.mxu0 0
    %1643 = vmatprep.subr.bf16.mxu0 0
    %1644 = vmatpush1.bf16.xpose.msra.mxu0 0
    %1645 = vmatprep.subr.bf16.mxu0 0
    %1646 = vmatpush1.bf16.xpose.msra.mxu0 0
    %1647 = vmatprep.subr.bf16.mxu0 0
    %1648 = vmatpush1.bf16.xpose.msra.mxu0 0
    %1649 = vmatprep.subr.bf16.mxu0 0
    %1650 = vmatpush1.bf16.xpose.msra.mxu0 0
    %1651 = vmatprep.subr.bf16.mxu0 0
    %1652 = vmatpush1.bf16.xpose.msra.mxu0 0
    %1653 = vmatprep.subr.bf16.mxu0 0
    %1654 = vmatpush1.bf16.xpose.msra.mxu0 0
    %1655 = vmatprep.subr.bf16.mxu0 0
    %1656 = vmatpush1.bf16.xpose.msra.mxu0 0
    %1657 = vmatprep.subr.bf16.mxu0 0
    %1658 = vmatpush1.bf16.xpose.msra.mxu0 0
    %1659 = vmatprep.subr.bf16.mxu0 0
    %1660 = vmatpush1.bf16.xpose.msra.mxu0 0
    %1661 = vmatprep.subr.bf16.mxu0 0
    %1662 = vmatpush1.bf16.xpose.msra.mxu0 0
    %1663 = vmatprep.subr.bf16.mxu0 0
    %1664 = vmatpush1.bf16.xpose.msra.mxu0 0
    %1665 = vmatprep.subr.bf16.mxu0 0
    %1666 = vmatpush1.bf16.xpose.msra.mxu0 0
    %1667 = vmatprep.mubr.bf16.mxu0 0
    %1668 = vmatmul.mubr.bf16.gmra.mrb[0].mxu0 %v1630
    %v1669 = vpop.f32.mrb[0].mxu0
    %v1670 = vadd.f32 0.0, %v1669
    %v1671 = vpop.f32.mrb[0].mxu0
    %v1672 = vpop.f32.mrb[0].mxu0
    %v1673 = vpop.f32.mrb[0].mxu0
    %1674 = vdwg.mxu0
    %v1675 = vsel %vm773, %v1620, -1e+30
    %v1676 = vsel %vm774, %v1670, -1e+30
    %v1677 = vsel %vm777, %v1675, -inf
    %1678 = vmax.xlane.f32.xlu0 %v1677
    %v1679 = vpop.xlane.xlu0 %1678
    %v1680 = vsel %vm777, %v1676, -inf
    %1681 = vmax.xlane.f32.xlu0 %v1680
    %v1682 = vpop.xlane.xlu0 %1681
    %v1683 = vsub.f32 %v1675, %v1679
    %v1684 = vsub.f32 %v1676, %v1682
    %v1685 = vmul.f32 %v1683, 1.442695
    %v1686 = vpow.pop %v1685
    %v1687 = vmul.f32 %v1684, 1.442695
    %v1688 = vpow.pop %v1687
    %v1689 = vsel %vm777, %v1686, 0.0
    %1690 = vadd.xlane.f32.xlu0 %v1689
    %v1691 = vpop.xlane.xlu0 %1690
    %v1692 = vsel %vm777, %v1688, 0.0
    %1693 = vadd.xlane.f32.xlu0 %v1692
    %v1694 = vpop.xlane.xlu0 %1693
    %v1695 = vrcp.pop %v1691
    %v1696 = vrcp.pop %v1694
    %v1697 = vmul.f32 %v1686, %v1695
    %v1698 = vmul.f32 %v1688, %v1696
    %v1699 = vadd.f32 %v1697, %v383
    %v1700 = vadd.f32 %v1698, %v384
    %v1701 = vpack.c.bf16 %v1699, %v1699
    %v1702 = vpack.c.bf16 %v1700, %v1700
    %1703 = vrot.lane.b32.xlu0 %v678, 64
    %v1704 = vpop.permute.xlu0 %1703
    %v1706 = vsel %vm777, %v1701, 0
    %v1709 = vsel %vm807, %v1704, 0
    %1711 = vmatprep.subr.bf16.mxu0 0
    %1712 = vmatpush1.bf16.msra.mxu0 %v1709
    %1713 = vmatprep.subr.bf16.mxu0 0
    %1714 = vmatpush1.bf16.msra.mxu0 0
    %1715 = vmatprep.subr.bf16.mxu0 0
    %1716 = vmatpush1.bf16.msra.mxu0 0
    %1717 = vmatprep.subr.bf16.mxu0 0
    %1718 = vmatpush1.bf16.msra.mxu0 0
    %1719 = vmatprep.subr.bf16.mxu0 0
    %1720 = vmatpush1.bf16.msra.mxu0 0
    %1721 = vmatprep.subr.bf16.mxu0 0
    %1722 = vmatpush1.bf16.msra.mxu0 0
    %1723 = vmatprep.subr.bf16.mxu0 0
    %1724 = vmatpush1.bf16.msra.mxu0 0
    %1725 = vmatprep.subr.bf16.mxu0 0
    %1726 = vmatpush1.bf16.msra.mxu0 0
    %1727 = vmatprep.subr.bf16.mxu0 0
    %1728 = vmatpush1.bf16.msra.mxu0 0
    %1729 = vmatprep.subr.bf16.mxu0 0
    %1730 = vmatpush1.bf16.msra.mxu0 0
    %1731 = vmatprep.subr.bf16.mxu0 0
    %1732 = vmatpush1.bf16.msra.mxu0 0
    %1733 = vmatprep.subr.bf16.mxu0 0
    %1734 = vmatpush1.bf16.msra.mxu0 0
    %1735 = vmatprep.subr.bf16.mxu0 0
    %1736 = vmatpush1.bf16.msra.mxu0 0
    %1737 = vmatprep.subr.bf16.mxu0 0
    %1738 = vmatpush1.bf16.msra.mxu0 0
    %1739 = vmatprep.subr.bf16.mxu0 0
    %1740 = vmatpush1.bf16.msra.mxu0 0
    %1741 = vmatprep.subr.bf16.mxu0 0
    %1742 = vmatpush1.bf16.msra.mxu0 0
    %1743 = vmatprep.mubr.bf16.mxu0 0
    %1744 = vmatmul.mubr.bf16.gmra.mrb[0].mxu0 %v1706
    %v1745 = vpop.f32.mrb[0].mxu0
    %v1746 = vadd.f32 0.0, %v1745
    %v1747 = vpop.f32.mrb[0].mxu0
    %v1748 = vpop.f32.mrb[0].mxu0
    %v1749 = vpop.f32.mrb[0].mxu0
    %1750 = vdwg.mxu0
    %1751 = vrot.lane.b32.xlu0 %v679, 64
    %v1752 = vpop.permute.xlu0 %1751
    %v1754 = vsel %vm777, %v1702, 0
    %v1757 = vsel %vm807, %v1752, 0
    %1759 = vmatprep.subr.bf16.mxu0 0
    %1760 = vmatpush1.bf16.msra.mxu0 %v1757
    %1761 = vmatprep.subr.bf16.mxu0 0
    %1762 = vmatpush1.bf16.msra.mxu0 0
    %1763 = vmatprep.subr.bf16.mxu0 0
    %1764 = vmatpush1.bf16.msra.mxu0 0
    %1765 = vmatprep.subr.bf16.mxu0 0
    %1766 = vmatpush1.bf16.msra.mxu0 0
    %1767 = vmatprep.subr.bf16.mxu0 0
    %1768 = vmatpush1.bf16.msra.mxu0 0
    %1769 = vmatprep.subr.bf16.mxu0 0
    %1770 = vmatpush1.bf16.msra.mxu0 0
    %1771 = vmatprep.subr.bf16.mxu0 0
    %1772 = vmatpush1.bf16.msra.mxu0 0
    %1773 = vmatprep.subr.bf16.mxu0 0
    %1774 = vmatpush1.bf16.msra.mxu0 0
    %1775 = vmatprep.subr.bf16.mxu0 0
    %1776 = vmatpush1.bf16.msra.mxu0 0
    %1777 = vmatprep.subr.bf16.mxu0 0
    %1778 = vmatpush1.bf16.msra.mxu0 0
    %1779 = vmatprep.subr.bf16.mxu0 0
    %1780 = vmatpush1.bf16.msra.mxu0 0
    %1781 = vmatprep.subr.bf16.mxu0 0
    %1782 = vmatpush1.bf16.msra.mxu0 0
    %1783 = vmatprep.subr.bf16.mxu0 0
    %1784 = vmatpush1.bf16.msra.mxu0 0
    %1785 = vmatprep.subr.bf16.mxu0 0
    %1786 = vmatpush1.bf16.msra.mxu0 0
    %1787 = vmatprep.subr.bf16.mxu0 0
    %1788 = vmatpush1.bf16.msra.mxu0 0
    %1789 = vmatprep.subr.bf16.mxu0 0
    %1790 = vmatpush1.bf16.msra.mxu0 0
    %1791 = vmatprep.mubr.bf16.mxu0 0
    %1792 = vmatmul.mubr.bf16.gmra.mrb[0].mxu0 %v1754
    %v1793 = vpop.f32.mrb[0].mxu0
    %v1794 = vadd.f32 0.0, %v1793
    %v1795 = vpop.f32.mrb[0].mxu0
    %v1796 = vpop.f32.mrb[0].mxu0
    %v1797 = vpop.f32.mrb[0].mxu0
    %1798 = vdwg.mxu0
    %1799 = vrot.lane.b32.xlu0 %v674, 48
    %v1800 = vpop.permute.xlu0 %1799
    %1801 = vrot.lane.b32.xlu0 %v676, 48
    %v1802 = vpop.permute.xlu0 %1801
    %v1804 = vsel %vm680, %v1800, 0
    %v1807 = vsel %vm680, %v1802, 0
    %1809 = vmatprep.subr.bf16.mxu0 0
    %1810 = vmatpush1.bf16.xpose.msra.mxu0 %v1807
    %1811 = vmatprep.subr.bf16.mxu0 0
    %1812 = vmatpush1.bf16.xpose.msra.mxu0 0
    %1813 = vmatprep.subr.bf16.mxu0 0
    %1814 = vmatpush1.bf16.xpose.msra.mxu0 0
    %1815 = vmatprep.subr.bf16.mxu0 0
    %1816 = vmatpush1.bf16.xpose.msra.mxu0 0
    %1817 = vmatprep.subr.bf16.mxu0 0
    %1818 = vmatpush1.bf16.xpose.msra.mxu0 0
    %1819 = vmatprep.subr.bf16.mxu0 0
    %1820 = vmatpush1.bf16.xpose.msra.mxu0 0
    %1821 = vmatprep.subr.bf16.mxu0 0
    %1822 = vmatpush1.bf16.xpose.msra.mxu0 0
    %1823 = vmatprep.subr.bf16.mxu0 0
    %1824 = vmatpush1.bf16.xpose.msra.mxu0 0
    %1825 = vmatprep.subr.bf16.mxu0 0
    %1826 = vmatpush1.bf16.xpose.msra.mxu0 0
    %1827 = vmatprep.subr.bf16.mxu0 0
    %1828 = vmatpush1.bf16.xpose.msra.mxu0 0
    %1829 = vmatprep.subr.bf16.mxu0 0
    %1830 = vmatpush1.bf16.xpose.msra.mxu0 0
    %1831 = vmatprep.subr.bf16.mxu0 0
    %1832 = vmatpush1.bf16.xpose.msra.mxu0 0
    %1833 = vmatprep.subr.bf16.mxu0 0
    %1834 = vmatpush1.bf16.xpose.msra.mxu0 0
    %1835 = vmatprep.subr.bf16.mxu0 0
    %1836 = vmatpush1.bf16.xpose.msra.mxu0 0
    %1837 = vmatprep.subr.bf16.mxu0 0
    %1838 = vmatpush1.bf16.xpose.msra.mxu0 0
    %1839 = vmatprep.subr.bf16.mxu0 0
    %1840 = vmatpush1.bf16.xpose.msra.mxu0 0
    %1841 = vmatprep.mubr.bf16.mxu0 0
    %1842 = vmatmul.mubr.bf16.gmra.mrb[0].mxu0 %v1804
    %v1843 = vpop.f32.mrb[0].mxu0
    %v1844 = vadd.f32 0.0, %v1843
    %v1845 = vpop.f32.mrb[0].mxu0
    %v1846 = vpop.f32.mrb[0].mxu0
    %v1847 = vpop.f32.mrb[0].mxu0
    %1848 = vdwg.mxu0
    %1849 = vrot.lane.b32.xlu0 %v675, 48
    %v1850 = vpop.permute.xlu0 %1849
    %1851 = vrot.lane.b32.xlu0 %v677, 48
    %v1852 = vpop.permute.xlu0 %1851
    %v1854 = vsel %vm680, %v1850, 0
    %v1857 = vsel %vm680, %v1852, 0
    %1859 = vmatprep.subr.bf16.mxu0 0
    %1860 = vmatpush1.bf16.xpose.msra.mxu0 %v1857
    %1861 = vmatprep.subr.bf16.mxu0 0
    %1862 = vmatpush1.bf16.xpose.msra.mxu0 0
    %1863 = vmatprep.subr.bf16.mxu0 0
    %1864 = vmatpush1.bf16.xpose.msra.mxu0 0
    %1865 = vmatprep.subr.bf16.mxu0 0
    %1866 = vmatpush1.bf16.xpose.msra.mxu0 0
    %1867 = vmatprep.subr.bf16.mxu0 0
    %1868 = vmatpush1.bf16.xpose.msra.mxu0 0
    %1869 = vmatprep.subr.bf16.mxu0 0
    %1870 = vmatpush1.bf16.xpose.msra.mxu0 0
    %1871 = vmatprep.subr.bf16.mxu0 0
    %1872 = vmatpush1.bf16.xpose.msra.mxu0 0
    %1873 = vmatprep.subr.bf16.mxu0 0
    %1874 = vmatpush1.bf16.xpose.msra.mxu0 0
    %1875 = vmatprep.subr.bf16.mxu0 0
    %1876 = vmatpush1.bf16.xpose.msra.mxu0 0
    %1877 = vmatprep.subr.bf16.mxu0 0
    %1878 = vmatpush1.bf16.xpose.msra.mxu0 0
    %1879 = vmatprep.subr.bf16.mxu0 0
    %1880 = vmatpush1.bf16.xpose.msra.mxu0 0
    %1881 = vmatprep.subr.bf16.mxu0 0
    %1882 = vmatpush1.bf16.xpose.msra.mxu0 0
    %1883 = vmatprep.subr.bf16.mxu0 0
    %1884 = vmatpush1.bf16.xpose.msra.mxu0 0
    %1885 = vmatprep.subr.bf16.mxu0 0
    %1886 = vmatpush1.bf16.xpose.msra.mxu0 0
    %1887 = vmatprep.subr.bf16.mxu0 0
    %1888 = vmatpush1.bf16.xpose.msra.mxu0 0
    %1889 = vmatprep.subr.bf16.mxu0 0
    %1890 = vmatpush1.bf16.xpose.msra.mxu0 0
    %1891 = vmatprep.mubr.bf16.mxu0 0
    %1892 = vmatmul.mubr.bf16.gmra.mrb[0].mxu0 %v1854
    %v1893 = vpop.f32.mrb[0].mxu0
    %v1894 = vadd.f32 0.0, %v1893
    %v1895 = vpop.f32.mrb[0].mxu0
    %v1896 = vpop.f32.mrb[0].mxu0
    %v1897 = vpop.f32.mrb[0].mxu0
    %1898 = vdwg.mxu0
    %v1899 = vsel %vm773, %v1844, -1e+30
    %v1900 = vsel %vm774, %v1894, -1e+30
    %v1901 = vsel %vm777, %v1899, -inf
    %1902 = vmax.xlane.f32.xlu0 %v1901
    %v1903 = vpop.xlane.xlu0 %1902
    %v1904 = vsel %vm777, %v1900, -inf
    %1905 = vmax.xlane.f32.xlu0 %v1904
    %v1906 = vpop.xlane.xlu0 %1905
    %v1907 = vsub.f32 %v1899, %v1903
    %v1908 = vsub.f32 %v1900, %v1906
    %v1909 = vmul.f32 %v1907, 1.442695
    %v1910 = vpow.pop %v1909
    %v1911 = vmul.f32 %v1908, 1.442695
    %v1912 = vpow.pop %v1911
    %v1913 = vsel %vm777, %v1910, 0.0
    %1914 = vadd.xlane.f32.xlu0 %v1913
    %v1915 = vpop.xlane.xlu0 %1914
    %v1916 = vsel %vm777, %v1912, 0.0
    %1917 = vadd.xlane.f32.xlu0 %v1916
    %v1918 = vpop.xlane.xlu0 %1917
    %v1919 = vrcp.pop %v1915
    %v1920 = vrcp.pop %v1918
    %v1921 = vmul.f32 %v1910, %v1919
    %v1922 = vmul.f32 %v1912, %v1920
    %v1923 = vadd.f32 %v1921, %v383
    %v1924 = vadd.f32 %v1922, %v384
    %v1925 = vpack.c.bf16 %v1923, %v1923
    %v1926 = vpack.c.bf16 %v1924, %v1924
    %1927 = vrot.lane.b32.xlu0 %v678, 48
    %v1928 = vpop.permute.xlu0 %1927
    %v1930 = vsel %vm777, %v1925, 0
    %v1933 = vsel %vm807, %v1928, 0
    %1935 = vmatprep.subr.bf16.mxu0 0
    %1936 = vmatpush1.bf16.msra.mxu0 %v1933
    %1937 = vmatprep.subr.bf16.mxu0 0
    %1938 = vmatpush1.bf16.msra.mxu0 0
    %1939 = vmatprep.subr.bf16.mxu0 0
    %1940 = vmatpush1.bf16.msra.mxu0 0
    %1941 = vmatprep.subr.bf16.mxu0 0
    %1942 = vmatpush1.bf16.msra.mxu0 0
    %1943 = vmatprep.subr.bf16.mxu0 0
    %1944 = vmatpush1.bf16.msra.mxu0 0
    %1945 = vmatprep.subr.bf16.mxu0 0
    %1946 = vmatpush1.bf16.msra.mxu0 0
    %1947 = vmatprep.subr.bf16.mxu0 0
    %1948 = vmatpush1.bf16.msra.mxu0 0
    %1949 = vmatprep.subr.bf16.mxu0 0
    %1950 = vmatpush1.bf16.msra.mxu0 0
    %1951 = vmatprep.subr.bf16.mxu0 0
    %1952 = vmatpush1.bf16.msra.mxu0 0
    %1953 = vmatprep.subr.bf16.mxu0 0
    %1954 = vmatpush1.bf16.msra.mxu0 0
    %1955 = vmatprep.subr.bf16.mxu0 0
    %1956 = vmatpush1.bf16.msra.mxu0 0
    %1957 = vmatprep.subr.bf16.mxu0 0
    %1958 = vmatpush1.bf16.msra.mxu0 0
    %1959 = vmatprep.subr.bf16.mxu0 0
    %1960 = vmatpush1.bf16.msra.mxu0 0
    %1961 = vmatprep.subr.bf16.mxu0 0
    %1962 = vmatpush1.bf16.msra.mxu0 0
    %1963 = vmatprep.subr.bf16.mxu0 0
    %1964 = vmatpush1.bf16.msra.mxu0 0
    %1965 = vmatprep.subr.bf16.mxu0 0
    %1966 = vmatpush1.bf16.msra.mxu0 0
    %1967 = vmatprep.mubr.bf16.mxu0 0
    %1968 = vmatmul.mubr.bf16.gmra.mrb[0].mxu0 %v1930
    %v1969 = vpop.f32.mrb[0].mxu0
    %v1970 = vadd.f32 0.0, %v1969
    %v1971 = vpop.f32.mrb[0].mxu0
    %v1972 = vpop.f32.mrb[0].mxu0
    %v1973 = vpop.f32.mrb[0].mxu0
    %1974 = vdwg.mxu0
    %1975 = vrot.lane.b32.xlu0 %v679, 48
    %v1976 = vpop.permute.xlu0 %1975
    %v1978 = vsel %vm777, %v1926, 0
    %v1981 = vsel %vm807, %v1976, 0
    %1983 = vmatprep.subr.bf16.mxu0 0
    %1984 = vmatpush1.bf16.msra.mxu0 %v1981
    %1985 = vmatprep.subr.bf16.mxu0 0
    %1986 = vmatpush1.bf16.msra.mxu0 0
    %1987 = vmatprep.subr.bf16.mxu0 0
    %1988 = vmatpush1.bf16.msra.mxu0 0
    %1989 = vmatprep.subr.bf16.mxu0 0
    %1990 = vmatpush1.bf16.msra.mxu0 0
    %1991 = vmatprep.subr.bf16.mxu0 0
    %1992 = vmatpush1.bf16.msra.mxu0 0
    %1993 = vmatprep.subr.bf16.mxu0 0
    %1994 = vmatpush1.bf16.msra.mxu0 0
    %1995 = vmatprep.subr.bf16.mxu0 0
    %1996 = vmatpush1.bf16.msra.mxu0 0
    %1997 = vmatprep.subr.bf16.mxu0 0
    %1998 = vmatpush1.bf16.msra.mxu0 0
    %1999 = vmatprep.subr.bf16.mxu0 0
    %2000 = vmatpush1.bf16.msra.mxu0 0
    %2001 = vmatprep.subr.bf16.mxu0 0
    %2002 = vmatpush1.bf16.msra.mxu0 0
    %2003 = vmatprep.subr.bf16.mxu0 0
    %2004 = vmatpush1.bf16.msra.mxu0 0
    %2005 = vmatprep.subr.bf16.mxu0 0
    %2006 = vmatpush1.bf16.msra.mxu0 0
    %2007 = vmatprep.subr.bf16.mxu0 0
    %2008 = vmatpush1.bf16.msra.mxu0 0
    %2009 = vmatprep.subr.bf16.mxu0 0
    %2010 = vmatpush1.bf16.msra.mxu0 0
    %2011 = vmatprep.subr.bf16.mxu0 0
    %2012 = vmatpush1.bf16.msra.mxu0 0
    %2013 = vmatprep.subr.bf16.mxu0 0
    %2014 = vmatpush1.bf16.msra.mxu0 0
    %2015 = vmatprep.mubr.bf16.mxu0 0
    %2016 = vmatmul.mubr.bf16.gmra.mrb[0].mxu0 %v1978
    %v2017 = vpop.f32.mrb[0].mxu0
    %v2018 = vadd.f32 0.0, %v2017
    %v2019 = vpop.f32.mrb[0].mxu0
    %v2020 = vpop.f32.mrb[0].mxu0
    %v2021 = vpop.f32.mrb[0].mxu0
    %2022 = vdwg.mxu0
    %2025 = vrot.lane.b32.xlu0 %v1073, 16
    %v2026 = vpop.permute.xlu0 %2025
    %2027 = vrot.lane.b32.xlu0 %v1122, 16
    %v2028 = vpop.permute.xlu0 %2027
    %2033 = vrot.lane.b32.xlu0 %v1298, 32
    %v2034 = vpop.permute.xlu0 %2033
    %2035 = vrot.lane.b32.xlu0 %v1346, 32
    %v2036 = vpop.permute.xlu0 %2035
    %2041 = vrot.lane.b32.xlu0 %v1522, 48
    %v2042 = vpop.permute.xlu0 %2041
    %2043 = vrot.lane.b32.xlu0 %v1570, 48
    %v2044 = vpop.permute.xlu0 %2043
    %2049 = vrot.lane.b32.xlu0 %v1746, 64
    %v2050 = vpop.permute.xlu0 %2049
    %2051 = vrot.lane.b32.xlu0 %v1794, 64
    %v2052 = vpop.permute.xlu0 %2051
    %2057 = vrot.lane.b32.xlu0 %v1970, 80
    %v2058 = vpop.permute.xlu0 %2057
    %2059 = vrot.lane.b32.xlu0 %v2018, 80
    %v2060 = vpop.permute.xlu0 %2059
    %v2063 = vsel %vm680, %v846, %v2026
    %v2064 = vsel %vm680, %v892, %v2028
    %vm2065 = vcmask 261120
    %v2066 = vsel %vm2065, %v2063, %v2034
    %v2067 = vsel %vm2065, %v2064, %v2036
    %vm2068 = vcmask 392192
    %v2069 = vsel %vm2068, %v2066, %v2042
    %v2070 = vsel %vm2068, %v2067, %v2044
    %vm2071 = vcmask 523264
    %v2072 = vsel %vm2071, %v2069, %v2050
    %v2073 = vsel %vm2071, %v2070, %v2052
    %vm2074 = vcmask 654336
    %v2075 = vsel %vm2074, %v2072, %v2058
    %v2076 = vsel %vm2074, %v2073, %v2060
    %v2077 = vpack.c.bf16 %v2076, %v2075
    %v2078 = vld [vmem:[#allocation11] sm:$0xf]
    %v2079 = vld [vmem:[#allocation11 + $0x4] sm:$0xf]
    %v2080 = vld [vmem:[#allocation11 + $0x8] sm:$0xf]
    %v2081 = vld [vmem:[#allocation11 + $0xc] sm:$0xf]
    %v2082 = vld [vmem:[#allocation11 + $0x10] sm:$0xf]
    %v2083 = vld [vmem:[#allocation11 + $0x14] sm:$0xf]
    %v2084 = vld [vmem:[#allocation11 + $0x18] sm:$0xf]
    %v2085 = vld [vmem:[#allocation11 + $0x1c] sm:$0xf]
    %v2086 = vld [vmem:[#allocation11 + $0x20] sm:$0xf]
    %v2087 = vld [vmem:[#allocation11 + $0x24] sm:$0xf]
    %v2088 = vld [vmem:[#allocation11 + $0x28] sm:$0xf]
    %v2089 = vld [vmem:[#allocation11 + $0x2c] sm:$0xf]
    %v2102 = vunpack.c.l.b16 %v2078
    %v2103 = vunpack.c.l.b16 %v2079
    %v2104 = vunpack.c.l.b16 %v2080
    %v2105 = vunpack.c.l.b16 %v2081
    %v2106 = vunpack.c.l.b16 %v2082
    %v2107 = vunpack.c.l.b16 %v2083
    %v2108 = vunpack.c.l.b16 %v2084
    %v2109 = vunpack.c.l.b16 %v2085
    %v2110 = vunpack.c.l.b16 %v2086
    %v2111 = vunpack.c.l.b16 %v2087
    %v2112 = vunpack.c.l.b16 %v2088
    %v2113 = vunpack.c.l.b16 %v2089
    %v2114 = vpack.c.b16 %v2103, %v2102
    %v2115 = vpack.c.b16 %v2105, %v2104
    %v2116 = vpack.c.b16 %v2107, %v2106
    %v2117 = vpack.c.b16 %v2109, %v2108
    %v2118 = vpack.c.b16 %v2111, %v2110
    %v2119 = vpack.c.b16 %v2113, %v2112
    %vm2126 = vcmask 785408
    %v2128 = vsel %vm2126, %v2077, 0
    %2130 = vmatprep.subr.bf16.mxu0 0
    %2131 = vmatpush1.bf16.msra.mxu0 %v2114
    %2132 = vmatprep.subr.bf16.mxu0 0
    %2133 = vmatpush1.bf16.msra.mxu0 %v2115
    %2134 = vmatprep.subr.bf16.mxu0 0
    %2135 = vmatpush1.bf16.msra.mxu0 %v2116
    %2136 = vmatprep.subr.bf16.mxu0 0
    %2137 = vmatpush1.bf16.msra.mxu0 %v2117
    %2138 = vmatprep.subr.bf16.mxu0 0
    %2139 = vmatpush1.bf16.msra.mxu0 %v2118
    %2140 = vmatprep.subr.bf16.mxu0 0
    %2141 = vmatpush1.bf16.msra.mxu0 %v2119
    %2142 = vmatprep.subr.bf16.mxu0 0
    %2143 = vmatpush1.bf16.msra.mxu0 0
    %2144 = vmatprep.subr.bf16.mxu0 0
    %2145 = vmatpush1.bf16.msra.mxu0 0
    %2146 = vmatprep.subr.bf16.mxu0 0
    %2147 = vmatpush1.bf16.msra.mxu0 0
    %2148 = vmatprep.subr.bf16.mxu0 0
    %2149 = vmatpush1.bf16.msra.mxu0 0
    %2150 = vmatprep.subr.bf16.mxu0 0
    %2151 = vmatpush1.bf16.msra.mxu0 0
    %2152 = vmatprep.subr.bf16.mxu0 0
    %2153 = vmatpush1.bf16.msra.mxu0 0
    %2154 = vmatprep.subr.bf16.mxu0 0
    %2155 = vmatpush1.bf16.msra.mxu0 0
    %2156 = vmatprep.subr.bf16.mxu0 0
    %2157 = vmatpush1.bf16.msra.mxu0 0
    %2158 = vmatprep.subr.bf16.mxu0 0
    %2159 = vmatpush1.bf16.msra.mxu0 0
    %2160 = vmatprep.subr.bf16.mxu0 0
    %2161 = vmatpush1.bf16.msra.mxu0 0
    %2162 = vmatprep.mubr.bf16.mxu0 0
    %2163 = vmatmul.mubr.bf16.gmra.mrb[0].mxu0 %v2128
    %v2164 = vpop.f32.mrb[0].mxu0
    %v2165 = vadd.f32 0.0, %v2164
    %v2166 = vpop.f32.mrb[0].mxu0
    %v2167 = vpop.f32.mrb[0].mxu0
    %v2168 = vadd.f32 0.0, %v2167
    %v2169 = vpop.f32.mrb[0].mxu0
    %2170 = vdwg.mxu0
    %v2171 = vadd.f32 %v321, %v2165
    %v2172 = vadd.f32 %v324, %v2168
    %v2173 = vld [vmem:[%s9] sm:$0x1]
    %v2175 = vlaneseq
    %v2176 = vshrl.u32 %v2175, 7
    %v2177 = vsub.s32 0, %v2176
    %v2178 = vrot.slane %v2173, %v2177
    %v2180 = vadd.f32 %v2171, %v2178
    %v2181 = vadd.f32 %v2172, %v2178
    %v2182 = vld [vmem:[%s10] sm:$0x1]
    %v2183 = vld [vmem:[%s11] sm:$0x1]
    %2184 = vadd.xlane.f32.xlu0 %v2180
    %v2185 = vpop.xlane.xlu0 %2184
    %2186 = vadd.xlane.f32.xlu0 %v2181
    %v2187 = vpop.xlane.xlu0 %2186
    %v2188 = vmul.f32 %v2180, %v2180
    %v2189 = vmul.f32 %v2181, %v2181
    %2190 = vadd.xlane.f32.xlu0 %v2188
    %v2191 = vpop.xlane.xlu0 %2190
    %2192 = vadd.xlane.f32.xlu0 %v2189
    %v2193 = vpop.xlane.xlu0 %2192
    %v2194 = vmul.f32 %v2185, 0.012820513
    %v2195 = vmul.f32 %v2187, 0.012820513
    %v2196 = vmul.f32 %v2191, 0.012820513
    %v2197 = vmul.f32 %v2193, 0.012820513
    %v2198 = vmul.f32 %v2194, %v2194
    %v2199 = vmul.f32 %v2195, %v2195
    %v2200 = vsub.f32 %v2196, %v2198
    %v2201 = vsub.f32 %v2197, %v2199
    %v2202 = vsub.f32 %v2180, %v2194
    %v2203 = vsub.f32 %v2181, %v2195
    %v2204 = vadd.f32 %v2200, 1e-05
    %v2205 = vadd.f32 %v2201, 1e-05
    %v2206 = vrsqrt.pop %v2204
    %v2207 = vrsqrt.pop %v2205
    %v2208 = vmul.f32 %v2202, %v2206
    %v2209 = vmul.f32 %v2203, %v2207
    %v2211 = vlaneseq
    %v2212 = vshrl.u32 %v2211, 7
    %v2213 = vsub.s32 0, %v2212
    %v2214 = vrot.slane %v2182, %v2213
    %v2216 = vmul.f32 %v2208, %v2214
    %v2217 = vmul.f32 %v2209, %v2214
    %v2219 = vlaneseq
    %v2220 = vshrl.u32 %v2219, 7
    %v2221 = vsub.s32 0, %v2220
    %v2222 = vrot.slane %v2183, %v2221
    %v2224 = vadd.f32 %v2216, %v2222
    %v2225 = vadd.f32 %v2217, %v2222
    %v2226 = vpack.c.bf16 %v2225, %v2224
    %v2227 = vld [vmem:[#allocation13] sm:$0xff]
    %v2228 = vld [vmem:[#allocation13 + $0x8] sm:$0xf]
    %v2229 = vld [vmem:[#allocation13 + $0xc] sm:$0xff]
    %v2230 = vld [vmem:[#allocation13 + $0x14] sm:$0xf]
    %v2231 = vld [vmem:[#allocation13 + $0x18] sm:$0xff]
    %v2232 = vld [vmem:[#allocation13 + $0x20] sm:$0xf]
    %v2233 = vld [vmem:[#allocation13 + $0x24] sm:$0xff]
    %v2234 = vld [vmem:[#allocation13 + $0x2c] sm:$0xf]
    %v2235 = vld [vmem:[#allocation13 + $0x30] sm:$0xff]
    %v2236 = vld [vmem:[#allocation13 + $0x38] sm:$0xf]
    %v2237 = vld [vmem:[#allocation13 + $0x3c] sm:$0xff]
    %v2238 = vld [vmem:[#allocation13 + $0x44] sm:$0xf]
    %v2239 = vld [vmem:[#allocation13 + $0x48] sm:$0xff]
    %v2240 = vld [vmem:[#allocation13 + $0x50] sm:$0xf]
    %v2241 = vld [vmem:[#allocation13 + $0x54] sm:$0xff]
    %v2242 = vld [vmem:[#allocation13 + $0x5c] sm:$0xf]
    %v2243 = vld [vmem:[#allocation13 + $0x60] sm:$0xff]
    %v2244 = vld [vmem:[#allocation13 + $0x68] sm:$0xf]
    %v2245 = vld [vmem:[#allocation13 + $0x6c] sm:$0xff]
    %v2246 = vld [vmem:[#allocation13 + $0x74] sm:$0xf]
    %v2247 = vld [vmem:[#allocation13 + $0x78] sm:$0xff]
    %v2248 = vld [vmem:[#allocation13 + $0x80] sm:$0xf]
    %v2249 = vld [vmem:[#allocation13 + $0x84] sm:$0xff]
    %v2250 = vld [vmem:[#allocation13 + $0x8c] sm:$0xf]
    %v2251 = vld [vmem:[#allocation13 + $0x90] sm:$0xff]
    %v2252 = vld [vmem:[#allocation13 + $0x98] sm:$0xf]
    %v2253 = vld [vmem:[#allocation13 + $0x9c] sm:$0xff]
    %v2254 = vld [vmem:[#allocation13 + $0xa4] sm:$0xf]
    %v2255 = vld [vmem:[#allocation13 + $0xa8] sm:$0xff]
    %v2256 = vld [vmem:[#allocation13 + $0xb0] sm:$0xf]
    %v2257 = vld [vmem:[#allocation13 + $0xb4] sm:$0xff]
    %v2258 = vld [vmem:[#allocation13 + $0xbc] sm:$0xf]
    %v2259 = vld [vmem:[%s13] sm:$0x7]
    %v2261 = vlaneseq
    %v2262 = vshrl.u32 %v2261, 7
    %v2263 = vsub.s32 0, %v2262
    %v2264 = vrot.slane %v2259, %v2263
    %v2265 = vlaneseq
    %v2266 = vshrl.u32 %v2265, 7
    %v2267 = vsub.s32 1, %v2266
    %v2268 = vrot.slane %v2259, %v2267
    %v2269 = vlaneseq
    %v2270 = vshrl.u32 %v2269, 7
    %v2271 = vsub.s32 2, %v2270
    %v2272 = vrot.slane %v2259, %v2271
    %v2308 = vunpack.c.l.b16 %v2227
    %v2309 = vunpack.c.h.b16 %v2227
    %v2310 = vunpack.c.l.b16 %v2228
    %v2311 = vunpack.c.l.b16 %v2229
    %v2312 = vunpack.c.h.b16 %v2229
    %v2313 = vunpack.c.l.b16 %v2230
    %v2314 = vunpack.c.l.b16 %v2231
    %v2315 = vunpack.c.h.b16 %v2231
    %v2316 = vunpack.c.l.b16 %v2232
    %v2317 = vunpack.c.l.b16 %v2233
    %v2318 = vunpack.c.h.b16 %v2233
    %v2319 = vunpack.c.l.b16 %v2234
    %v2320 = vunpack.c.l.b16 %v2235
    %v2321 = vunpack.c.h.b16 %v2235
    %v2322 = vunpack.c.l.b16 %v2236
    %v2323 = vunpack.c.l.b16 %v2237
    %v2324 = vunpack.c.h.b16 %v2237
    %v2325 = vunpack.c.l.b16 %v2238
    %v2326 = vunpack.c.l.b16 %v2239
    %v2327 = vunpack.c.h.b16 %v2239
    %v2328 = vunpack.c.l.b16 %v2240
    %v2329 = vunpack.c.l.b16 %v2241
    %v2330 = vunpack.c.h.b16 %v2241
    %v2331 = vunpack.c.l.b16 %v2242
    %v2332 = vunpack.c.l.b16 %v2243
    %v2333 = vunpack.c.h.b16 %v2243
    %v2334 = vunpack.c.l.b16 %v2244
    %v2335 = vunpack.c.l.b16 %v2245
    %v2336 = vunpack.c.h.b16 %v2245
    %v2337 = vunpack.c.l.b16 %v2246
    %v2338 = vunpack.c.l.b16 %v2247
    %v2339 = vunpack.c.h.b16 %v2247
    %v2340 = vunpack.c.l.b16 %v2248
    %v2341 = vunpack.c.l.b16 %v2249
    %v2342 = vunpack.c.h.b16 %v2249
    %v2343 = vunpack.c.l.b16 %v2250
    %v2344 = vunpack.c.l.b16 %v2251
    %v2345 = vunpack.c.h.b16 %v2251
    %v2346 = vunpack.c.l.b16 %v2252
    %v2347 = vunpack.c.l.b16 %v2253
    %v2348 = vunpack.c.h.b16 %v2253
    %v2349 = vunpack.c.l.b16 %v2254
    %v2350 = vunpack.c.l.b16 %v2255
    %v2351 = vunpack.c.h.b16 %v2255
    %v2352 = vunpack.c.l.b16 %v2256
    %v2353 = vunpack.c.l.b16 %v2257
    %v2354 = vunpack.c.h.b16 %v2257
    %v2355 = vunpack.c.l.b16 %v2258
    %v2356 = vpack.c.b16 %v2311, %v2308
    %v2357 = vpack.c.b16 %v2312, %v2309
    %v2358 = vpack.c.b16 %v2313, %v2310
    %v2359 = vpack.c.b16 %v2317, %v2314
    %v2360 = vpack.c.b16 %v2318, %v2315
    %v2361 = vpack.c.b16 %v2319, %v2316
    %v2362 = vpack.c.b16 %v2323, %v2320
    %v2363 = vpack.c.b16 %v2324, %v2321
    %v2364 = vpack.c.b16 %v2325, %v2322
    %v2365 = vpack.c.b16 %v2329, %v2326
    %v2366 = vpack.c.b16 %v2330, %v2327
    %v2367 = vpack.c.b16 %v2331, %v2328
    %v2368 = vpack.c.b16 %v2335, %v2332
    %v2369 = vpack.c.b16 %v2336, %v2333
    %v2370 = vpack.c.b16 %v2337, %v2334
    %v2371 = vpack.c.b16 %v2341, %v2338
    %v2372 = vpack.c.b16 %v2342, %v2339
    %v2373 = vpack.c.b16 %v2343, %v2340
    %v2374 = vpack.c.b16 %v2347, %v2344
    %v2375 = vpack.c.b16 %v2348, %v2345
    %v2376 = vpack.c.b16 %v2349, %v2346
    %v2377 = vpack.c.b16 %v2353, %v2350
    %v2378 = vpack.c.b16 %v2354, %v2351
    %v2379 = vpack.c.b16 %v2355, %v2352
    %2404 = vmatprep.subr.bf16.mxu0 %v2357
    %2405 = vmatpush1.bf16.msra.mxu0 %v2356
    %2406 = vmatprep.subr.bf16.mxu0 %v2360
    %2407 = vmatpush1.bf16.msra.mxu0 %v2359
    %2408 = vmatprep.subr.bf16.mxu0 %v2363
    %2409 = vmatpush1.bf16.msra.mxu0 %v2362
    %2410 = vmatprep.subr.bf16.mxu0 %v2366
    %2411 = vmatpush1.bf16.msra.mxu0 %v2365
    %2412 = vmatprep.subr.bf16.mxu0 %v2369
    %2413 = vmatpush1.bf16.msra.mxu0 %v2368
    %2414 = vmatprep.subr.bf16.mxu0 %v2372
    %2415 = vmatpush1.bf16.msra.mxu0 %v2371
    %2416 = vmatprep.subr.bf16.mxu0 %v2375
    %2417 = vmatpush1.bf16.msra.mxu0 %v2374
    %2418 = vmatprep.subr.bf16.mxu0 %v2378
    %2419 = vmatpush1.bf16.msra.mxu0 %v2377
    %2420 = vmatprep.subr.bf16.mxu0 0
    %2421 = vmatpush1.bf16.msra.mxu0 0
    %2422 = vmatprep.subr.bf16.mxu0 0
    %2423 = vmatpush1.bf16.msra.mxu0 0
    %2424 = vmatprep.subr.bf16.mxu0 0
    %2425 = vmatpush1.bf16.msra.mxu0 0
    %2426 = vmatprep.subr.bf16.mxu0 0
    %2427 = vmatpush1.bf16.msra.mxu0 0
    %2428 = vmatprep.subr.bf16.mxu0 0
    %2429 = vmatpush1.bf16.msra.mxu0 0
    %2430 = vmatprep.subr.bf16.mxu0 0
    %2431 = vmatpush1.bf16.msra.mxu0 0
    %2432 = vmatprep.subr.bf16.mxu0 0
    %2433 = vmatpush1.bf16.msra.mxu0 0
    %2434 = vmatprep.subr.bf16.mxu0 0
    %2435 = vmatpush1.bf16.msra.mxu0 0
    %2436 = vmatprep.mubr.bf16.mxu0 0
    %2437 = vmatmul.mubr.bf16.gmra.mrb[0].mxu0 %v2226
    %v2438 = vpop.f32.mrb[0].mxu0
    %v2439 = vadd.f32 %v2264, %v2438
    %v2440 = vpop.f32.mrb[0].mxu0
    %v2441 = vadd.f32 %v2268, %v2440
    %v2442 = vpop.f32.mrb[0].mxu0
    %v2443 = vadd.f32 %v2264, %v2442
    %v2444 = vpop.f32.mrb[0].mxu0
    %v2445 = vadd.f32 %v2268, %v2444
    %2446 = vdwg.mxu0
    %2447 = vmatprep.subr.bf16.mxu0 0
    %2448 = vmatpush1.bf16.msra.mxu0 %v2358
    %2449 = vmatprep.subr.bf16.mxu0 0
    %2450 = vmatpush1.bf16.msra.mxu0 %v2361
    %2451 = vmatprep.subr.bf16.mxu0 0
    %2452 = vmatpush1.bf16.msra.mxu0 %v2364
    %2453 = vmatprep.subr.bf16.mxu0 0
    %2454 = vmatpush1.bf16.msra.mxu0 %v2367
    %2455 = vmatprep.subr.bf16.mxu0 0
    %2456 = vmatpush1.bf16.msra.mxu0 %v2370
    %2457 = vmatprep.subr.bf16.mxu0 0
    %2458 = vmatpush1.bf16.msra.mxu0 %v2373
    %2459 = vmatprep.subr.bf16.mxu0 0
    %2460 = vmatpush1.bf16.msra.mxu0 %v2376
    %2461 = vmatprep.subr.bf16.mxu0 0
    %2462 = vmatpush1.bf16.msra.mxu0 %v2379
    %2463 = vmatprep.subr.bf16.mxu0 0
    %2464 = vmatpush1.bf16.msra.mxu0 0
    %2465 = vmatprep.subr.bf16.mxu0 0
    %2466 = vmatpush1.bf16.msra.mxu0 0
    %2467 = vmatprep.subr.bf16.mxu0 0
    %2468 = vmatpush1.bf16.msra.mxu0 0
    %2469 = vmatprep.subr.bf16.mxu0 0
    %2470 = vmatpush1.bf16.msra.mxu0 0
    %2471 = vmatprep.subr.bf16.mxu0 0
    %2472 = vmatpush1.bf16.msra.mxu0 0
    %2473 = vmatprep.subr.bf16.mxu0 0
    %2474 = vmatpush1.bf16.msra.mxu0 0
    %2475 = vmatprep.subr.bf16.mxu0 0
    %2476 = vmatpush1.bf16.msra.mxu0 0
    %2477 = vmatprep.subr.bf16.mxu0 0
    %2478 = vmatpush1.bf16.msra.mxu0 0
    %2479 = vmatprep.mubr.bf16.mxu0 0
    %2480 = vmatmul.mubr.bf16.gmra.mrb[0].mxu0 %v2226
    %v2481 = vpop.f32.mrb[0].mxu0
    %v2482 = vadd.f32 %v2272, %v2481
    %v2483 = vpop.f32.mrb[0].mxu0
    %v2484 = vpop.f32.mrb[0].mxu0
    %v2485 = vadd.f32 %v2272, %v2484
    %v2486 = vpop.f32.mrb[0].mxu0
    %2487 = vdwg.mxu0
    %v2488 = vmul.f32 %v2439, 0.5
    %v2489 = vmul.f32 %v2441, 0.5
    %v2490 = vmul.f32 %v2482, 0.5
    %v2491 = vmul.f32 %v2443, 0.5
    %v2492 = vmul.f32 %v2445, 0.5
    %v2493 = vmul.f32 %v2485, 0.5
    %v2494 = vmul.f32 %v2439, 0.044715
    %v2495 = vmul.f32 %v2441, 0.044715
    %v2496 = vmul.f32 %v2482, 0.044715
    %v2497 = vmul.f32 %v2443, 0.044715
    %v2498 = vmul.f32 %v2445, 0.044715
    %v2499 = vmul.f32 %v2485, 0.044715
    %v2500 = vmul.f32 %v2494, %v2439
    %v2501 = vmul.f32 %v2495, %v2441
    %v2502 = vmul.f32 %v2496, %v2482
    %v2503 = vmul.f32 %v2497, %v2443
    %v2504 = vmul.f32 %v2498, %v2445
    %v2505 = vmul.f32 %v2499, %v2485
    %v2506 = vmul.f32 %v2500, %v2439
    %v2507 = vmul.f32 %v2501, %v2441
    %v2508 = vmul.f32 %v2502, %v2482
    %v2509 = vmul.f32 %v2503, %v2443
    %v2510 = vmul.f32 %v2504, %v2445
    %v2511 = vmul.f32 %v2505, %v2485
    %v2512 = vadd.f32 %v2439, %v2506
    %v2513 = vadd.f32 %v2441, %v2507
    %v2514 = vadd.f32 %v2482, %v2508
    %v2515 = vadd.f32 %v2443, %v2509
    %v2516 = vadd.f32 %v2445, %v2510
    %v2517 = vadd.f32 %v2485, %v2511
    %v2518 = vmul.f32 %v2512, 0.7978846
    %v2519 = vmul.f32 %v2513, 0.7978846
    %v2520 = vmul.f32 %v2514, 0.7978846
    %v2521 = vmul.f32 %v2515, 0.7978846
    %v2522 = vmul.f32 %v2516, 0.7978846
    %v2523 = vmul.f32 %v2517, 0.7978846
    %v2524 = vtanh.pop %v2518
    %v2525 = vtanh.pop %v2519
    %v2526 = vtanh.pop %v2520
    %v2527 = vtanh.pop %v2521
    %v2528 = vtanh.pop %v2522
    %v2529 = vtanh.pop %v2523
    %v2530 = vadd.f32 %v2524, 1.0
    %v2531 = vadd.f32 %v2525, 1.0
    %v2532 = vadd.f32 %v2526, 1.0
    %v2533 = vadd.f32 %v2527, 1.0
    %v2534 = vadd.f32 %v2528, 1.0
    %v2535 = vadd.f32 %v2529, 1.0
    %v2536 = vmul.f32 %v2488, %v2530
    %v2537 = vmul.f32 %v2489, %v2531
    %v2538 = vmul.f32 %v2490, %v2532
    %v2539 = vmul.f32 %v2491, %v2533
    %v2540 = vmul.f32 %v2492, %v2534
    %v2541 = vmul.f32 %v2493, %v2535
    %v2542 = vpack.c.bf16 %v2539, %v2536
    %v2543 = vpack.c.bf16 %v2540, %v2537
    %v2544 = vpack.c.bf16 %v2541, %v2538
    %v2545 = vld [vmem:[#allocation14] sm:$0xf]
    %v2546 = vld [vmem:[#allocation14 + $0x4] sm:$0xf]
    %v2547 = vld [vmem:[#allocation14 + $0x8] sm:$0xf]
    %v2548 = vld [vmem:[#allocation14 + $0xc] sm:$0xf]
    %v2549 = vld [vmem:[#allocation14 + $0x10] sm:$0xf]
    %v2550 = vld [vmem:[#allocation14 + $0x14] sm:$0xf]
    %v2551 = vld [vmem:[#allocation14 + $0x18] sm:$0xf]
    %v2552 = vld [vmem:[#allocation14 + $0x1c] sm:$0xf]
    %v2553 = vld [vmem:[#allocation14 + $0x20] sm:$0xf]
    %v2554 = vld [vmem:[#allocation14 + $0x24] sm:$0xf]
    %v2555 = vld [vmem:[#allocation14 + $0x28] sm:$0xf]
    %v2556 = vld [vmem:[#allocation14 + $0x2c] sm:$0xf]
    %v2557 = vld [vmem:[#allocation14 + $0x30] sm:$0xf]
    %v2558 = vld [vmem:[#allocation14 + $0x34] sm:$0xf]
    %v2559 = vld [vmem:[#allocation14 + $0x38] sm:$0xf]
    %v2560 = vld [vmem:[#allocation14 + $0x3c] sm:$0xf]
    %v2561 = vld [vmem:[#allocation14 + $0x40] sm:$0xf]
    %v2562 = vld [vmem:[#allocation14 + $0x44] sm:$0xf]
    %v2563 = vld [vmem:[#allocation14 + $0x48] sm:$0xf]
    %v2564 = vld [vmem:[#allocation14 + $0x4c] sm:$0xf]
    %v2565 = vld [vmem:[#allocation14 + $0x50] sm:$0xf]
    %v2566 = vld [vmem:[#allocation14 + $0x54] sm:$0xf]
    %v2567 = vld [vmem:[#allocation14 + $0x58] sm:$0xf]
    %v2568 = vld [vmem:[#allocation14 + $0x5c] sm:$0xf]
    %v2569 = vld [vmem:[#allocation14 + $0x60] sm:$0xf]
    %v2570 = vld [vmem:[#allocation14 + $0x64] sm:$0xf]
    %v2571 = vld [vmem:[#allocation14 + $0x68] sm:$0xf]
    %v2572 = vld [vmem:[#allocation14 + $0x6c] sm:$0xf]
    %v2573 = vld [vmem:[#allocation14 + $0x70] sm:$0xf]
    %v2574 = vld [vmem:[#allocation14 + $0x74] sm:$0xf]
    %v2575 = vld [vmem:[#allocation14 + $0x78] sm:$0xf]
    %v2576 = vld [vmem:[#allocation14 + $0x7c] sm:$0xf]
    %v2577 = vld [vmem:[#allocation14 + $0x80] sm:$0xf]
    %v2578 = vld [vmem:[#allocation14 + $0x84] sm:$0xf]
    %v2579 = vld [vmem:[#allocation14 + $0x88] sm:$0xf]
    %v2580 = vld [vmem:[#allocation14 + $0x8c] sm:$0xf]
    %v2581 = vld [vmem:[#allocation14 + $0x90] sm:$0xf]
    %v2582 = vld [vmem:[#allocation14 + $0x94] sm:$0xf]
    %v2583 = vld [vmem:[#allocation14 + $0x98] sm:$0xf]
    %v2584 = vld [vmem:[#allocation14 + $0x9c] sm:$0xf]
    %v2585 = vld [vmem:[#allocation14 + $0xa0] sm:$0xf]
    %v2586 = vld [vmem:[#allocation14 + $0xa4] sm:$0xf]
    %v2587 = vld [vmem:[#allocation14 + $0xa8] sm:$0xf]
    %v2588 = vld [vmem:[#allocation14 + $0xac] sm:$0xf]
    %v2589 = vld [vmem:[#allocation14 + $0xb0] sm:$0xf]
    %v2590 = vld [vmem:[#allocation14 + $0xb4] sm:$0xf]
    %v2591 = vld [vmem:[#allocation14 + $0xb8] sm:$0xf]
    %v2592 = vld [vmem:[#allocation14 + $0xbc] sm:$0xf]
    %v2593 = vld [vmem:[%s15] sm:$0x1]
    %v2595 = vlaneseq
    %v2596 = vshrl.u32 %v2595, 7
    %v2597 = vsub.s32 0, %v2596
    %v2598 = vrot.slane %v2593, %v2597
    %v2648 = vunpack.c.l.b16 %v2545
    %v2649 = vunpack.c.l.b16 %v2546
    %v2650 = vunpack.c.l.b16 %v2547
    %v2651 = vunpack.c.l.b16 %v2548
    %v2652 = vunpack.c.l.b16 %v2549
    %v2653 = vunpack.c.l.b16 %v2550
    %v2654 = vunpack.c.l.b16 %v2551
    %v2655 = vunpack.c.l.b16 %v2552
    %v2656 = vunpack.c.l.b16 %v2553
    %v2657 = vunpack.c.l.b16 %v2554
    %v2658 = vunpack.c.l.b16 %v2555
    %v2659 = vunpack.c.l.b16 %v2556
    %v2660 = vunpack.c.l.b16 %v2557
    %v2661 = vunpack.c.l.b16 %v2558
    %v2662 = vunpack.c.l.b16 %v2559
    %v2663 = vunpack.c.l.b16 %v2560
    %v2664 = vunpack.c.l.b16 %v2561
    %v2665 = vunpack.c.l.b16 %v2562
    %v2666 = vunpack.c.l.b16 %v2563
    %v2667 = vunpack.c.l.b16 %v2564
    %v2668 = vunpack.c.l.b16 %v2565
    %v2669 = vunpack.c.l.b16 %v2566
    %v2670 = vunpack.c.l.b16 %v2567
    %v2671 = vunpack.c.l.b16 %v2568
    %v2672 = vunpack.c.l.b16 %v2569
    %v2673 = vunpack.c.l.b16 %v2570
    %v2674 = vunpack.c.l.b16 %v2571
    %v2675 = vunpack.c.l.b16 %v2572
    %v2676 = vunpack.c.l.b16 %v2573
    %v2677 = vunpack.c.l.b16 %v2574
    %v2678 = vunpack.c.l.b16 %v2575
    %v2679 = vunpack.c.l.b16 %v2576
    %v2680 = vunpack.c.l.b16 %v2577
    %v2681 = vunpack.c.l.b16 %v2578
    %v2682 = vunpack.c.l.b16 %v2579
    %v2683 = vunpack.c.l.b16 %v2580
    %v2684 = vunpack.c.l.b16 %v2581
    %v2685 = vunpack.c.l.b16 %v2582
    %v2686 = vunpack.c.l.b16 %v2583
    %v2687 = vunpack.c.l.b16 %v2584
    %v2688 = vunpack.c.l.b16 %v2585
    %v2689 = vunpack.c.l.b16 %v2586
    %v2690 = vunpack.c.l.b16 %v2587
    %v2691 = vunpack.c.l.b16 %v2588
    %v2692 = vunpack.c.l.b16 %v2589
    %v2693 = vunpack.c.l.b16 %v2590
    %v2694 = vunpack.c.l.b16 %v2591
    %v2695 = vunpack.c.l.b16 %v2592
    %v2696 = vpack.c.b16 %v2649, %v2648
    %v2697 = vpack.c.b16 %v2651, %v2650
    %v2698 = vpack.c.b16 %v2653, %v2652
    %v2699 = vpack.c.b16 %v2655, %v2654
    %v2700 = vpack.c.b16 %v2657, %v2656
    %v2701 = vpack.c.b16 %v2659, %v2658
    %v2702 = vpack.c.b16 %v2661, %v2660
    %v2703 = vpack.c.b16 %v2663, %v2662
    %v2704 = vpack.c.b16 %v2665, %v2664
    %v2705 = vpack.c.b16 %v2667, %v2666
    %v2706 = vpack.c.b16 %v2669, %v2668
    %v2707 = vpack.c.b16 %v2671, %v2670
    %v2708 = vpack.c.b16 %v2673, %v2672
    %v2709 = vpack.c.b16 %v2675, %v2674
    %v2710 = vpack.c.b16 %v2677, %v2676
    %v2711 = vpack.c.b16 %v2679, %v2678
    %v2712 = vpack.c.b16 %v2681, %v2680
    %v2713 = vpack.c.b16 %v2683, %v2682
    %v2714 = vpack.c.b16 %v2685, %v2684
    %v2715 = vpack.c.b16 %v2687, %v2686
    %v2716 = vpack.c.b16 %v2689, %v2688
    %v2717 = vpack.c.b16 %v2691, %v2690
    %v2718 = vpack.c.b16 %v2693, %v2692
    %v2719 = vpack.c.b16 %v2695, %v2694
    %2744 = vmatprep.subr.bf16.mxu0 0
    %2745 = vmatpush1.bf16.msra.mxu0 %v2696
    %2746 = vmatprep.subr.bf16.mxu0 0
    %2747 = vmatpush1.bf16.msra.mxu0 %v2697
    %2748 = vmatprep.subr.bf16.mxu0 0
    %2749 = vmatpush1.bf16.msra.mxu0 %v2698
    %2750 = vmatprep.subr.bf16.mxu0 0
    %2751 = vmatpush1.bf16.msra.mxu0 %v2699
    %2752 = vmatprep.subr.bf16.mxu0 0
    %2753 = vmatpush1.bf16.msra.mxu0 %v2700
    %2754 = vmatprep.subr.bf16.mxu0 0
    %2755 = vmatpush1.bf16.msra.mxu0 %v2701
    %2756 = vmatprep.subr.bf16.mxu0 0
    %2757 = vmatpush1.bf16.msra.mxu0 %v2702
    %2758 = vmatprep.subr.bf16.mxu0 0
    %2759 = vmatpush1.bf16.msra.mxu0 %v2703
    %2760 = vmatprep.subr.bf16.mxu0 0
    %2761 = vmatpush1.bf16.msra.mxu0 %v2704
    %2762 = vmatprep.subr.bf16.mxu0 0
    %2763 = vmatpush1.bf16.msra.mxu0 %v2705
    %2764 = vmatprep.subr.bf16.mxu0 0
    %2765 = vmatpush1.bf16.msra.mxu0 %v2706
    %2766 = vmatprep.subr.bf16.mxu0 0
    %2767 = vmatpush1.bf16.msra.mxu0 %v2707
    %2768 = vmatprep.subr.bf16.mxu0 0
    %2769 = vmatpush1.bf16.msra.mxu0 %v2708
    %2770 = vmatprep.subr.bf16.mxu0 0
    %2771 = vmatpush1.bf16.msra.mxu0 %v2709
    %2772 = vmatprep.subr.bf16.mxu0 0
    %2773 = vmatpush1.bf16.msra.mxu0 %v2710
    %2774 = vmatprep.subr.bf16.mxu0 0
    %2775 = vmatpush1.bf16.msra.mxu0 %v2711
    %2776 = vmatprep.mubr.bf16.mxu0 %v2543
    %2777 = vmatmul.mubr.bf16.gmra.mrb[0].mxu0 %v2542
    %v2778 = vpop.f32.mrb[0].mxu0
    %v2779 = vadd.f32 %v2598, %v2778
    %v2780 = vpop.f32.mrb[0].mxu0
    %v2781 = vpop.f32.mrb[0].mxu0
    %v2782 = vadd.f32 %v2598, %v2781
    %v2783 = vpop.f32.mrb[0].mxu0
    %2784 = vdwg.mxu0
    %2785 = vmatprep.subr.bf16.mxu0 0
    %2786 = vmatpush1.bf16.msra.mxu0 %v2712
    %2787 = vmatprep.subr.bf16.mxu0 0
    %2788 = vmatpush1.bf16.msra.mxu0 %v2713
    %2789 = vmatprep.subr.bf16.mxu0 0
    %2790 = vmatpush1.bf16.msra.mxu0 %v2714
    %2791 = vmatprep.subr.bf16.mxu0 0
    %2792 = vmatpush1.bf16.msra.mxu0 %v2715
    %2793 = vmatprep.subr.bf16.mxu0 0
    %2794 = vmatpush1.bf16.msra.mxu0 %v2716
    %2795 = vmatprep.subr.bf16.mxu0 0
    %2796 = vmatpush1.bf16.msra.mxu0 %v2717
    %2797 = vmatprep.subr.bf16.mxu0 0
    %2798 = vmatpush1.bf16.msra.mxu0 %v2718
    %2799 = vmatprep.subr.bf16.mxu0 0
    %2800 = vmatpush1.bf16.msra.mxu0 %v2719
    %2801 = vmatprep.subr.bf16.mxu0 0
    %2802 = vmatpush1.bf16.msra.mxu0 0
    %2803 = vmatprep.subr.bf16.mxu0 0
    %2804 = vmatpush1.bf16.msra.mxu0 0
    %2805 = vmatprep.subr.bf16.mxu0 0
    %2806 = vmatpush1.bf16.msra.mxu0 0
    %2807 = vmatprep.subr.bf16.mxu0 0
    %2808 = vmatpush1.bf16.msra.mxu0 0
    %2809 = vmatprep.subr.bf16.mxu0 0
    %2810 = vmatpush1.bf16.msra.mxu0 0
    %2811 = vmatprep.subr.bf16.mxu0 0
    %2812 = vmatpush1.bf16.msra.mxu0 0
    %2813 = vmatprep.subr.bf16.mxu0 0
    %2814 = vmatpush1.bf16.msra.mxu0 0
    %2815 = vmatprep.subr.bf16.mxu0 0
    %2816 = vmatpush1.bf16.msra.mxu0 0
    %2817 = vmatprep.mubr.bf16.mxu0 0
    %2818 = vmatmul.mubr.bf16.gmra.mrb[0].mxu0 %v2544
    %v2819 = vpop.f32.mrb[0].mxu0
    %v2820 = vadd.f32 %v2779, %v2819
    %v2821 = vpop.f32.mrb[0].mxu0
    %v2822 = vpop.f32.mrb[0].mxu0
    %v2823 = vadd.f32 %v2782, %v2822
    %v2824 = vpop.f32.mrb[0].mxu0
    %2825 = vdwg.mxu0
    %v2826 = vadd.f32 %v2180, %v2820
    %v2827 = vadd.f32 %v2181, %v2823
    %v2828 = vld [vmem:[%s16] sm:$0x1]
    %v2829 = vld [vmem:[%s17] sm:$0x1]
    %2830 = vadd.xlane.f32.xlu0 %v2826
    %v2831 = vpop.xlane.xlu0 %2830
    %2832 = vadd.xlane.f32.xlu0 %v2827
    %v2833 = vpop.xlane.xlu0 %2832
    %v2834 = vmul.f32 %v2826, %v2826
    %v2835 = vmul.f32 %v2827, %v2827
    %2836 = vadd.xlane.f32.xlu0 %v2834
    %v2837 = vpop.xlane.xlu0 %2836
    %2838 = vadd.xlane.f32.xlu0 %v2835
    %v2839 = vpop.xlane.xlu0 %2838
    %v2840 = vmul.f32 %v2831, 0.012820513
    %v2841 = vmul.f32 %v2833, 0.012820513
    %v2842 = vmul.f32 %v2837, 0.012820513
    %v2843 = vmul.f32 %v2839, 0.012820513
    %v2844 = vmul.f32 %v2840, %v2840
    %v2845 = vmul.f32 %v2841, %v2841
    %v2846 = vsub.f32 %v2842, %v2844
    %v2847 = vsub.f32 %v2843, %v2845
    %v2848 = vsub.f32 %v2826, %v2840
    %v2849 = vsub.f32 %v2827, %v2841
    %v2850 = vadd.f32 %v2846, 1e-05
    %v2851 = vadd.f32 %v2847, 1e-05
    %v2852 = vrsqrt.pop %v2850
    %v2853 = vrsqrt.pop %v2851
    %v2854 = vmul.f32 %v2848, %v2852
    %v2855 = vmul.f32 %v2849, %v2853
    %v2857 = vlaneseq
    %v2858 = vshrl.u32 %v2857, 7
    %v2859 = vsub.s32 0, %v2858
    %v2860 = vrot.slane %v2828, %v2859
    %v2862 = vmul.f32 %v2854, %v2860
    %v2863 = vmul.f32 %v2855, %v2860
    %v2865 = vlaneseq
    %v2866 = vshrl.u32 %v2865, 7
    %v2867 = vsub.s32 0, %v2866
    %v2868 = vrot.slane %v2829, %v2867
    %v2870 = vadd.f32 %v2862, %v2868
    %v2871 = vadd.f32 %v2863, %v2868
    %v2872 = vrot.slane %v2870, 4
    %v2873 = vadd.f32 %v2870, %v2872
    %v2874 = vrot.slane %v2873, 2
    %v2875 = vadd.f32 %v2873, %v2874
    %v2876 = vrot.slane %v2875, 1
    %v2877 = vadd.f32 %v2875, %v2876
    %v2878 = vrot.slane %v2871, 4
    %v2879 = vadd.f32 %v2871, %v2878
    %v2880 = vrot.slane %v2879, 2
    %v2881 = vadd.f32 %v2879, %v2880
    %v2882 = vrot.slane %v2881, 1
    %v2883 = vadd.f32 %v2881, %v2882
    %v2884 = vrcp.pop 8.0
    %v2885 = vmul.f32 %v2877, %v2884
    %v2886 = vmul.f32 %v2883, %v2884
    %v2887 = vpack.c.bf16 %v2885, %v2885
    %v2888 = vpack.c.bf16 %v2886, %v2886
    %v2889 = vld [vmem:[#allocation16] sm:$0xff]
    %v2890 = vld [vmem:[#allocation16 + $0x8] sm:$0xf]
    %v2891 = vld [vmem:[#allocation16 + $0xc] sm:$0xff]
    %v2892 = vld [vmem:[#allocation16 + $0x14] sm:$0xf]
    %v2893 = vld [vmem:[#allocation16 + $0x18] sm:$0xff]
    %v2894 = vld [vmem:[#allocation16 + $0x20] sm:$0xf]
    %v2895 = vld [vmem:[#allocation16 + $0x24] sm:$0xff]
    %v2896 = vld [vmem:[#allocation16 + $0x2c] sm:$0xf]
    %v2897 = vld [vmem:[#allocation16 + $0x30] sm:$0xff]
    %v2898 = vld [vmem:[#allocation16 + $0x38] sm:$0xf]
    %v2899 = vld [vmem:[#allocation16 + $0x3c] sm:$0xff]
    %v2900 = vld [vmem:[#allocation16 + $0x44] sm:$0xf]
    %v2901 = vld [vmem:[#allocation16 + $0x48] sm:$0xff]
    %v2902 = vld [vmem:[#allocation16 + $0x50] sm:$0xf]
    %v2903 = vld [vmem:[#allocation16 + $0x54] sm:$0xff]
    %v2904 = vld [vmem:[#allocation16 + $0x5c] sm:$0xf]
    %v2905 = vld [vmem:[#allocation16 + $0x60] sm:$0xff]
    %v2906 = vld [vmem:[#allocation16 + $0x68] sm:$0xf]
    %v2907 = vld [vmem:[#allocation16 + $0x6c] sm:$0xff]
    %v2908 = vld [vmem:[#allocation16 + $0x74] sm:$0xf]
    %v2909 = vld [vmem:[#allocation16 + $0x78] sm:$0xff]
    %v2910 = vld [vmem:[#allocation16 + $0x80] sm:$0xf]
    %v2911 = vld [vmem:[#allocation16 + $0x84] sm:$0xff]
    %v2912 = vld [vmem:[#allocation16 + $0x8c] sm:$0xf]
    %v2913 = vld [vmem:[#allocation16 + $0x90] sm:$0xff]
    %v2914 = vld [vmem:[#allocation16 + $0x98] sm:$0xf]
    %v2915 = vld [vmem:[#allocation16 + $0x9c] sm:$0xff]
    %v2916 = vld [vmem:[#allocation16 + $0xa4] sm:$0xf]
    %v2917 = vld [vmem:[#allocation16 + $0xa8] sm:$0xff]
    %v2918 = vld [vmem:[#allocation16 + $0xb0] sm:$0xf]
    %v2919 = vld [vmem:[#allocation16 + $0xb4] sm:$0xff]
    %v2920 = vld [vmem:[#allocation16 + $0xbc] sm:$0xf]
    %v2921 = vld [vmem:[%s19] sm:$0x7]
    %v2923 = vlaneseq
    %v2924 = vshrl.u32 %v2923, 7
    %v2925 = vsub.s32 0, %v2924
    %v2926 = vrot.slane %v2921, %v2925
    %v2927 = vlaneseq
    %v2928 = vshrl.u32 %v2927, 7
    %v2929 = vsub.s32 1, %v2928
    %v2930 = vrot.slane %v2921, %v2929
    %v2931 = vlaneseq
    %v2932 = vshrl.u32 %v2931, 7
    %v2933 = vsub.s32 2, %v2932
    %v2934 = vrot.slane %v2921, %v2933
    %v2940 = vunpack.c.l.b16 %v2887
    %v2941 = vunpack.c.l.b16 %v2888
    %vm2942 = vcmask 1041409
    %v2943 = vsel %vm2942, %v2941, %v2940
    %v2944 = vpack.c.b16 %v2943, %v2943
    %v2978 = vunpack.c.l.b16 %v2889
    %v2979 = vunpack.c.h.b16 %v2889
    %v2980 = vunpack.c.l.b16 %v2890
    %v2981 = vunpack.c.l.b16 %v2891
    %v2982 = vunpack.c.h.b16 %v2891
    %v2983 = vunpack.c.l.b16 %v2892
    %v2984 = vunpack.c.l.b16 %v2893
    %v2985 = vunpack.c.h.b16 %v2893
    %v2986 = vunpack.c.l.b16 %v2894
    %v2987 = vunpack.c.l.b16 %v2895
    %v2988 = vunpack.c.h.b16 %v2895
    %v2989 = vunpack.c.l.b16 %v2896
    %v2990 = vunpack.c.l.b16 %v2897
    %v2991 = vunpack.c.h.b16 %v2897
    %v2992 = vunpack.c.l.b16 %v2898
    %v2993 = vunpack.c.l.b16 %v2899
    %v2994 = vunpack.c.h.b16 %v2899
    %v2995 = vunpack.c.l.b16 %v2900
    %v2996 = vunpack.c.l.b16 %v2901
    %v2997 = vunpack.c.h.b16 %v2901
    %v2998 = vunpack.c.l.b16 %v2902
    %v2999 = vunpack.c.l.b16 %v2903
    %v3000 = vunpack.c.h.b16 %v2903
    %v3001 = vunpack.c.l.b16 %v2904
    %v3002 = vunpack.c.l.b16 %v2905
    %v3003 = vunpack.c.h.b16 %v2905
    %v3004 = vunpack.c.l.b16 %v2906
    %v3005 = vunpack.c.l.b16 %v2907
    %v3006 = vunpack.c.h.b16 %v2907
    %v3007 = vunpack.c.l.b16 %v2908
    %v3008 = vunpack.c.l.b16 %v2909
    %v3009 = vunpack.c.h.b16 %v2909
    %v3010 = vunpack.c.l.b16 %v2910
    %v3011 = vunpack.c.l.b16 %v2911
    %v3012 = vunpack.c.h.b16 %v2911
    %v3013 = vunpack.c.l.b16 %v2912
    %v3014 = vunpack.c.l.b16 %v2913
    %v3015 = vunpack.c.h.b16 %v2913
    %v3016 = vunpack.c.l.b16 %v2914
    %v3017 = vunpack.c.l.b16 %v2915
    %v3018 = vunpack.c.h.b16 %v2915
    %v3019 = vunpack.c.l.b16 %v2916
    %v3020 = vunpack.c.l.b16 %v2917
    %v3021 = vunpack.c.h.b16 %v2917
    %v3022 = vunpack.c.l.b16 %v2918
    %v3023 = vunpack.c.l.b16 %v2919
    %v3024 = vunpack.c.h.b16 %v2919
    %v3025 = vunpack.c.l.b16 %v2920
    %v3026 = vpack.c.b16 %v2981, %v2978
    %v3027 = vpack.c.b16 %v2982, %v2979
    %v3028 = vpack.c.b16 %v2983, %v2980
    %v3029 = vpack.c.b16 %v2987, %v2984
    %v3030 = vpack.c.b16 %v2988, %v2985
    %v3031 = vpack.c.b16 %v2989, %v2986
    %v3032 = vpack.c.b16 %v2993, %v2990
    %v3033 = vpack.c.b16 %v2994, %v2991
    %v3034 = vpack.c.b16 %v2995, %v2992
    %v3035 = vpack.c.b16 %v2999, %v2996
    %v3036 = vpack.c.b16 %v3000, %v2997
    %v3037 = vpack.c.b16 %v3001, %v2998
    %v3038 = vpack.c.b16 %v3005, %v3002
    %v3039 = vpack.c.b16 %v3006, %v3003
    %v3040 = vpack.c.b16 %v3007, %v3004
    %v3041 = vpack.c.b16 %v3011, %v3008
    %v3042 = vpack.c.b16 %v3012, %v3009
    %v3043 = vpack.c.b16 %v3013, %v3010
    %v3044 = vpack.c.b16 %v3017, %v3014
    %v3045 = vpack.c.b16 %v3018, %v3015
    %v3046 = vpack.c.b16 %v3019, %v3016
    %v3047 = vpack.c.b16 %v3023, %v3020
    %v3048 = vpack.c.b16 %v3024, %v3021
    %v3049 = vpack.c.b16 %v3025, %v3022
    %3074 = vmatprep.subr.bf16.mxu0 %v3027
    %3075 = vmatpush1.bf16.msra.mxu0 %v3026
    %3076 = vmatprep.subr.bf16.mxu0 %v3030
    %3077 = vmatpush1.bf16.msra.mxu0 %v3029
    %3078 = vmatprep.subr.bf16.mxu0 %v3033
    %3079 = vmatpush1.bf16.msra.mxu0 %v3032
    %3080 = vmatprep.subr.bf16.mxu0 %v3036
    %3081 = vmatpush1.bf16.msra.mxu0 %v3035
    %3082 = vmatprep.subr.bf16.mxu0 %v3039
    %3083 = vmatpush1.bf16.msra.mxu0 %v3038
    %3084 = vmatprep.subr.bf16.mxu0 %v3042
    %3085 = vmatpush1.bf16.msra.mxu0 %v3041
    %3086 = vmatprep.subr.bf16.mxu0 %v3045
    %3087 = vmatpush1.bf16.msra.mxu0 %v3044
    %3088 = vmatprep.subr.bf16.mxu0 %v3048
    %3089 = vmatpush1.bf16.msra.mxu0 %v3047
    %3090 = vmatprep.subr.bf16.mxu0 0
    %3091 = vmatpush1.bf16.msra.mxu0 0
    %3092 = vmatprep.subr.bf16.mxu0 0
    %3093 = vmatpush1.bf16.msra.mxu0 0
    %3094 = vmatprep.subr.bf16.mxu0 0
    %3095 = vmatpush1.bf16.msra.mxu0 0
    %3096 = vmatprep.subr.bf16.mxu0 0
    %3097 = vmatpush1.bf16.msra.mxu0 0
    %3098 = vmatprep.subr.bf16.mxu0 0
    %3099 = vmatpush1.bf16.msra.mxu0 0
    %3100 = vmatprep.subr.bf16.mxu0 0
    %3101 = vmatpush1.bf16.msra.mxu0 0
    %3102 = vmatprep.subr.bf16.mxu0 0
    %3103 = vmatpush1.bf16.msra.mxu0 0
    %3104 = vmatprep.subr.bf16.mxu0 0
    %3105 = vmatpush1.bf16.msra.mxu0 0
    %3106 = vmatprep.mubr.bf16.mxu0 0
    %3107 = vmatmul.mubr.bf16.gmra.mrb[0].mxu0 %v2944
    %v3108 = vpop.f32.mrb[0].mxu0
    %v3109 = vadd.f32 %v2926, %v3108
    %v3110 = vpop.f32.mrb[0].mxu0
    %v3111 = vadd.f32 %v2930, %v3110
    %v3112 = vpop.f32.mrb[0].mxu0
    %v3113 = vpop.f32.mrb[0].mxu0
    %3114 = vdwg.mxu0
    %3115 = vmatprep.subr.bf16.mxu0 0
    %3116 = vmatpush1.bf16.msra.mxu0 %v3028
    %3117 = vmatprep.subr.bf16.mxu0 0
    %3118 = vmatpush1.bf16.msra.mxu0 %v3031
    %3119 = vmatprep.subr.bf16.mxu0 0
    %3120 = vmatpush1.bf16.msra.mxu0 %v3034
    %3121 = vmatprep.subr.bf16.mxu0 0
    %3122 = vmatpush1.bf16.msra.mxu0 %v3037
    %3123 = vmatprep.subr.bf16.mxu0 0
    %3124 = vmatpush1.bf16.msra.mxu0 %v3040
    %3125 = vmatprep.subr.bf16.mxu0 0
    %3126 = vmatpush1.bf16.msra.mxu0 %v3043
    %3127 = vmatprep.subr.bf16.mxu0 0
    %3128 = vmatpush1.bf16.msra.mxu0 %v3046
    %3129 = vmatprep.subr.bf16.mxu0 0
    %3130 = vmatpush1.bf16.msra.mxu0 %v3049
    %3131 = vmatprep.subr.bf16.mxu0 0
    %3132 = vmatpush1.bf16.msra.mxu0 0
    %3133 = vmatprep.subr.bf16.mxu0 0
    %3134 = vmatpush1.bf16.msra.mxu0 0
    %3135 = vmatprep.subr.bf16.mxu0 0
    %3136 = vmatpush1.bf16.msra.mxu0 0
    %3137 = vmatprep.subr.bf16.mxu0 0
    %3138 = vmatpush1.bf16.msra.mxu0 0
    %3139 = vmatprep.subr.bf16.mxu0 0
    %3140 = vmatpush1.bf16.msra.mxu0 0
    %3141 = vmatprep.subr.bf16.mxu0 0
    %3142 = vmatpush1.bf16.msra.mxu0 0
    %3143 = vmatprep.subr.bf16.mxu0 0
    %3144 = vmatpush1.bf16.msra.mxu0 0
    %3145 = vmatprep.subr.bf16.mxu0 0
    %3146 = vmatpush1.bf16.msra.mxu0 0
    %3147 = vmatprep.mubr.bf16.mxu0 0
    %3148 = vmatmul.mubr.bf16.gmra.mrb[0].mxu0 %v2944
    %v3149 = vpop.f32.mrb[0].mxu0
    %v3150 = vadd.f32 %v2934, %v3149
    %v3151 = vpop.f32.mrb[0].mxu0
    %v3152 = vpop.f32.mrb[0].mxu0
    %v3153 = vpop.f32.mrb[0].mxu0
    %3154 = vdwg.mxu0
    %v3155 = vmul.f32 %v3109, 0.5
    %v3156 = vmul.f32 %v3111, 0.5
    %v3157 = vmul.f32 %v3150, 0.5
    %v3158 = vmul.f32 %v3109, 0.044715
    %v3159 = vmul.f32 %v3111, 0.044715
    %v3160 = vmul.f32 %v3150, 0.044715
    %v3161 = vmul.f32 %v3158, %v3109
    %v3162 = vmul.f32 %v3159, %v3111
    %v3163 = vmul.f32 %v3160, %v3150
    %v3164 = vmul.f32 %v3161, %v3109
    %v3165 = vmul.f32 %v3162, %v3111
    %v3166 = vmul.f32 %v3163, %v3150
    %v3167 = vadd.f32 %v3109, %v3164
    %v3168 = vadd.f32 %v3111, %v3165
    %v3169 = vadd.f32 %v3150, %v3166
    %v3170 = vmul.f32 %v3167, 0.7978846
    %v3171 = vmul.f32 %v3168, 0.7978846
    %v3172 = vmul.f32 %v3169, 0.7978846
    %v3173 = vtanh.pop %v3170
    %v3174 = vtanh.pop %v3171
    %v3175 = vtanh.pop %v3172
    %v3176 = vadd.f32 %v3173, 1.0
    %v3177 = vadd.f32 %v3174, 1.0
    %v3178 = vadd.f32 %v3175, 1.0
    %v3179 = vmul.f32 %v3155, %v3176
    %v3180 = vmul.f32 %v3156, %v3177
    %v3181 = vmul.f32 %v3157, %v3178
    %v3182 = vpack.c.bf16 %v3179, %v3179
    %v3183 = vpack.c.bf16 %v3180, %v3180
    %v3184 = vpack.c.bf16 %v3181, %v3181
    %v3185 = vld [vmem:[#allocation17] sm:$0xf]
    %v3186 = vld [vmem:[#allocation17 + $0x4] sm:$0xf]
    %v3187 = vld [vmem:[#allocation17 + $0x8] sm:$0xf]
    %v3188 = vld [vmem:[#allocation17 + $0xc] sm:$0xf]
    %v3189 = vld [vmem:[#allocation17 + $0x10] sm:$0xf]
    %v3190 = vld [vmem:[#allocation17 + $0x14] sm:$0xf]
    %v3191 = vld [vmem:[#allocation17 + $0x18] sm:$0xf]
    %v3192 = vld [vmem:[#allocation17 + $0x1c] sm:$0xf]
    %v3193 = vld [vmem:[#allocation17 + $0x20] sm:$0xf]
    %v3194 = vld [vmem:[#allocation17 + $0x24] sm:$0xf]
    %v3195 = vld [vmem:[#allocation17 + $0x28] sm:$0xf]
    %v3196 = vld [vmem:[#allocation17 + $0x2c] sm:$0xf]
    %v3197 = vld [vmem:[#allocation17 + $0x30] sm:$0xf]
    %v3198 = vld [vmem:[#allocation17 + $0x34] sm:$0xf]
    %v3199 = vld [vmem:[#allocation17 + $0x38] sm:$0xf]
    %v3200 = vld [vmem:[#allocation17 + $0x3c] sm:$0xf]
    %v3201 = vld [vmem:[#allocation17 + $0x40] sm:$0xf]
    %v3202 = vld [vmem:[#allocation17 + $0x44] sm:$0xf]
    %v3203 = vld [vmem:[#allocation17 + $0x48] sm:$0xf]
    %v3204 = vld [vmem:[#allocation17 + $0x4c] sm:$0xf]
    %v3205 = vld [vmem:[#allocation17 + $0x50] sm:$0xf]
    %v3206 = vld [vmem:[#allocation17 + $0x54] sm:$0xf]
    %v3207 = vld [vmem:[#allocation17 + $0x58] sm:$0xf]
    %v3208 = vld [vmem:[#allocation17 + $0x5c] sm:$0xf]
    %v3209 = vld [vmem:[#allocation17 + $0x60] sm:$0xf]
    %v3210 = vld [vmem:[#allocation17 + $0x64] sm:$0xf]
    %v3211 = vld [vmem:[#allocation17 + $0x68] sm:$0xf]
    %v3212 = vld [vmem:[#allocation17 + $0x6c] sm:$0xf]
    %v3213 = vld [vmem:[#allocation17 + $0x70] sm:$0xf]
    %v3214 = vld [vmem:[#allocation17 + $0x74] sm:$0xf]
    %v3215 = vld [vmem:[#allocation17 + $0x78] sm:$0xf]
    %v3216 = vld [vmem:[#allocation17 + $0x7c] sm:$0xf]
    %v3217 = vld [vmem:[#allocation17 + $0x80] sm:$0xf]
    %v3218 = vld [vmem:[#allocation17 + $0x84] sm:$0xf]
    %v3219 = vld [vmem:[#allocation17 + $0x88] sm:$0xf]
    %v3220 = vld [vmem:[#allocation17 + $0x8c] sm:$0xf]
    %v3221 = vld [vmem:[#allocation17 + $0x90] sm:$0xf]
    %v3222 = vld [vmem:[#allocation17 + $0x94] sm:$0xf]
    %v3223 = vld [vmem:[#allocation17 + $0x98] sm:$0xf]
    %v3224 = vld [vmem:[#allocation17 + $0x9c] sm:$0xf]
    %v3225 = vld [vmem:[#allocation17 + $0xa0] sm:$0xf]
    %v3226 = vld [vmem:[#allocation17 + $0xa4] sm:$0xf]
    %v3227 = vld [vmem:[#allocation17 + $0xa8] sm:$0xf]
    %v3228 = vld [vmem:[#allocation17 + $0xac] sm:$0xf]
    %v3229 = vld [vmem:[#allocation17 + $0xb0] sm:$0xf]
    %v3230 = vld [vmem:[#allocation17 + $0xb4] sm:$0xf]
    %v3231 = vld [vmem:[#allocation17 + $0xb8] sm:$0xf]
    %v3232 = vld [vmem:[#allocation17 + $0xbc] sm:$0xf]
    %v3233 = vld [vmem:[%s21] sm:$0x1]
    %v3235 = vlaneseq
    %v3236 = vshrl.u32 %v3235, 7
    %v3237 = vsub.s32 0, %v3236
    %v3238 = vrot.slane %v3233, %v3237
    %v3288 = vunpack.c.l.b16 %v3185
    %v3289 = vunpack.c.l.b16 %v3186
    %v3290 = vunpack.c.l.b16 %v3187
    %v3291 = vunpack.c.l.b16 %v3188
    %v3292 = vunpack.c.l.b16 %v3189
    %v3293 = vunpack.c.l.b16 %v3190
    %v3294 = vunpack.c.l.b16 %v3191
    %v3295 = vunpack.c.l.b16 %v3192
    %v3296 = vunpack.c.l.b16 %v3193
    %v3297 = vunpack.c.l.b16 %v3194
    %v3298 = vunpack.c.l.b16 %v3195
    %v3299 = vunpack.c.l.b16 %v3196
    %v3300 = vunpack.c.l.b16 %v3197
    %v3301 = vunpack.c.l.b16 %v3198
    %v3302 = vunpack.c.l.b16 %v3199
    %v3303 = vunpack.c.l.b16 %v3200
    %v3304 = vunpack.c.l.b16 %v3201
    %v3305 = vunpack.c.l.b16 %v3202
    %v3306 = vunpack.c.l.b16 %v3203
    %v3307 = vunpack.c.l.b16 %v3204
    %v3308 = vunpack.c.l.b16 %v3205
    %v3309 = vunpack.c.l.b16 %v3206
    %v3310 = vunpack.c.l.b16 %v3207
    %v3311 = vunpack.c.l.b16 %v3208
    %v3312 = vunpack.c.l.b16 %v3209
    %v3313 = vunpack.c.l.b16 %v3210
    %v3314 = vunpack.c.l.b16 %v3211
    %v3315 = vunpack.c.l.b16 %v3212
    %v3316 = vunpack.c.l.b16 %v3213
    %v3317 = vunpack.c.l.b16 %v3214
    %v3318 = vunpack.c.l.b16 %v3215
    %v3319 = vunpack.c.l.b16 %v3216
    %v3320 = vunpack.c.l.b16 %v3217
    %v3321 = vunpack.c.l.b16 %v3218
    %v3322 = vunpack.c.l.b16 %v3219
    %v3323 = vunpack.c.l.b16 %v3220
    %v3324 = vunpack.c.l.b16 %v3221
    %v3325 = vunpack.c.l.b16 %v3222
    %v3326 = vunpack.c.l.b16 %v3223
    %v3327 = vunpack.c.l.b16 %v3224
    %v3328 = vunpack.c.l.b16 %v3225
    %v3329 = vunpack.c.l.b16 %v3226
    %v3330 = vunpack.c.l.b16 %v3227
    %v3331 = vunpack.c.l.b16 %v3228
    %v3332 = vunpack.c.l.b16 %v3229
    %v3333 = vunpack.c.l.b16 %v3230
    %v3334 = vunpack.c.l.b16 %v3231
    %v3335 = vunpack.c.l.b16 %v3232
    %v3336 = vpack.c.b16 %v3289, %v3288
    %v3337 = vpack.c.b16 %v3291, %v3290
    %v3338 = vpack.c.b16 %v3293, %v3292
    %v3339 = vpack.c.b16 %v3295, %v3294
    %v3340 = vpack.c.b16 %v3297, %v3296
    %v3341 = vpack.c.b16 %v3299, %v3298
    %v3342 = vpack.c.b16 %v3301, %v3300
    %v3343 = vpack.c.b16 %v3303, %v3302
    %v3344 = vpack.c.b16 %v3305, %v3304
    %v3345 = vpack.c.b16 %v3307, %v3306
    %v3346 = vpack.c.b16 %v3309, %v3308
    %v3347 = vpack.c.b16 %v3311, %v3310
    %v3348 = vpack.c.b16 %v3313, %v3312
    %v3349 = vpack.c.b16 %v3315, %v3314
    %v3350 = vpack.c.b16 %v3317, %v3316
    %v3351 = vpack.c.b16 %v3319, %v3318
    %v3352 = vpack.c.b16 %v3321, %v3320
    %v3353 = vpack.c.b16 %v3323, %v3322
    %v3354 = vpack.c.b16 %v3325, %v3324
    %v3355 = vpack.c.b16 %v3327, %v3326
    %v3356 = vpack.c.b16 %v3329, %v3328
    %v3357 = vpack.c.b16 %v3331, %v3330
    %v3358 = vpack.c.b16 %v3333, %v3332
    %v3359 = vpack.c.b16 %v3335, %v3334
    %3384 = vmatprep.subr.bf16.mxu0 0
    %3385 = vmatpush1.bf16.msra.mxu0 %v3336
    %3386 = vmatprep.subr.bf16.mxu0 0
    %3387 = vmatpush1.bf16.msra.mxu0 %v3337
    %3388 = vmatprep.subr.bf16.mxu0 0
    %3389 = vmatpush1.bf16.msra.mxu0 %v3338
    %3390 = vmatprep.subr.bf16.mxu0 0
    %3391 = vmatpush1.bf16.msra.mxu0 %v3339
    %3392 = vmatprep.subr.bf16.mxu0 0
    %3393 = vmatpush1.bf16.msra.mxu0 %v3340
    %3394 = vmatprep.subr.bf16.mxu0 0
    %3395 = vmatpush1.bf16.msra.mxu0 %v3341
    %3396 = vmatprep.subr.bf16.mxu0 0
    %3397 = vmatpush1.bf16.msra.mxu0 %v3342
    %3398 = vmatprep.subr.bf16.mxu0 0
    %3399 = vmatpush1.bf16.msra.mxu0 %v3343
    %3400 = vmatprep.subr.bf16.mxu0 0
    %3401 = vmatpush1.bf16.msra.mxu0 %v3344
    %3402 = vmatprep.subr.bf16.mxu0 0
    %3403 = vmatpush1.bf16.msra.mxu0 %v3345
    %3404 = vmatprep.subr.bf16.mxu0 0
    %3405 = vmatpush1.bf16.msra.mxu0 %v3346
    %3406 = vmatprep.subr.bf16.mxu0 0
    %3407 = vmatpush1.bf16.msra.mxu0 %v3347
    %3408 = vmatprep.subr.bf16.mxu0 0
    %3409 = vmatpush1.bf16.msra.mxu0 %v3348
    %3410 = vmatprep.subr.bf16.mxu0 0
    %3411 = vmatpush1.bf16.msra.mxu0 %v3349
    %3412 = vmatprep.subr.bf16.mxu0 0
    %3413 = vmatpush1.bf16.msra.mxu0 %v3350
    %3414 = vmatprep.subr.bf16.mxu0 0
    %3415 = vmatpush1.bf16.msra.mxu0 %v3351
    %3416 = vmatprep.mubr.bf16.mxu0 %v3183
    %3417 = vmatmul.mubr.bf16.gmra.mrb[0].mxu0 %v3182
    %v3418 = vpop.f32.mrb[0].mxu0
    %v3419 = vadd.f32 %v3238, %v3418
    %v3420 = vpop.f32.mrb[0].mxu0
    %v3421 = vpop.f32.mrb[0].mxu0
    %v3422 = vpop.f32.mrb[0].mxu0
    %3423 = vdwg.mxu0
    %3424 = vmatprep.subr.bf16.mxu0 0
    %3425 = vmatpush1.bf16.msra.mxu0 %v3352
    %3426 = vmatprep.subr.bf16.mxu0 0
    %3427 = vmatpush1.bf16.msra.mxu0 %v3353
    %3428 = vmatprep.subr.bf16.mxu0 0
    %3429 = vmatpush1.bf16.msra.mxu0 %v3354
    %3430 = vmatprep.subr.bf16.mxu0 0
    %3431 = vmatpush1.bf16.msra.mxu0 %v3355
    %3432 = vmatprep.subr.bf16.mxu0 0
    %3433 = vmatpush1.bf16.msra.mxu0 %v3356
    %3434 = vmatprep.subr.bf16.mxu0 0
    %3435 = vmatpush1.bf16.msra.mxu0 %v3357
    %3436 = vmatprep.subr.bf16.mxu0 0
    %3437 = vmatpush1.bf16.msra.mxu0 %v3358
    %3438 = vmatprep.subr.bf16.mxu0 0
    %3439 = vmatpush1.bf16.msra.mxu0 %v3359
    %3440 = vmatprep.subr.bf16.mxu0 0
    %3441 = vmatpush1.bf16.msra.mxu0 0
    %3442 = vmatprep.subr.bf16.mxu0 0
    %3443 = vmatpush1.bf16.msra.mxu0 0
    %3444 = vmatprep.subr.bf16.mxu0 0
    %3445 = vmatpush1.bf16.msra.mxu0 0
    %3446 = vmatprep.subr.bf16.mxu0 0
    %3447 = vmatpush1.bf16.msra.mxu0 0
    %3448 = vmatprep.subr.bf16.mxu0 0
    %3449 = vmatpush1.bf16.msra.mxu0 0
    %3450 = vmatprep.subr.bf16.mxu0 0
    %3451 = vmatpush1.bf16.msra.mxu0 0
    %3452 = vmatprep.subr.bf16.mxu0 0
    %3453 = vmatpush1.bf16.msra.mxu0 0
    %3454 = vmatprep.subr.bf16.mxu0 0
    %3455 = vmatpush1.bf16.msra.mxu0 0
    %3456 = vmatprep.mubr.bf16.mxu0 0
    %3457 = vmatmul.mubr.bf16.gmra.mrb[0].mxu0 %v3184
    %v3458 = vpop.f32.mrb[0].mxu0
    %v3459 = vadd.f32 %v3419, %v3458
    %v3460 = vpop.f32.mrb[0].mxu0
    %v3461 = vpop.f32.mrb[0].mxu0
    %v3462 = vpop.f32.mrb[0].mxu0
    %3463 = vdwg.mxu0
    %3464 = vst [vmem:[#allocation19] sm:$0x3] %v3459
    // Predicated region
    $region130: #{tpu_custom_call.1} parent=1 // pred_check
      _
    $region131: #{tpu_custom_call.1} parent=1 // pred_check_branch
      %3466 = sbr.rel (0) target = $region133
    $region132: #{tpu_custom_call.1} parent=1 // pred_region
      %s3468 = ssub.s32 32, 32
      %3469 = vsyncadd [#allocation4], %s3468
      %s3471 = sshll.u32 [#allocation19], 4
      %s3472 = int_to_ptr.vmem [resolvable:$true] %s3471
      %3474 = dma.vmem_to_hbm [thread:$0]  %s3472, 32, %s22, [#allocation4]
    $region133: #{tpu_custom_call.1} parent=1 // pred_fallthru
      _
    // Predicated region
    $region134: #{tpu_custom_call.1} parent=1 // pred_check
      _
    $region135: #{tpu_custom_call.1} parent=1 // pred_check_branch
      %3476 = sbr.rel (0) target = $region137
    $region136: #{tpu_custom_call.1} parent=1 // pred_region
      %3477 = dma.done [#allocation4], 32
    $region137: #{tpu_custom_call.1} parent=1 // pred_fallthru
      _
    %3478 = vsyncpa [#allocation3], 1
    %3479 = vsyncpa [#allocation6], 1
    %3480 = vsyncpa [#allocation9], 1
    %3481 = vsyncpa [#allocation12], 1
    %3482 = vsyncpa [#allocation15], 1
    %3483 = vsyncpa [#allocation18], 1
    %3484 = vsyncpa [#allocation4], 1

</llo_original>
